<compile_context>
chip_gen: v7x
topology: tpu7x:2x2x1
jax: 0.10.0
libtpu: 0.0.40
codegen_flags: <defaults>
</compile_context>

<pallas_src>
from functools import partial

import numpy as np
import jax
import jax.numpy as jnp
from jax import lax
from jax.experimental import pallas as pl
from jax.experimental.pallas import tpu as pltpu


def _round_up(a: int, b: int) -> int:
    return ((a + b - 1) // b) * b


def _nlcv_kernel(x_ref, w1_ref, b1_ref, w2_ref, b2_ref, w3_ref, b3_ref, out_ref):
    # x_ref:  (tile, Din)  batch-major block straight from HBM.
    # w*_ref: torch layout (out, in); b1/b2: (H, 1) columns; b3: (1, Dout) row.
    mm_dtype = w1_ref.dtype                        # bf16 (fast) or f32 (exact) operands
    x = x_ref[...].astype(mm_dtype)

    # layer1: contract x's minor dim -> feature-major (H, tile); lane axis = batch.
    h1 = jnp.tanh(
        lax.dot_general(w1_ref[...], x, (((1,), (1,)), ((), ())),
                        preferred_element_type=jnp.float32) + b1_ref[...])
    # layer2: standard (H, H) @ (H, tile).
    h2 = jnp.tanh(
        lax.dot_general(w2_ref[...], h1.astype(mm_dtype), (((1,), (0,)), ((), ())),
                        preferred_element_type=jnp.float32) + b2_ref[...])
    # layer3 contracted so the result is already batch-major (tile, Dout);
    # the small relayout this implies happens on the otherwise-idle XLU slot.
    out = lax.dot_general(h2.astype(mm_dtype), w3_ref[...], (((0,), (1,)), ((), ())),
                          preferred_element_type=jnp.float32) + b3_ref[...]
    out_ref[...] = out.astype(out_ref.dtype)


@partial(jax.jit, static_argnames=("tile_n", "use_bf16_matmul"))
def _nlcvnet_pallas(x, target, w1, b1, w2, b2, w3, b3, *, tile_n, use_bf16_matmul):
    n, d_in = x.shape
    h = w1.shape[0]
    d_out = w3.shape[0]
    f32 = jnp.float32

    x = x.astype(f32)
    w1f, w2f, w3f = (w.astype(f32) for w in (w1, w2, w3))

    # Fold the target subtraction into layer1's bias (in f32, before any bf16 cast).
    t_col = jnp.reshape(target, (-1, 1)).astype(f32)                 # (Din, 1)
    b1_eff = jnp.reshape(b1, (h, 1)).astype(f32) - w1f @ t_col       # (H, 1)
    b2_col = jnp.reshape(b2, (h, 1)).astype(f32)                     # (H, 1)
    b3_row = jnp.reshape(b3, (1, d_out)).astype(f32)                 # (1, Dout)

    mm_dtype = jnp.bfloat16 if use_bf16_matmul else f32
    w1k, w2k, w3k = (w.astype(mm_dtype) for w in (w1f, w2f, w3f))

    # Tile selection: lane-aligned; clamp so the 1-D grid has >= 2 steps when possible
    # (keeps both v7x TensorCores busy) while staying comfortably inside VMEM.
    tile = _round_up(max(int(tile_n), 128), 128)
    tile = min(tile, max(128, _round_up(pl.cdiv(n, 2), 128)))
    grid = (pl.cdiv(n, tile),)

    # Blocks with a narrow minor dim are lane-padded to 128 in VMEM (~512 B/row per
    # buffered block); budget ~5 KiB/row and raise the scoped VMEM limit accordingly
    # (v5e's default is only 16 MiB), capped below v7x's 64 MiB physical VMEM.
    vmem_limit = int(min(max(32 * 1024 * 1024, 5 * 1024 * tile), 56 * 1024 * 1024))

    resident = lambda shape: pl.BlockSpec(shape, lambda i: (0, 0))
    in_specs = [
        pl.BlockSpec((tile, d_in), lambda i: (i, 0)),   # x: contiguous batch-major rows
        resident((h, d_in)), resident((h, 1)),          # W1, b1' (target folded in)
        resident((h, h)), resident((h, 1)),             # W2, b2
        resident((d_out, h)), resident((1, d_out)),     # W3, b3
    ]
    out_specs = pl.BlockSpec((tile, d_out), lambda i: (i, 0))

    weight_bytes = 4 * (h * d_in + h * h + d_out * h + 2 * h + d_out)
    cost = pl.CostEstimate(
        flops=2 * n * (d_in * h + h * h + h * d_out),
        transcendentals=2 * n * h,
        bytes_accessed=4 * n * (d_in + d_out) + weight_bytes,
    )

    return pl.pallas_call(
        _nlcv_kernel,
        out_shape=jax.ShapeDtypeStruct((n, d_out), f32),
        grid=grid,
        in_specs=in_specs,
        out_specs=out_specs,
        compiler_params=pltpu.CompilerParams(
            dimension_semantics=("parallel",),
            vmem_limit_bytes=vmem_limit,
        ),
        cost_estimate=cost,
    )(x, w1k, b1_eff, w2k, b2_col, w3k, b3_row)


@jax.jit
def _reference_jit(x, target, w1, b1, w2, b2, w3, b3):
    xr = x.astype(jnp.float32) - jnp.reshape(target, (1, -1)).astype(jnp.float32)
    h1 = jnp.tanh(xr @ w1.T + b1)
    h2 = jnp.tanh(h1 @ w2.T + b2)
    return h2 @ w3.T + b3


def nlcvnet_forward(x, target, w1, b1, w2, b2, w3, b3, *,
                    tile_n=8192, use_bf16_matmul=True, min_batch_for_pallas=1024):
    """NLCVNet forward.

    x: (N, n_input); target: (1, n_input) or (n_input,);
    w1,b1: (H, n_input), (H,);  w2,b2: (H, H), (H,);  w3,b3: (Dout, H), (Dout,).
    Returns (N, Dout) float32.
    """
    if x.shape[0] < min_batch_for_pallas:
        # Launch + pipeline-setup overhead dominates at tiny batches; use plain XLA.
        return _reference_jit(x, target, w1, b1, w2, b2, w3, b3)
    return _nlcvnet_pallas(x, target, w1, b1, w2, b2, w3, b3,
                           tile_n=int(tile_n), use_bf16_matmul=bool(use_bf16_matmul))


def _init_linear(key, fan_in, fan_out):
    """PyTorch-style Linear init; returns W (out, in) and b (out,)."""
    kw, kb = jax.random.split(key)
    bound = 1.0 / np.sqrt(fan_in)
    w = jax.random.uniform(kw, (fan_out, fan_in), jnp.float32, -bound, bound)
    b = jax.random.uniform(kb, (fan_out,), jnp.float32, -bound, bound)
    return w, b


if __name__ == "__main__":
    n_input, n_hidden, n_output = 16, 32, 4

    key = jax.random.PRNGKey(0)
    k_x1, k_x2, k_x3, k_t, k1, k2, k3 = jax.random.split(key, 7)

    # TODO(synk): the module loads './data/target_100.npy'; a synthetic target stands in.
    target = jax.random.normal(k_t, (1, n_input), jnp.float32)
    w1, b1 = _init_linear(k1, n_input, n_hidden)
    w2, b2 = _init_linear(k2, n_hidden, n_hidden)
    w3, b3 = _init_linear(k3, n_hidden, n_output)

    # Case 1: Pallas kernel, default fast path (bf16 matmul operands, f32 accumulate).
    x1 = jax.random.normal(k_x1, (4096, n_input), jnp.float32)
    out1 = jax.block_until_ready(nlcvnet_forward(x1, target, w1, b1, w2, b2, w3, b3))
    ref1 = _reference_jit(x1, target, w1, b1, w2, b2, w3, b3)
    np.testing.assert_allclose(np.asarray(out1), np.asarray(ref1), rtol=5e-2, atol=5e-2)

    # Case 2: Pallas kernel, exact-f32 matmuls, batch not a multiple of the tile
    # (exercises the clipped boundary block — no padding anywhere in the wrapper).
    x2 = jax.random.normal(k_x2, (1333, n_input), jnp.float32)
    out2 = jax.block_until_ready(
        nlcvnet_forward(x2, target, w1, b1, w2, b2, w3, b3,
                        tile_n=512, use_bf16_matmul=False, min_batch_for_pallas=1)
    )
    ref2 = _reference_jit(x2, target, w1, b1, w2, b2, w3, b3)
    np.testing.assert_allclose(np.asarray(out2), np.asarray(ref2), rtol=1e-5, atol=1e-5)

    # Case 3: tiny batch routes to the plain-XLA fallback path.
    x3 = jax.random.normal(k_x3, (8, n_input), jnp.float32)
    out3 = jax.block_until_ready(nlcvnet_forward(x3, target, w1, b1, w2, b2, w3, b3))
    ref3 = _reference_jit(x3, target, w1, b1, w2, b2, w3, b3)
    np.testing.assert_allclose(np.asarray(out3), np.asarray(ref3), rtol=1e-5, atol=1e-5)

    print("KERNEL_OK")
</pallas_src>

<mosaic_0001>
module attributes {stable_mosaic.version = 11 : i64} {
  func.func @_nlcv_kernel(%arg0: i32, %arg1: memref<2048x16xf32, #tpu.memory_space<vmem>>, %arg2: memref<32x16xbf16, #tpu.memory_space<vmem>>, %arg3: memref<32x1xf32, #tpu.memory_space<vmem>>, %arg4: memref<32x32xbf16, #tpu.memory_space<vmem>>, %arg5: memref<32x1xf32, #tpu.memory_space<vmem>>, %arg6: memref<4x32xbf16, #tpu.memory_space<vmem>>, %arg7: memref<1x4xf32, #tpu.memory_space<vmem>>, %arg8: memref<2048x4xf32, #tpu.memory_space<vmem>>) attributes {dimension_semantics = [#tpu.dimension_semantics<parallel>], iteration_bounds = array<i64: 2>, scalar_prefetch = 0 : i64, scratch_operands = 0 : i64, tpu.core_type = #tpu.core_type<tc>, window_params = [{transform_indices = @transform_0, window_bounds = array<i64: 2048, 16>}, {pipeline_mode = #tpu.pipeline_mode<synchronous>, transform_indices = @transform_1, window_bounds = array<i64: 32, 16>}, {pipeline_mode = #tpu.pipeline_mode<synchronous>, transform_indices = @transform_2, window_bounds = array<i64: 32, 1>}, {pipeline_mode = #tpu.pipeline_mode<synchronous>, transform_indices = @transform_3, window_bounds = array<i64: 32, 32>}, {pipeline_mode = #tpu.pipeline_mode<synchronous>, transform_indices = @transform_4, window_bounds = array<i64: 32, 1>}, {pipeline_mode = #tpu.pipeline_mode<synchronous>, transform_indices = @transform_5, window_bounds = array<i64: 4, 32>}, {pipeline_mode = #tpu.pipeline_mode<synchronous>, transform_indices = @transform_6, window_bounds = array<i64: 1, 4>}, {transform_indices = @transform_7, window_bounds = array<i64: 2048, 4>}]} {
    %c0 = arith.constant 0 : index
    %c0_0 = arith.constant 0 : index
    %0 = vector.load %arg1[%c0, %c0_0] : memref<2048x16xf32, #tpu.memory_space<vmem>>, vector<2048x16xf32>
    %1 = arith.truncf %0 : vector<2048x16xf32> to vector<2048x16xbf16>
    %c0_1 = arith.constant 0 : index
    %c0_2 = arith.constant 0 : index
    %2 = vector.load %arg2[%c0_1, %c0_2] : memref<32x16xbf16, #tpu.memory_space<vmem>>, vector<32x16xbf16>
    %cst = arith.constant dense<0.000000e+00> : vector<32x2048xf32>
    %3 = tpu.matmul %2, %1, %cst {dimension_numbers = #tpu.dot_dimension_numbers<[1], [1], [0], [0], [0, 0, 1, 0], [], []>} : vector<32x16xbf16>, vector<2048x16xbf16>, vector<32x2048xf32> -> vector<32x2048xf32>
    %c0_3 = arith.constant 0 : index
    %c0_4 = arith.constant 0 : index
    %4 = vector.load %arg3[%c0_3, %c0_4] : memref<32x1xf32, #tpu.memory_space<vmem>>, vector<32x1xf32>
    %5 = vector.broadcast %4 : vector<32x1xf32> to vector<32x2048xf32>
    %6 = arith.addf %3, %5 : vector<32x2048xf32>
    %7 = math.tanh %6 : vector<32x2048xf32>
    %c0_5 = arith.constant 0 : index
    %c0_6 = arith.constant 0 : index
    %8 = vector.load %arg4[%c0_5, %c0_6] : memref<32x32xbf16, #tpu.memory_space<vmem>>, vector<32x32xbf16>
    %9 = arith.truncf %7 : vector<32x2048xf32> to vector<32x2048xbf16>
    %cst_7 = arith.constant dense<0.000000e+00> : vector<32x2048xf32>
    %10 = tpu.matmul %8, %9, %cst_7 {dimension_numbers = #tpu.dot_dimension_numbers<[1], [0], [0], [1], [0, 0, 1, 1], [], []>} : vector<32x32xbf16>, vector<32x2048xbf16>, vector<32x2048xf32> -> vector<32x2048xf32>
    %c0_8 = arith.constant 0 : index
    %c0_9 = arith.constant 0 : index
    %11 = vector.load %arg5[%c0_8, %c0_9] : memref<32x1xf32, #tpu.memory_space<vmem>>, vector<32x1xf32>
    %12 = vector.broadcast %11 : vector<32x1xf32> to vector<32x2048xf32>
    %13 = arith.addf %10, %12 : vector<32x2048xf32>
    %14 = math.tanh %13 : vector<32x2048xf32>
    %15 = arith.truncf %14 : vector<32x2048xf32> to vector<32x2048xbf16>
    %c0_10 = arith.constant 0 : index
    %c0_11 = arith.constant 0 : index
    %16 = vector.load %arg6[%c0_10, %c0_11] : memref<4x32xbf16, #tpu.memory_space<vmem>>, vector<4x32xbf16>
    %cst_12 = arith.constant dense<0.000000e+00> : vector<2048x4xf32>
    %17 = tpu.matmul %15, %16, %cst_12 {dimension_numbers = #tpu.dot_dimension_numbers<[0], [1], [1], [0], [0, 1, 1, 0], [], []>} : vector<32x2048xbf16>, vector<4x32xbf16>, vector<2048x4xf32> -> vector<2048x4xf32>
    %c0_13 = arith.constant 0 : index
    %c0_14 = arith.constant 0 : index
    %18 = vector.load %arg7[%c0_13, %c0_14] : memref<1x4xf32, #tpu.memory_space<vmem>>, vector<1x4xf32>
    %19 = vector.broadcast %18 : vector<1x4xf32> to vector<2048x4xf32>
    %20 = arith.addf %17, %19 : vector<2048x4xf32>
    %c0_15 = arith.constant 0 : index
    %c0_16 = arith.constant 0 : index
    %21 = vector.load %arg8[%c0_15, %c0_16] : memref<2048x4xf32, #tpu.memory_space<vmem>>, vector<2048x4xf32>
    tpu.vector_store %arg8[%c0_15, %c0_16], %20 {strides = array<i32>} : memref<2048x4xf32, #tpu.memory_space<vmem>>, vector<2048x4xf32>,
    return
  }
  func.func @transform_0(%arg0: i32) -> (i32, i32) {
    %c0_i32 = arith.constant 0 : i32
    %c0_i32_0 = arith.constant 0 : i32
    return %arg0, %c0_i32 : i32, i32
  }
  func.func @transform_1(%arg0: i32) -> (i32, i32) {
    %c0_i32 = arith.constant 0 : i32
    %c0_i32_0 = arith.constant 0 : i32
    %c0_i32_1 = arith.constant 0 : i32
    return %c0_i32, %c0_i32_0 : i32, i32
  }
  func.func @transform_2(%arg0: i32) -> (i32, i32) {
    %c0_i32 = arith.constant 0 : i32
    %c0_i32_0 = arith.constant 0 : i32
    %c0_i32_1 = arith.constant 0 : i32
    return %c0_i32, %c0_i32_0 : i32, i32
  }
  func.func @transform_3(%arg0: i32) -> (i32, i32) {
    %c0_i32 = arith.constant 0 : i32
    %c0_i32_0 = arith.constant 0 : i32
    %c0_i32_1 = arith.constant 0 : i32
    return %c0_i32, %c0_i32_0 : i32, i32
  }
  func.func @transform_4(%arg0: i32) -> (i32, i32) {
    %c0_i32 = arith.constant 0 : i32
    %c0_i32_0 = arith.constant 0 : i32
    %c0_i32_1 = arith.constant 0 : i32
    return %c0_i32, %c0_i32_0 : i32, i32
  }
  func.func @transform_5(%arg0: i32) -> (i32, i32) {
    %c0_i32 = arith.constant 0 : i32
    %c0_i32_0 = arith.constant 0 : i32
    %c0_i32_1 = arith.constant 0 : i32
    return %c0_i32, %c0_i32_0 : i32, i32
  }
  func.func @transform_6(%arg0: i32) -> (i32, i32) {
    %c0_i32 = arith.constant 0 : i32
    %c0_i32_0 = arith.constant 0 : i32
    %c0_i32_1 = arith.constant 0 : i32
    return %c0_i32, %c0_i32_0 : i32, i32
  }
  func.func @transform_7(%arg0: i32) -> (i32, i32) {
    %c0_i32 = arith.constant 0 : i32
    %c0_i32_0 = arith.constant 0 : i32
    return %arg0, %c0_i32 : i32, i32
  }
}

</mosaic_0001>

<llo_original>
// kernel: _nlcvnet_pallas.1
$region0: #{_nlcvnet_pallas.1}
  #allocation0 [shape = 'u32[]', space=smem, size = 0x4, offset = 0x4, fixed_abs, tag = 'smem constant byte address 0x4 - core index']
  #allocation1 [shape = 'u32[144,128]{1,0:T(1,128)}', space=vmem, size = 0x12000, scoped, tag = 'internal scratch']
  %s0 = inlined_call_operand.vmem [shape: f32[4096,16], index: 0, kind: input, shape index: {}]
  %s1 = inlined_call_operand.vmem [shape: bf16[32,16], index: 1, kind: input, shape index: {}]
  %s2 = inlined_call_operand.vmem [shape: f32[32,1], index: 2, kind: input, shape index: {}]
  %s3 = inlined_call_operand.vmem [shape: bf16[32,32], index: 3, kind: input, shape index: {}]
  %s4 = inlined_call_operand.vmem [shape: f32[32,1], index: 4, kind: input, shape index: {}]
  %s5 = inlined_call_operand.vmem [shape: bf16[4,32], index: 5, kind: input, shape index: {}]
  %s6 = inlined_call_operand.vmem [shape: f32[1,4], index: 6, kind: input, shape index: {}]
  %s7 = inlined_call_operand.vmem [shape: f32[4096,4], index: 7, kind: output, shape index: {}]
  %s8 = sld [smem:[#allocation0]]
  $region61: #{_nlcvnet_pallas.1} parent=0
    _
  %s10 = ssub.s32 1, %s8
  %s11 = scalar_select 0, %s10, %s8
  loop: start=0, step=1, limit=4
  $region2: #{_nlcvnet_pallas.1} parent=0 // loop_pre_header
    _
  $region3: #{_nlcvnet_pallas.1} parent=0 // loop_header
    %s13 = sphi 0, %s17
    %p14 = scmp.ge.s32.totalorder %s13, 4
    %s23 = sphi 0, %s25
    %s26 = sphi 0, %s23
    %s27 = sphi 0, %s26
    %s43 = sphi 0, %s27
    %s47 = sphi 0, %s47
    %s49 = sphi 0, %s47
    %s50 = sphi 0, %s49
    %s64 = sphi 0, %s50
    %s68 = sphi 0, %s68
    %s70 = sphi 0, %s68
    %s71 = sphi 0, %s70
    %s85 = sphi 0, %s71
    %s89 = sphi 0, %s89
    %s91 = sphi 0, %s89
    %s92 = sphi 0, %s91
    %s106 = sphi 0, %s92
    %s110 = sphi 0, %s110
    %s112 = sphi 0, %s110
    %s113 = sphi 0, %s112
    %s127 = sphi 0, %s113
    %s131 = sphi 0, %s131
    %s133 = sphi 0, %s131
    %s134 = sphi 0, %s133
    %s148 = sphi 0, %s134
    %s152 = sphi 0, %s152
    %s154 = sphi 0, %s152
    %s155 = sphi 0, %s154
    %s169 = sphi 0, %s155
    %s175 = sphi 0, %s177
    %s178 = sphi 0, %s175
    %s179 = sphi 0, %s178
    %s195 = sphi 0, %s179
  $region4: #{_nlcvnet_pallas.1} parent=0 // loop_header_branch
    %16 = sbr.rel (%p14) target = $region8
  $region5: #{_nlcvnet_pallas.1} parent=0 // loop_body
    %s18 = ssub.s32 %s13, 1
    %s19 = ssub.s32 %s13, 2
    %s20 = sadd.s32 %s13, 1
    %s21 = ssub.s32 %s13, %s20
    %p22 = scmp.eq.s32.totalorder %s21, 0
    %s24 = sadd.s32 %s23, 1
    %s25 = scalar_select %p22, %s23, %s24
    %p28 = pneg %p22
    %p29 = scmp.eq.s32.totalorder %s13, 1
    %p30 = por %p28, %p29
    %p31 = scmp.ne.s32.totalorder %s23, %s26
    %p32 = scmp.eq.s32.totalorder %s13, 0
    %p33 = por %p31, %p32
    %p34 = scmp.ne.s32.totalorder %s23, %s26
    %p35 = scmp.eq.s32.totalorder %s18, 1
    %p36 = por %p34, %p35
    %p37 = scmp.ne.s32.totalorder %s26, %s27
    %p38 = scmp.eq.s32.totalorder %s18, 0
    %p39 = por %p37, %p38
    %p40 = scmp.ne.s32.totalorder %s26, %s27
    %p41 = scmp.eq.s32.totalorder %s19, 1
    %p42 = por %p40, %p41
    %p44 = scmp.ne.s32.totalorder %s27, %s43
    %p45 = scmp.eq.s32.totalorder %s19, 0
    %p46 = por %p44, %p45
    %s48 = sadd.s32 %s47, 1
    %p51 = scmp.eq.s32.totalorder %s13, 1
    %p52 = scmp.ne.s32.totalorder %s47, %s49
    %p53 = scmp.eq.s32.totalorder %s13, 0
    %p54 = por %p52, %p53
    %p55 = scmp.ne.s32.totalorder %s47, %s49
    %p56 = scmp.eq.s32.totalorder %s18, 1
    %p57 = por %p55, %p56
    %p58 = scmp.ne.s32.totalorder %s49, %s50
    %p59 = scmp.eq.s32.totalorder %s18, 0
    %p60 = por %p58, %p59
    %p61 = scmp.ne.s32.totalorder %s49, %s50
    %p62 = scmp.eq.s32.totalorder %s19, 1
    %p63 = por %p61, %p62
    %p65 = scmp.ne.s32.totalorder %s50, %s64
    %p66 = scmp.eq.s32.totalorder %s19, 0
    %p67 = por %p65, %p66
    %s69 = sadd.s32 %s68, 1
    %p72 = scmp.eq.s32.totalorder %s13, 1
    %p73 = scmp.ne.s32.totalorder %s68, %s70
    %p74 = scmp.eq.s32.totalorder %s13, 0
    %p75 = por %p73, %p74
    %p76 = scmp.ne.s32.totalorder %s68, %s70
    %p77 = scmp.eq.s32.totalorder %s18, 1
    %p78 = por %p76, %p77
    %p79 = scmp.ne.s32.totalorder %s70, %s71
    %p80 = scmp.eq.s32.totalorder %s18, 0
    %p81 = por %p79, %p80
    %p82 = scmp.ne.s32.totalorder %s70, %s71
    %p83 = scmp.eq.s32.totalorder %s19, 1
    %p84 = por %p82, %p83
    %p86 = scmp.ne.s32.totalorder %s71, %s85
    %p87 = scmp.eq.s32.totalorder %s19, 0
    %p88 = por %p86, %p87
    %s90 = sadd.s32 %s89, 1
    %p93 = scmp.eq.s32.totalorder %s13, 1
    %p94 = scmp.ne.s32.totalorder %s89, %s91
    %p95 = scmp.eq.s32.totalorder %s13, 0
    %p96 = por %p94, %p95
    %p97 = scmp.ne.s32.totalorder %s89, %s91
    %p98 = scmp.eq.s32.totalorder %s18, 1
    %p99 = por %p97, %p98
    %p100 = scmp.ne.s32.totalorder %s91, %s92
    %p101 = scmp.eq.s32.totalorder %s18, 0
    %p102 = por %p100, %p101
    %p103 = scmp.ne.s32.totalorder %s91, %s92
    %p104 = scmp.eq.s32.totalorder %s19, 1
    %p105 = por %p103, %p104
    %p107 = scmp.ne.s32.totalorder %s92, %s106
    %p108 = scmp.eq.s32.totalorder %s19, 0
    %p109 = por %p107, %p108
    %s111 = sadd.s32 %s110, 1
    %p114 = scmp.eq.s32.totalorder %s13, 1
    %p115 = scmp.ne.s32.totalorder %s110, %s112
    %p116 = scmp.eq.s32.totalorder %s13, 0
    %p117 = por %p115, %p116
    %p118 = scmp.ne.s32.totalorder %s110, %s112
    %p119 = scmp.eq.s32.totalorder %s18, 1
    %p120 = por %p118, %p119
    %p121 = scmp.ne.s32.totalorder %s112, %s113
    %p122 = scmp.eq.s32.totalorder %s18, 0
    %p123 = por %p121, %p122
    %p124 = scmp.ne.s32.totalorder %s112, %s113
    %p125 = scmp.eq.s32.totalorder %s19, 1
    %p126 = por %p124, %p125
    %p128 = scmp.ne.s32.totalorder %s113, %s127
    %p129 = scmp.eq.s32.totalorder %s19, 0
    %p130 = por %p128, %p129
    %s132 = sadd.s32 %s131, 1
    %p135 = scmp.eq.s32.totalorder %s13, 1
    %p136 = scmp.ne.s32.totalorder %s131, %s133
    %p137 = scmp.eq.s32.totalorder %s13, 0
    %p138 = por %p136, %p137
    %p139 = scmp.ne.s32.totalorder %s131, %s133
    %p140 = scmp.eq.s32.totalorder %s18, 1
    %p141 = por %p139, %p140
    %p142 = scmp.ne.s32.totalorder %s133, %s134
    %p143 = scmp.eq.s32.totalorder %s18, 0
    %p144 = por %p142, %p143
    %p145 = scmp.ne.s32.totalorder %s133, %s134
    %p146 = scmp.eq.s32.totalorder %s19, 1
    %p147 = por %p145, %p146
    %p149 = scmp.ne.s32.totalorder %s134, %s148
    %p150 = scmp.eq.s32.totalorder %s19, 0
    %p151 = por %p149, %p150
    %s153 = sadd.s32 %s152, 1
    %p156 = scmp.eq.s32.totalorder %s13, 1
    %p157 = scmp.ne.s32.totalorder %s152, %s154
    %p158 = scmp.eq.s32.totalorder %s13, 0
    %p159 = por %p157, %p158
    %p160 = scmp.ne.s32.totalorder %s152, %s154
    %p161 = scmp.eq.s32.totalorder %s18, 1
    %p162 = por %p160, %p161
    %p163 = scmp.ne.s32.totalorder %s154, %s155
    %p164 = scmp.eq.s32.totalorder %s18, 0
    %p165 = por %p163, %p164
    %p166 = scmp.ne.s32.totalorder %s154, %s155
    %p167 = scmp.eq.s32.totalorder %s19, 1
    %p168 = por %p166, %p167
    %p170 = scmp.ne.s32.totalorder %s155, %s169
    %p171 = scmp.eq.s32.totalorder %s19, 0
    %p172 = por %p170, %p171
    %s173 = ssub.s32 %s13, %s20
    %p174 = scmp.eq.s32.totalorder %s173, 0
    %s176 = sadd.s32 %s175, 1
    %s177 = scalar_select %p174, %s175, %s176
    %p180 = pneg %p174
    %p181 = scmp.eq.s32.totalorder %s13, 1
    %p182 = por %p180, %p181
    %p183 = scmp.ne.s32.totalorder %s175, %s178
    %p184 = scmp.eq.s32.totalorder %s13, 0
    %p185 = por %p183, %p184
    %p186 = scmp.ne.s32.totalorder %s175, %s178
    %p187 = scmp.eq.s32.totalorder %s18, 1
    %p188 = por %p186, %p187
    %p189 = scmp.ne.s32.totalorder %s178, %s179
    %p190 = scmp.eq.s32.totalorder %s18, 0
    %p191 = por %p189, %p190
    %p192 = scmp.ne.s32.totalorder %s178, %s179
    %p193 = scmp.eq.s32.totalorder %s19, 1
    %p194 = por %p192, %p193
    %p196 = scmp.ne.s32.totalorder %s179, %s195
    %p197 = scmp.eq.s32.totalorder %s19, 0
    %p198 = por %p196, %p197
    %p199 = scmp.le.s32.totalorder 1, %s13
    %p200 = scmp.lt.s32.totalorder %s13, 3
    %p201 = pnand %p199, %p200
    %p202 = pneg %p201
    // Predicated region
    $region9: #{_nlcvnet_pallas.1} parent=5 // pred_check
      _
    $region10: #{_nlcvnet_pallas.1} parent=5 // pred_check_branch
      %204 = sbr.rel (%p201) target = $region12
    $region11: #{_nlcvnet_pallas.1} parent=5 // pred_region
      %s205 = ssub.s32 %s13, 1
      // Predicated region
      $region13: #{_nlcvnet_pallas.1} parent=11 // pred_check
        %p206 = pneg %p60
      $region14: #{_nlcvnet_pallas.1} parent=11 // pred_check_branch
        %208 = sbr.rel (%p206) target = $region16
      $region15: #{_nlcvnet_pallas.1} parent=11 // pred_region
        _
      $region16: #{_nlcvnet_pallas.1} parent=11 // pred_fallthru
        _
      // Predicated region
      $region17: #{_nlcvnet_pallas.1} parent=11 // pred_check
        %p209 = pneg %p81
      $region18: #{_nlcvnet_pallas.1} parent=11 // pred_check_branch
        %211 = sbr.rel (%p209) target = $region20
      $region19: #{_nlcvnet_pallas.1} parent=11 // pred_region
        _
      $region20: #{_nlcvnet_pallas.1} parent=11 // pred_fallthru
        _
      // Predicated region
      $region21: #{_nlcvnet_pallas.1} parent=11 // pred_check
        %p212 = pneg %p102
      $region22: #{_nlcvnet_pallas.1} parent=11 // pred_check_branch
        %214 = sbr.rel (%p212) target = $region24
      $region23: #{_nlcvnet_pallas.1} parent=11 // pred_region
        _
      $region24: #{_nlcvnet_pallas.1} parent=11 // pred_fallthru
        _
      // Predicated region
      $region25: #{_nlcvnet_pallas.1} parent=11 // pred_check
        %p215 = pneg %p123
      $region26: #{_nlcvnet_pallas.1} parent=11 // pred_check_branch
        %217 = sbr.rel (%p215) target = $region28
      $region27: #{_nlcvnet_pallas.1} parent=11 // pred_region
        _
      $region28: #{_nlcvnet_pallas.1} parent=11 // pred_fallthru
        _
      // Predicated region
      $region29: #{_nlcvnet_pallas.1} parent=11 // pred_check
        %p218 = pneg %p144
      $region30: #{_nlcvnet_pallas.1} parent=11 // pred_check_branch
        %220 = sbr.rel (%p218) target = $region32
      $region31: #{_nlcvnet_pallas.1} parent=11 // pred_region
        _
      $region32: #{_nlcvnet_pallas.1} parent=11 // pred_fallthru
        _
      // Predicated region
      $region33: #{_nlcvnet_pallas.1} parent=11 // pred_check
        %p221 = pneg %p165
      $region34: #{_nlcvnet_pallas.1} parent=11 // pred_check_branch
        %223 = sbr.rel (%p221) target = $region36
      $region35: #{_nlcvnet_pallas.1} parent=11 // pred_region
        _
      $region36: #{_nlcvnet_pallas.1} parent=11 // pred_fallthru
        _
    $region12: #{_nlcvnet_pallas.1} parent=5 // pred_fallthru
      _
    %p224 = scmp.lt.s32.totalorder %s13, 2
    // Predicated region
    $region37: #{_nlcvnet_pallas.1} parent=5 // pred_check
      %p225 = pneg %p224
    $region38: #{_nlcvnet_pallas.1} parent=5 // pred_check_branch
      %227 = sbr.rel (%p225) target = $region40
    $region39: #{_nlcvnet_pallas.1} parent=5 // pred_region
      // Predicated region
      $region41: #{_nlcvnet_pallas.1} parent=39 // pred_check
        %p228 = pneg %p33
      $region42: #{_nlcvnet_pallas.1} parent=39 // pred_check_branch
        %230 = sbr.rel (%p228) target = $region44
      $region43: #{_nlcvnet_pallas.1} parent=39 // pred_region
        %s231 = smul.u32 256, %s13
        %p232 = scmp.lt.s32.totalorder %s231, 511
        %s233 = scalar_select %p232, %s231, 511
        %s234 = smul.addr %s233, 8
        %s235 = scalar_lea.vmem %s0, %s234
        %s236 = smul.u32 256, %s13
      $region44: #{_nlcvnet_pallas.1} parent=39 // pred_fallthru
        _
    $region40: #{_nlcvnet_pallas.1} parent=5 // pred_fallthru
      _
    %p237 = scmp.le.s32.totalorder 1, %s13
    %p238 = scmp.lt.s32.totalorder %s13, 3
    %p239 = pnand %p237, %p238
    %p240 = pneg %p239
    // Predicated region
    $region45: #{_nlcvnet_pallas.1} parent=5 // pred_check
      _
    $region46: #{_nlcvnet_pallas.1} parent=5 // pred_check_branch
      %242 = sbr.rel (%p239) target = $region48
    $region47: #{_nlcvnet_pallas.1} parent=5 // pred_region
      %s243 = ssub.s32 %s13, 1
      %s244 = smul.u32 256, %s18
      %p245 = scmp.lt.s32.totalorder %s244, 511
      %s246 = scalar_select %p245, %s244, 511
      %s247 = smul.addr %s246, 8
      %s248 = scalar_lea.vmem %s0, %s247
      %p249 = pneg %p39
      %p250 = pneg %p36
      %p251 = pneg %p60
      %p252 = pneg %p57
      %p253 = pneg %p81
      %p254 = pneg %p78
      %p255 = pneg %p102
      %p256 = pneg %p99
      %p257 = pneg %p123
      %p258 = pneg %p120
      %p259 = pneg %p144
      %p260 = pneg %p141
      %p261 = pneg %p165
      %p262 = pneg %p162
      %p263 = pneg %p191
      %p264 = pneg %p188
      %s265 = smul.u32 256, %s18
      %p266 = scmp.lt.s32.totalorder %s265, 511
      %s267 = scalar_select %p266, %s265, 511
      %s268 = smul.addr %s267, 8
      %s269 = scalar_lea.vmem %s7, %s268
      %s270 = smul.u32 256, %s18
      %p271 = scmp.lt.s32.totalorder %s270, 511
      %s272 = scalar_select %p271, %s270, 511
      %s273 = smul.addr %s272, 8
      %s274 = scalar_lea.vmem %s0, %s273
      %s275 = smul.u32 256, %s18
      %s276 = smul.u32 256, %s18
      %p277 = scmp.lt.s32.totalorder %s276, 511
      %s278 = scalar_select %p277, %s276, 511
      %s279 = smul.addr %s278, 8
      %s280 = scalar_lea.vmem %s7, %s279
      %s281 = smul.u32 256, %s18
      %v283 = vld [vmem:[%s274] sm:$0xff]
      %v284 = vld [vmem:[%s274 + $0x8] sm:$0xff]
      %v285 = vld [vmem:[%s274 + $0x10] sm:$0xff]
      %v286 = vld [vmem:[%s274 + $0x18] sm:$0xff]
      %v287 = vld [vmem:[%s274 + $0x20] sm:$0xff]
      %v288 = vld [vmem:[%s274 + $0x28] sm:$0xff]
      %v289 = vld [vmem:[%s274 + $0x30] sm:$0xff]
      %v290 = vld [vmem:[%s274 + $0x38] sm:$0xff]
      %v291 = vld [vmem:[%s274 + $0x40] sm:$0xff]
      %v292 = vld [vmem:[%s274 + $0x48] sm:$0xff]
      %v293 = vld [vmem:[%s274 + $0x50] sm:$0xff]
      %v294 = vld [vmem:[%s274 + $0x58] sm:$0xff]
      %v295 = vld [vmem:[%s274 + $0x60] sm:$0xff]
      %v296 = vld [vmem:[%s274 + $0x68] sm:$0xff]
      %v297 = vld [vmem:[%s274 + $0x70] sm:$0xff]
      %v298 = vld [vmem:[%s274 + $0x78] sm:$0xff]
      %v299 = vld [vmem:[%s274 + $0x80] sm:$0xff]
      %v300 = vld [vmem:[%s274 + $0x88] sm:$0xff]
      %v301 = vld [vmem:[%s274 + $0x90] sm:$0xff]
      %v302 = vld [vmem:[%s274 + $0x98] sm:$0xff]
      %v303 = vld [vmem:[%s274 + $0xa0] sm:$0xff]
      %v304 = vld [vmem:[%s274 + $0xa8] sm:$0xff]
      %v305 = vld [vmem:[%s274 + $0xb0] sm:$0xff]
      %v306 = vld [vmem:[%s274 + $0xb8] sm:$0xff]
      %v307 = vld [vmem:[%s274 + $0xc0] sm:$0xff]
      %v308 = vld [vmem:[%s274 + $0xc8] sm:$0xff]
      %v309 = vld [vmem:[%s274 + $0xd0] sm:$0xff]
      %v310 = vld [vmem:[%s274 + $0xd8] sm:$0xff]
      %v311 = vld [vmem:[%s274 + $0xe0] sm:$0xff]
      %v312 = vld [vmem:[%s274 + $0xe8] sm:$0xff]
      %v313 = vld [vmem:[%s274 + $0xf0] sm:$0xff]
      %v314 = vld [vmem:[%s274 + $0xf8] sm:$0xff]
      %v315 = vld [vmem:[%s274 + $0x100] sm:$0xff]
      %v316 = vld [vmem:[%s274 + $0x108] sm:$0xff]
      %v317 = vld [vmem:[%s274 + $0x110] sm:$0xff]
      %v318 = vld [vmem:[%s274 + $0x118] sm:$0xff]
      %v319 = vld [vmem:[%s274 + $0x120] sm:$0xff]
      %v320 = vld [vmem:[%s274 + $0x128] sm:$0xff]
      %v321 = vld [vmem:[%s274 + $0x130] sm:$0xff]
      %v322 = vld [vmem:[%s274 + $0x138] sm:$0xff]
      %v323 = vld [vmem:[%s274 + $0x140] sm:$0xff]
      %v324 = vld [vmem:[%s274 + $0x148] sm:$0xff]
      %v325 = vld [vmem:[%s274 + $0x150] sm:$0xff]
      %v326 = vld [vmem:[%s274 + $0x158] sm:$0xff]
      %v327 = vld [vmem:[%s274 + $0x160] sm:$0xff]
      %v328 = vld [vmem:[%s274 + $0x168] sm:$0xff]
      %v329 = vld [vmem:[%s274 + $0x170] sm:$0xff]
      %v330 = vld [vmem:[%s274 + $0x178] sm:$0xff]
      %v331 = vld [vmem:[%s274 + $0x180] sm:$0xff]
      %v332 = vld [vmem:[%s274 + $0x188] sm:$0xff]
      %v333 = vld [vmem:[%s274 + $0x190] sm:$0xff]
      %v334 = vld [vmem:[%s274 + $0x198] sm:$0xff]
      %v335 = vld [vmem:[%s274 + $0x1a0] sm:$0xff]
      %v336 = vld [vmem:[%s274 + $0x1a8] sm:$0xff]
      %v337 = vld [vmem:[%s274 + $0x1b0] sm:$0xff]
      %v338 = vld [vmem:[%s274 + $0x1b8] sm:$0xff]
      %v339 = vld [vmem:[%s274 + $0x1c0] sm:$0xff]
      %v340 = vld [vmem:[%s274 + $0x1c8] sm:$0xff]
      %v341 = vld [vmem:[%s274 + $0x1d0] sm:$0xff]
      %v342 = vld [vmem:[%s274 + $0x1d8] sm:$0xff]
      %v343 = vld [vmem:[%s274 + $0x1e0] sm:$0xff]
      %v344 = vld [vmem:[%s274 + $0x1e8] sm:$0xff]
      %v345 = vld [vmem:[%s274 + $0x1f0] sm:$0xff]
      %v346 = vld [vmem:[%s274 + $0x1f8] sm:$0xff]
      %v347 = vld [vmem:[%s274 + $0x200] sm:$0xff]
      %v348 = vld [vmem:[%s274 + $0x208] sm:$0xff]
      %v349 = vld [vmem:[%s274 + $0x210] sm:$0xff]
      %v350 = vld [vmem:[%s274 + $0x218] sm:$0xff]
      %v351 = vld [vmem:[%s274 + $0x220] sm:$0xff]
      %v352 = vld [vmem:[%s274 + $0x228] sm:$0xff]
      %v353 = vld [vmem:[%s274 + $0x230] sm:$0xff]
      %v354 = vld [vmem:[%s274 + $0x238] sm:$0xff]
      %v355 = vld [vmem:[%s274 + $0x240] sm:$0xff]
      %v356 = vld [vmem:[%s274 + $0x248] sm:$0xff]
      %v357 = vld [vmem:[%s274 + $0x250] sm:$0xff]
      %v358 = vld [vmem:[%s274 + $0x258] sm:$0xff]
      %v359 = vld [vmem:[%s274 + $0x260] sm:$0xff]
      %v360 = vld [vmem:[%s274 + $0x268] sm:$0xff]
      %v361 = vld [vmem:[%s274 + $0x270] sm:$0xff]
      %v362 = vld [vmem:[%s274 + $0x278] sm:$0xff]
      %v363 = vld [vmem:[%s274 + $0x280] sm:$0xff]
      %v364 = vld [vmem:[%s274 + $0x288] sm:$0xff]
      %v365 = vld [vmem:[%s274 + $0x290] sm:$0xff]
      %v366 = vld [vmem:[%s274 + $0x298] sm:$0xff]
      %v367 = vld [vmem:[%s274 + $0x2a0] sm:$0xff]
      %v368 = vld [vmem:[%s274 + $0x2a8] sm:$0xff]
      %v369 = vld [vmem:[%s274 + $0x2b0] sm:$0xff]
      %v370 = vld [vmem:[%s274 + $0x2b8] sm:$0xff]
      %v371 = vld [vmem:[%s274 + $0x2c0] sm:$0xff]
      %v372 = vld [vmem:[%s274 + $0x2c8] sm:$0xff]
      %v373 = vld [vmem:[%s274 + $0x2d0] sm:$0xff]
      %v374 = vld [vmem:[%s274 + $0x2d8] sm:$0xff]
      %v375 = vld [vmem:[%s274 + $0x2e0] sm:$0xff]
      %v376 = vld [vmem:[%s274 + $0x2e8] sm:$0xff]
      %v377 = vld [vmem:[%s274 + $0x2f0] sm:$0xff]
      %v378 = vld [vmem:[%s274 + $0x2f8] sm:$0xff]
      %v379 = vld [vmem:[%s274 + $0x300] sm:$0xff]
      %v380 = vld [vmem:[%s274 + $0x308] sm:$0xff]
      %v381 = vld [vmem:[%s274 + $0x310] sm:$0xff]
      %v382 = vld [vmem:[%s274 + $0x318] sm:$0xff]
      %v383 = vld [vmem:[%s274 + $0x320] sm:$0xff]
      %v384 = vld [vmem:[%s274 + $0x328] sm:$0xff]
      %v385 = vld [vmem:[%s274 + $0x330] sm:$0xff]
      %v386 = vld [vmem:[%s274 + $0x338] sm:$0xff]
      %v387 = vld [vmem:[%s274 + $0x340] sm:$0xff]
      %v388 = vld [vmem:[%s274 + $0x348] sm:$0xff]
      %v389 = vld [vmem:[%s274 + $0x350] sm:$0xff]
      %v390 = vld [vmem:[%s274 + $0x358] sm:$0xff]
      %v391 = vld [vmem:[%s274 + $0x360] sm:$0xff]
      %v392 = vld [vmem:[%s274 + $0x368] sm:$0xff]
      %v393 = vld [vmem:[%s274 + $0x370] sm:$0xff]
      %v394 = vld [vmem:[%s274 + $0x378] sm:$0xff]
      %v395 = vld [vmem:[%s274 + $0x380] sm:$0xff]
      %v396 = vld [vmem:[%s274 + $0x388] sm:$0xff]
      %v397 = vld [vmem:[%s274 + $0x390] sm:$0xff]
      %v398 = vld [vmem:[%s274 + $0x398] sm:$0xff]
      %v399 = vld [vmem:[%s274 + $0x3a0] sm:$0xff]
      %v400 = vld [vmem:[%s274 + $0x3a8] sm:$0xff]
      %v401 = vld [vmem:[%s274 + $0x3b0] sm:$0xff]
      %v402 = vld [vmem:[%s274 + $0x3b8] sm:$0xff]
      %v403 = vld [vmem:[%s274 + $0x3c0] sm:$0xff]
      %v404 = vld [vmem:[%s274 + $0x3c8] sm:$0xff]
      %v405 = vld [vmem:[%s274 + $0x3d0] sm:$0xff]
      %v406 = vld [vmem:[%s274 + $0x3d8] sm:$0xff]
      %v407 = vld [vmem:[%s274 + $0x3e0] sm:$0xff]
      %v408 = vld [vmem:[%s274 + $0x3e8] sm:$0xff]
      %v409 = vld [vmem:[%s274 + $0x3f0] sm:$0xff]
      %v410 = vld [vmem:[%s274 + $0x3f8] sm:$0xff]
      %v411 = vld [vmem:[%s274 + $0x400] sm:$0xff]
      %v412 = vld [vmem:[%s274 + $0x408] sm:$0xff]
      %v413 = vld [vmem:[%s274 + $0x410] sm:$0xff]
      %v414 = vld [vmem:[%s274 + $0x418] sm:$0xff]
      %v415 = vld [vmem:[%s274 + $0x420] sm:$0xff]
      %v416 = vld [vmem:[%s274 + $0x428] sm:$0xff]
      %v417 = vld [vmem:[%s274 + $0x430] sm:$0xff]
      %v418 = vld [vmem:[%s274 + $0x438] sm:$0xff]
      %v419 = vld [vmem:[%s274 + $0x440] sm:$0xff]
      %v420 = vld [vmem:[%s274 + $0x448] sm:$0xff]
      %v421 = vld [vmem:[%s274 + $0x450] sm:$0xff]
      %v422 = vld [vmem:[%s274 + $0x458] sm:$0xff]
      %v423 = vld [vmem:[%s274 + $0x460] sm:$0xff]
      %v424 = vld [vmem:[%s274 + $0x468] sm:$0xff]
      %v425 = vld [vmem:[%s274 + $0x470] sm:$0xff]
      %v426 = vld [vmem:[%s274 + $0x478] sm:$0xff]
      %v427 = vld [vmem:[%s274 + $0x480] sm:$0xff]
      %v428 = vld [vmem:[%s274 + $0x488] sm:$0xff]
      %v429 = vld [vmem:[%s274 + $0x490] sm:$0xff]
      %v430 = vld [vmem:[%s274 + $0x498] sm:$0xff]
      %v431 = vld [vmem:[%s274 + $0x4a0] sm:$0xff]
      %v432 = vld [vmem:[%s274 + $0x4a8] sm:$0xff]
      %v433 = vld [vmem:[%s274 + $0x4b0] sm:$0xff]
      %v434 = vld [vmem:[%s274 + $0x4b8] sm:$0xff]
      %v435 = vld [vmem:[%s274 + $0x4c0] sm:$0xff]
      %v436 = vld [vmem:[%s274 + $0x4c8] sm:$0xff]
      %v437 = vld [vmem:[%s274 + $0x4d0] sm:$0xff]
      %v438 = vld [vmem:[%s274 + $0x4d8] sm:$0xff]
      %v439 = vld [vmem:[%s274 + $0x4e0] sm:$0xff]
      %v440 = vld [vmem:[%s274 + $0x4e8] sm:$0xff]
      %v441 = vld [vmem:[%s274 + $0x4f0] sm:$0xff]
      %v442 = vld [vmem:[%s274 + $0x4f8] sm:$0xff]
      %v443 = vld [vmem:[%s274 + $0x500] sm:$0xff]
      %v444 = vld [vmem:[%s274 + $0x508] sm:$0xff]
      %v445 = vld [vmem:[%s274 + $0x510] sm:$0xff]
      %v446 = vld [vmem:[%s274 + $0x518] sm:$0xff]
      %v447 = vld [vmem:[%s274 + $0x520] sm:$0xff]
      %v448 = vld [vmem:[%s274 + $0x528] sm:$0xff]
      %v449 = vld [vmem:[%s274 + $0x530] sm:$0xff]
      %v450 = vld [vmem:[%s274 + $0x538] sm:$0xff]
      %v451 = vld [vmem:[%s274 + $0x540] sm:$0xff]
      %v452 = vld [vmem:[%s274 + $0x548] sm:$0xff]
      %v453 = vld [vmem:[%s274 + $0x550] sm:$0xff]
      %v454 = vld [vmem:[%s274 + $0x558] sm:$0xff]
      %v455 = vld [vmem:[%s274 + $0x560] sm:$0xff]
      %v456 = vld [vmem:[%s274 + $0x568] sm:$0xff]
      %v457 = vld [vmem:[%s274 + $0x570] sm:$0xff]
      %v458 = vld [vmem:[%s274 + $0x578] sm:$0xff]
      %v459 = vld [vmem:[%s274 + $0x580] sm:$0xff]
      %v460 = vld [vmem:[%s274 + $0x588] sm:$0xff]
      %v461 = vld [vmem:[%s274 + $0x590] sm:$0xff]
      %v462 = vld [vmem:[%s274 + $0x598] sm:$0xff]
      %v463 = vld [vmem:[%s274 + $0x5a0] sm:$0xff]
      %v464 = vld [vmem:[%s274 + $0x5a8] sm:$0xff]
      %v465 = vld [vmem:[%s274 + $0x5b0] sm:$0xff]
      %v466 = vld [vmem:[%s274 + $0x5b8] sm:$0xff]
      %v467 = vld [vmem:[%s274 + $0x5c0] sm:$0xff]
      %v468 = vld [vmem:[%s274 + $0x5c8] sm:$0xff]
      %v469 = vld [vmem:[%s274 + $0x5d0] sm:$0xff]
      %v470 = vld [vmem:[%s274 + $0x5d8] sm:$0xff]
      %v471 = vld [vmem:[%s274 + $0x5e0] sm:$0xff]
      %v472 = vld [vmem:[%s274 + $0x5e8] sm:$0xff]
      %v473 = vld [vmem:[%s274 + $0x5f0] sm:$0xff]
      %v474 = vld [vmem:[%s274 + $0x5f8] sm:$0xff]
      %v475 = vld [vmem:[%s274 + $0x600] sm:$0xff]
      %v476 = vld [vmem:[%s274 + $0x608] sm:$0xff]
      %v477 = vld [vmem:[%s274 + $0x610] sm:$0xff]
      %v478 = vld [vmem:[%s274 + $0x618] sm:$0xff]
      %v479 = vld [vmem:[%s274 + $0x620] sm:$0xff]
      %v480 = vld [vmem:[%s274 + $0x628] sm:$0xff]
      %v481 = vld [vmem:[%s274 + $0x630] sm:$0xff]
      %v482 = vld [vmem:[%s274 + $0x638] sm:$0xff]
      %v483 = vld [vmem:[%s274 + $0x640] sm:$0xff]
      %v484 = vld [vmem:[%s274 + $0x648] sm:$0xff]
      %v485 = vld [vmem:[%s274 + $0x650] sm:$0xff]
      %v486 = vld [vmem:[%s274 + $0x658] sm:$0xff]
      %v487 = vld [vmem:[%s274 + $0x660] sm:$0xff]
      %v488 = vld [vmem:[%s274 + $0x668] sm:$0xff]
      %v489 = vld [vmem:[%s274 + $0x670] sm:$0xff]
      %v490 = vld [vmem:[%s274 + $0x678] sm:$0xff]
      %v491 = vld [vmem:[%s274 + $0x680] sm:$0xff]
      %v492 = vld [vmem:[%s274 + $0x688] sm:$0xff]
      %v493 = vld [vmem:[%s274 + $0x690] sm:$0xff]
      %v494 = vld [vmem:[%s274 + $0x698] sm:$0xff]
      %v495 = vld [vmem:[%s274 + $0x6a0] sm:$0xff]
      %v496 = vld [vmem:[%s274 + $0x6a8] sm:$0xff]
      %v497 = vld [vmem:[%s274 + $0x6b0] sm:$0xff]
      %v498 = vld [vmem:[%s274 + $0x6b8] sm:$0xff]
      %v499 = vld [vmem:[%s274 + $0x6c0] sm:$0xff]
      %v500 = vld [vmem:[%s274 + $0x6c8] sm:$0xff]
      %v501 = vld [vmem:[%s274 + $0x6d0] sm:$0xff]
      %v502 = vld [vmem:[%s274 + $0x6d8] sm:$0xff]
      %v503 = vld [vmem:[%s274 + $0x6e0] sm:$0xff]
      %v504 = vld [vmem:[%s274 + $0x6e8] sm:$0xff]
      %v505 = vld [vmem:[%s274 + $0x6f0] sm:$0xff]
      %v506 = vld [vmem:[%s274 + $0x6f8] sm:$0xff]
      %v507 = vld [vmem:[%s274 + $0x700] sm:$0xff]
      %v508 = vld [vmem:[%s274 + $0x708] sm:$0xff]
      %v509 = vld [vmem:[%s274 + $0x710] sm:$0xff]
      %v510 = vld [vmem:[%s274 + $0x718] sm:$0xff]
      %v511 = vld [vmem:[%s274 + $0x720] sm:$0xff]
      %v512 = vld [vmem:[%s274 + $0x728] sm:$0xff]
      %v513 = vld [vmem:[%s274 + $0x730] sm:$0xff]
      %v514 = vld [vmem:[%s274 + $0x738] sm:$0xff]
      %v515 = vld [vmem:[%s274 + $0x740] sm:$0xff]
      %v516 = vld [vmem:[%s274 + $0x748] sm:$0xff]
      %v517 = vld [vmem:[%s274 + $0x750] sm:$0xff]
      %v518 = vld [vmem:[%s274 + $0x758] sm:$0xff]
      %v519 = vld [vmem:[%s274 + $0x760] sm:$0xff]
      %v520 = vld [vmem:[%s274 + $0x768] sm:$0xff]
      %v521 = vld [vmem:[%s274 + $0x770] sm:$0xff]
      %v522 = vld [vmem:[%s274 + $0x778] sm:$0xff]
      %v523 = vld [vmem:[%s274 + $0x780] sm:$0xff]
      %v524 = vld [vmem:[%s274 + $0x788] sm:$0xff]
      %v525 = vld [vmem:[%s274 + $0x790] sm:$0xff]
      %v526 = vld [vmem:[%s274 + $0x798] sm:$0xff]
      %v527 = vld [vmem:[%s274 + $0x7a0] sm:$0xff]
      %v528 = vld [vmem:[%s274 + $0x7a8] sm:$0xff]
      %v529 = vld [vmem:[%s274 + $0x7b0] sm:$0xff]
      %v530 = vld [vmem:[%s274 + $0x7b8] sm:$0xff]
      %v531 = vld [vmem:[%s274 + $0x7c0] sm:$0xff]
      %v532 = vld [vmem:[%s274 + $0x7c8] sm:$0xff]
      %v533 = vld [vmem:[%s274 + $0x7d0] sm:$0xff]
      %v534 = vld [vmem:[%s274 + $0x7d8] sm:$0xff]
      %v535 = vld [vmem:[%s274 + $0x7e0] sm:$0xff]
      %v536 = vld [vmem:[%s274 + $0x7e8] sm:$0xff]
      %v537 = vld [vmem:[%s274 + $0x7f0] sm:$0xff]
      %v538 = vld [vmem:[%s274 + $0x7f8] sm:$0xff]
      %v539 = vpack.c.bf16 %v284, %v283
      %v540 = vpack.c.bf16 %v286, %v285
      %v541 = vpack.c.bf16 %v288, %v287
      %v542 = vpack.c.bf16 %v290, %v289
      %v543 = vpack.c.bf16 %v292, %v291
      %v544 = vpack.c.bf16 %v294, %v293
      %v545 = vpack.c.bf16 %v296, %v295
      %v546 = vpack.c.bf16 %v298, %v297
      %v547 = vpack.c.bf16 %v300, %v299
      %v548 = vpack.c.bf16 %v302, %v301
      %v549 = vpack.c.bf16 %v304, %v303
      %v550 = vpack.c.bf16 %v306, %v305
      %v551 = vpack.c.bf16 %v308, %v307
      %v552 = vpack.c.bf16 %v310, %v309
      %v553 = vpack.c.bf16 %v312, %v311
      %v554 = vpack.c.bf16 %v314, %v313
      %v555 = vpack.c.bf16 %v316, %v315
      %v556 = vpack.c.bf16 %v318, %v317
      %v557 = vpack.c.bf16 %v320, %v319
      %v558 = vpack.c.bf16 %v322, %v321
      %v559 = vpack.c.bf16 %v324, %v323
      %v560 = vpack.c.bf16 %v326, %v325
      %v561 = vpack.c.bf16 %v328, %v327
      %v562 = vpack.c.bf16 %v330, %v329
      %v563 = vpack.c.bf16 %v332, %v331
      %v564 = vpack.c.bf16 %v334, %v333
      %v565 = vpack.c.bf16 %v336, %v335
      %v566 = vpack.c.bf16 %v338, %v337
      %v567 = vpack.c.bf16 %v340, %v339
      %v568 = vpack.c.bf16 %v342, %v341
      %v569 = vpack.c.bf16 %v344, %v343
      %v570 = vpack.c.bf16 %v346, %v345
      %v571 = vpack.c.bf16 %v348, %v347
      %v572 = vpack.c.bf16 %v350, %v349
      %v573 = vpack.c.bf16 %v352, %v351
      %v574 = vpack.c.bf16 %v354, %v353
      %v575 = vpack.c.bf16 %v356, %v355
      %v576 = vpack.c.bf16 %v358, %v357
      %v577 = vpack.c.bf16 %v360, %v359
      %v578 = vpack.c.bf16 %v362, %v361
      %v579 = vpack.c.bf16 %v364, %v363
      %v580 = vpack.c.bf16 %v366, %v365
      %v581 = vpack.c.bf16 %v368, %v367
      %v582 = vpack.c.bf16 %v370, %v369
      %v583 = vpack.c.bf16 %v372, %v371
      %v584 = vpack.c.bf16 %v374, %v373
      %v585 = vpack.c.bf16 %v376, %v375
      %v586 = vpack.c.bf16 %v378, %v377
      %v587 = vpack.c.bf16 %v380, %v379
      %v588 = vpack.c.bf16 %v382, %v381
      %v589 = vpack.c.bf16 %v384, %v383
      %v590 = vpack.c.bf16 %v386, %v385
      %v591 = vpack.c.bf16 %v388, %v387
      %v592 = vpack.c.bf16 %v390, %v389
      %v593 = vpack.c.bf16 %v392, %v391
      %v594 = vpack.c.bf16 %v394, %v393
      %v595 = vpack.c.bf16 %v396, %v395
      %v596 = vpack.c.bf16 %v398, %v397
      %v597 = vpack.c.bf16 %v400, %v399
      %v598 = vpack.c.bf16 %v402, %v401
      %v599 = vpack.c.bf16 %v404, %v403
      %v600 = vpack.c.bf16 %v406, %v405
      %v601 = vpack.c.bf16 %v408, %v407
      %v602 = vpack.c.bf16 %v410, %v409
      %v603 = vpack.c.bf16 %v412, %v411
      %v604 = vpack.c.bf16 %v414, %v413
      %v605 = vpack.c.bf16 %v416, %v415
      %v606 = vpack.c.bf16 %v418, %v417
      %v607 = vpack.c.bf16 %v420, %v419
      %v608 = vpack.c.bf16 %v422, %v421
      %v609 = vpack.c.bf16 %v424, %v423
      %v610 = vpack.c.bf16 %v426, %v425
      %v611 = vpack.c.bf16 %v428, %v427
      %v612 = vpack.c.bf16 %v430, %v429
      %v613 = vpack.c.bf16 %v432, %v431
      %v614 = vpack.c.bf16 %v434, %v433
      %v615 = vpack.c.bf16 %v436, %v435
      %v616 = vpack.c.bf16 %v438, %v437
      %v617 = vpack.c.bf16 %v440, %v439
      %v618 = vpack.c.bf16 %v442, %v441
      %v619 = vpack.c.bf16 %v444, %v443
      %v620 = vpack.c.bf16 %v446, %v445
      %v621 = vpack.c.bf16 %v448, %v447
      %v622 = vpack.c.bf16 %v450, %v449
      %v623 = vpack.c.bf16 %v452, %v451
      %v624 = vpack.c.bf16 %v454, %v453
      %v625 = vpack.c.bf16 %v456, %v455
      %v626 = vpack.c.bf16 %v458, %v457
      %v627 = vpack.c.bf16 %v460, %v459
      %v628 = vpack.c.bf16 %v462, %v461
      %v629 = vpack.c.bf16 %v464, %v463
      %v630 = vpack.c.bf16 %v466, %v465
      %v631 = vpack.c.bf16 %v468, %v467
      %v632 = vpack.c.bf16 %v470, %v469
      %v633 = vpack.c.bf16 %v472, %v471
      %v634 = vpack.c.bf16 %v474, %v473
      %v635 = vpack.c.bf16 %v476, %v475
      %v636 = vpack.c.bf16 %v478, %v477
      %v637 = vpack.c.bf16 %v480, %v479
      %v638 = vpack.c.bf16 %v482, %v481
      %v639 = vpack.c.bf16 %v484, %v483
      %v640 = vpack.c.bf16 %v486, %v485
      %v641 = vpack.c.bf16 %v488, %v487
      %v642 = vpack.c.bf16 %v490, %v489
      %v643 = vpack.c.bf16 %v492, %v491
      %v644 = vpack.c.bf16 %v494, %v493
      %v645 = vpack.c.bf16 %v496, %v495
      %v646 = vpack.c.bf16 %v498, %v497
      %v647 = vpack.c.bf16 %v500, %v499
      %v648 = vpack.c.bf16 %v502, %v501
      %v649 = vpack.c.bf16 %v504, %v503
      %v650 = vpack.c.bf16 %v506, %v505
      %v651 = vpack.c.bf16 %v508, %v507
      %v652 = vpack.c.bf16 %v510, %v509
      %v653 = vpack.c.bf16 %v512, %v511
      %v654 = vpack.c.bf16 %v514, %v513
      %v655 = vpack.c.bf16 %v516, %v515
      %v656 = vpack.c.bf16 %v518, %v517
      %v657 = vpack.c.bf16 %v520, %v519
      %v658 = vpack.c.bf16 %v522, %v521
      %v659 = vpack.c.bf16 %v524, %v523
      %v660 = vpack.c.bf16 %v526, %v525
      %v661 = vpack.c.bf16 %v528, %v527
      %v662 = vpack.c.bf16 %v530, %v529
      %v663 = vpack.c.bf16 %v532, %v531
      %v664 = vpack.c.bf16 %v534, %v533
      %v665 = vpack.c.bf16 %v536, %v535
      %v666 = vpack.c.bf16 %v538, %v537
      %v667 = vld [vmem:[%s1] sm:$0xf]
      %v668 = vld [vmem:[%s1 + $0x4] sm:$0xf]
      %v669 = vld [vmem:[%s1 + $0x8] sm:$0xf]
      %v670 = vld [vmem:[%s1 + $0xc] sm:$0xf]
      %v671 = vld [vmem:[%s2] sm:$0xff]
      %v672 = vld [vmem:[%s2 + $0x8] sm:$0xff]
      %v673 = vld [vmem:[%s2 + $0x10] sm:$0xff]
      %v674 = vld [vmem:[%s2 + $0x18] sm:$0xff]
      %676 = vset.pattern.permute.xlu0 0
      %677 = vperm.xlu0 %676, %v671
      %v678 = vpop.permute.xlu0 %677
      %681 = vset.pattern.permute.xlu0 0
      %682 = vperm.xlu0 %681, %v672
      %v683 = vpop.permute.xlu0 %682
      %686 = vset.pattern.permute.xlu0 0
      %687 = vperm.xlu0 %686, %v673
      %v688 = vpop.permute.xlu0 %687
      %691 = vset.pattern.permute.xlu0 0
      %692 = vperm.xlu0 %691, %v674
      %v693 = vpop.permute.xlu0 %692
      %v699 = vunpack.c.l.b16 %v667
      %v700 = vunpack.c.l.b16 %v668
      %v701 = vunpack.c.l.b16 %v669
      %v702 = vunpack.c.l.b16 %v670
      %v703 = vpack.c.b16 %v700, %v699
      %v704 = vpack.c.b16 %v702, %v701
      %vm705 = vcmask 130048
      %v707 = vsel %vm705, %v703, 0
      %v710 = vsel %vm705, %v704, 0
      %v713 = vsel %vm705, %v539, 0
      %v716 = vsel %vm705, %v540, 0
      %v719 = vsel %vm705, %v541, 0
      %v722 = vsel %vm705, %v542, 0
      %v725 = vsel %vm705, %v543, 0
      %v728 = vsel %vm705, %v544, 0
      %v731 = vsel %vm705, %v545, 0
      %v734 = vsel %vm705, %v546, 0
      %v737 = vsel %vm705, %v547, 0
      %v740 = vsel %vm705, %v548, 0
      %v743 = vsel %vm705, %v549, 0
      %v746 = vsel %vm705, %v550, 0
      %v749 = vsel %vm705, %v551, 0
      %v752 = vsel %vm705, %v552, 0
      %v755 = vsel %vm705, %v553, 0
      %v758 = vsel %vm705, %v554, 0
      %v761 = vsel %vm705, %v555, 0
      %v764 = vsel %vm705, %v556, 0
      %v767 = vsel %vm705, %v557, 0
      %v770 = vsel %vm705, %v558, 0
      %v773 = vsel %vm705, %v559, 0
      %v776 = vsel %vm705, %v560, 0
      %v779 = vsel %vm705, %v561, 0
      %v782 = vsel %vm705, %v562, 0
      %v785 = vsel %vm705, %v563, 0
      %v788 = vsel %vm705, %v564, 0
      %v791 = vsel %vm705, %v565, 0
      %v794 = vsel %vm705, %v566, 0
      %v797 = vsel %vm705, %v567, 0
      %v800 = vsel %vm705, %v568, 0
      %v803 = vsel %vm705, %v569, 0
      %v806 = vsel %vm705, %v570, 0
      %v809 = vsel %vm705, %v571, 0
      %v812 = vsel %vm705, %v572, 0
      %v815 = vsel %vm705, %v573, 0
      %v818 = vsel %vm705, %v574, 0
      %v821 = vsel %vm705, %v575, 0
      %v824 = vsel %vm705, %v576, 0
      %v827 = vsel %vm705, %v577, 0
      %v830 = vsel %vm705, %v578, 0
      %v833 = vsel %vm705, %v579, 0
      %v836 = vsel %vm705, %v580, 0
      %v839 = vsel %vm705, %v581, 0
      %v842 = vsel %vm705, %v582, 0
      %v845 = vsel %vm705, %v583, 0
      %v848 = vsel %vm705, %v584, 0
      %v851 = vsel %vm705, %v585, 0
      %v854 = vsel %vm705, %v586, 0
      %v857 = vsel %vm705, %v587, 0
      %v860 = vsel %vm705, %v588, 0
      %v863 = vsel %vm705, %v589, 0
      %v866 = vsel %vm705, %v590, 0
      %v869 = vsel %vm705, %v591, 0
      %v872 = vsel %vm705, %v592, 0
      %v875 = vsel %vm705, %v593, 0
      %v878 = vsel %vm705, %v594, 0
      %v881 = vsel %vm705, %v595, 0
      %v884 = vsel %vm705, %v596, 0
      %v887 = vsel %vm705, %v597, 0
      %v890 = vsel %vm705, %v598, 0
      %v893 = vsel %vm705, %v599, 0
      %v896 = vsel %vm705, %v600, 0
      %v899 = vsel %vm705, %v601, 0
      %v902 = vsel %vm705, %v602, 0
      %v905 = vsel %vm705, %v603, 0
      %v908 = vsel %vm705, %v604, 0
      %v911 = vsel %vm705, %v605, 0
      %v914 = vsel %vm705, %v606, 0
      %v917 = vsel %vm705, %v607, 0
      %v920 = vsel %vm705, %v608, 0
      %v923 = vsel %vm705, %v609, 0
      %v926 = vsel %vm705, %v610, 0
      %v929 = vsel %vm705, %v611, 0
      %v932 = vsel %vm705, %v612, 0
      %v935 = vsel %vm705, %v613, 0
      %v938 = vsel %vm705, %v614, 0
      %v941 = vsel %vm705, %v615, 0
      %v944 = vsel %vm705, %v616, 0
      %v947 = vsel %vm705, %v617, 0
      %v950 = vsel %vm705, %v618, 0
      %v953 = vsel %vm705, %v619, 0
      %v956 = vsel %vm705, %v620, 0
      %v959 = vsel %vm705, %v621, 0
      %v962 = vsel %vm705, %v622, 0
      %v965 = vsel %vm705, %v623, 0
      %v968 = vsel %vm705, %v624, 0
      %v971 = vsel %vm705, %v625, 0
      %v974 = vsel %vm705, %v626, 0
      %v977 = vsel %vm705, %v627, 0
      %v980 = vsel %vm705, %v628, 0
      %v983 = vsel %vm705, %v629, 0
      %v986 = vsel %vm705, %v630, 0
      %v989 = vsel %vm705, %v631, 0
      %v992 = vsel %vm705, %v632, 0
      %v995 = vsel %vm705, %v633, 0
      %v998 = vsel %vm705, %v634, 0
      %v1001 = vsel %vm705, %v635, 0
      %v1004 = vsel %vm705, %v636, 0
      %v1007 = vsel %vm705, %v637, 0
      %v1010 = vsel %vm705, %v638, 0
      %v1013 = vsel %vm705, %v639, 0
      %v1016 = vsel %vm705, %v640, 0
      %v1019 = vsel %vm705, %v641, 0
      %v1022 = vsel %vm705, %v642, 0
      %v1025 = vsel %vm705, %v643, 0
      %v1028 = vsel %vm705, %v644, 0
      %v1031 = vsel %vm705, %v645, 0
      %v1034 = vsel %vm705, %v646, 0
      %v1037 = vsel %vm705, %v647, 0
      %v1040 = vsel %vm705, %v648, 0
      %v1043 = vsel %vm705, %v649, 0
      %v1046 = vsel %vm705, %v650, 0
      %v1049 = vsel %vm705, %v651, 0
      %v1052 = vsel %vm705, %v652, 0
      %v1055 = vsel %vm705, %v653, 0
      %v1058 = vsel %vm705, %v654, 0
      %v1061 = vsel %vm705, %v655, 0
      %v1064 = vsel %vm705, %v656, 0
      %v1067 = vsel %vm705, %v657, 0
      %v1070 = vsel %vm705, %v658, 0
      %v1073 = vsel %vm705, %v659, 0
      %v1076 = vsel %vm705, %v660, 0
      %v1079 = vsel %vm705, %v661, 0
      %v1082 = vsel %vm705, %v662, 0
      %v1085 = vsel %vm705, %v663, 0
      %v1088 = vsel %vm705, %v664, 0
      %v1091 = vsel %vm705, %v665, 0
      %v1094 = vsel %vm705, %v666, 0
      %1096 = vmatprep.subr.bf16.mxu0 0
      %1097 = vmatpush1.bf16.xpose.msra.mxu0 %v713
      %1098 = vmatprep.subr.bf16.mxu0 0
      %1099 = vmatpush1.bf16.xpose.msra.mxu0 %v716
      %1100 = vmatprep.subr.bf16.mxu0 0
      %1101 = vmatpush1.bf16.xpose.msra.mxu0 %v719
      %1102 = vmatprep.subr.bf16.mxu0 0
      %1103 = vmatpush1.bf16.xpose.msra.mxu0 %v722
      %1104 = vmatprep.subr.bf16.mxu0 0
      %1105 = vmatpush1.bf16.xpose.msra.mxu0 %v725
      %1106 = vmatprep.subr.bf16.mxu0 0
      %1107 = vmatpush1.bf16.xpose.msra.mxu0 %v728
      %1108 = vmatprep.subr.bf16.mxu0 0
      %1109 = vmatpush1.bf16.xpose.msra.mxu0 %v731
      %1110 = vmatprep.subr.bf16.mxu0 0
      %1111 = vmatpush1.bf16.xpose.msra.mxu0 %v734
      %1112 = vmatprep.subr.bf16.mxu0 0
      %1113 = vmatpush1.bf16.xpose.msra.mxu0 %v737
      %1114 = vmatprep.subr.bf16.mxu0 0
      %1115 = vmatpush1.bf16.xpose.msra.mxu0 %v740
      %1116 = vmatprep.subr.bf16.mxu0 0
      %1117 = vmatpush1.bf16.xpose.msra.mxu0 %v743
      %1118 = vmatprep.subr.bf16.mxu0 0
      %1119 = vmatpush1.bf16.xpose.msra.mxu0 %v746
      %1120 = vmatprep.subr.bf16.mxu0 0
      %1121 = vmatpush1.bf16.xpose.msra.mxu0 %v749
      %1122 = vmatprep.subr.bf16.mxu0 0
      %1123 = vmatpush1.bf16.xpose.msra.mxu0 %v752
      %1124 = vmatprep.subr.bf16.mxu0 0
      %1125 = vmatpush1.bf16.xpose.msra.mxu0 %v755
      %1126 = vmatprep.subr.bf16.mxu0 0
      %1127 = vmatpush1.bf16.xpose.msra.mxu0 %v758
      %1128 = vmatprep.mubr.bf16.mxu0 0
      %1129 = vmatmul.mubr.bf16.gmra.mrb[0].mxu0 %v707
      %v1130 = vpop.f32.mrb[0].mxu0
      %v1131 = vadd.f32 %v678, %v1130
      %v1132 = vpop.f32.mrb[0].mxu0
      %v1133 = vadd.f32 %v678, %v1132
      %v1134 = vpop.f32.mrb[0].mxu0
      %v1135 = vadd.f32 %v683, %v1134
      %v1136 = vpop.f32.mrb[0].mxu0
      %v1137 = vadd.f32 %v683, %v1136
      %1138 = vmatprep.mubr.bf16.mxu0 0
      %1139 = vmatmul.mubr.bf16.gmra.mrb[0].mxu0 %v710
      %v1140 = vpop.f32.mrb[0].mxu0
      %v1141 = vadd.f32 %v688, %v1140
      %v1142 = vpop.f32.mrb[0].mxu0
      %v1143 = vadd.f32 %v688, %v1142
      %v1144 = vpop.f32.mrb[0].mxu0
      %v1145 = vadd.f32 %v693, %v1144
      %v1146 = vpop.f32.mrb[0].mxu0
      %v1147 = vadd.f32 %v693, %v1146
      %1148 = vdwg.mxu0
      %1149 = vmatprep.subr.bf16.mxu0 0
      %1150 = vmatpush1.bf16.xpose.msra.mxu0 %v761
      %1151 = vmatprep.subr.bf16.mxu0 0
      %1152 = vmatpush1.bf16.xpose.msra.mxu0 %v764
      %1153 = vmatprep.subr.bf16.mxu0 0
      %1154 = vmatpush1.bf16.xpose.msra.mxu0 %v767
      %1155 = vmatprep.subr.bf16.mxu0 0
      %1156 = vmatpush1.bf16.xpose.msra.mxu0 %v770
      %1157 = vmatprep.subr.bf16.mxu0 0
      %1158 = vmatpush1.bf16.xpose.msra.mxu0 %v773
      %1159 = vmatprep.subr.bf16.mxu0 0
      %1160 = vmatpush1.bf16.xpose.msra.mxu0 %v776
      %1161 = vmatprep.subr.bf16.mxu0 0
      %1162 = vmatpush1.bf16.xpose.msra.mxu0 %v779
      %1163 = vmatprep.subr.bf16.mxu0 0
      %1164 = vmatpush1.bf16.xpose.msra.mxu0 %v782
      %1165 = vmatprep.subr.bf16.mxu0 0
      %1166 = vmatpush1.bf16.xpose.msra.mxu0 %v785
      %1167 = vmatprep.subr.bf16.mxu0 0
      %1168 = vmatpush1.bf16.xpose.msra.mxu0 %v788
      %1169 = vmatprep.subr.bf16.mxu0 0
      %1170 = vmatpush1.bf16.xpose.msra.mxu0 %v791
      %1171 = vmatprep.subr.bf16.mxu0 0
      %1172 = vmatpush1.bf16.xpose.msra.mxu0 %v794
      %1173 = vmatprep.subr.bf16.mxu0 0
      %1174 = vmatpush1.bf16.xpose.msra.mxu0 %v797
      %1175 = vmatprep.subr.bf16.mxu0 0
      %1176 = vmatpush1.bf16.xpose.msra.mxu0 %v800
      %1177 = vmatprep.subr.bf16.mxu0 0
      %1178 = vmatpush1.bf16.xpose.msra.mxu0 %v803
      %1179 = vmatprep.subr.bf16.mxu0 0
      %1180 = vmatpush1.bf16.xpose.msra.mxu0 %v806
      %1181 = vmatprep.mubr.bf16.mxu0 0
      %1182 = vmatmul.mubr.bf16.gmra.mrb[0].mxu0 %v707
      %v1183 = vpop.f32.mrb[0].mxu0
      %v1184 = vadd.f32 %v678, %v1183
      %v1185 = vpop.f32.mrb[0].mxu0
      %v1186 = vadd.f32 %v678, %v1185
      %v1187 = vpop.f32.mrb[0].mxu0
      %v1188 = vadd.f32 %v683, %v1187
      %v1189 = vpop.f32.mrb[0].mxu0
      %v1190 = vadd.f32 %v683, %v1189
      %1191 = vmatprep.mubr.bf16.mxu0 0
      %1192 = vmatmul.mubr.bf16.gmra.mrb[0].mxu0 %v710
      %v1193 = vpop.f32.mrb[0].mxu0
      %v1194 = vadd.f32 %v688, %v1193
      %v1195 = vpop.f32.mrb[0].mxu0
      %v1196 = vadd.f32 %v688, %v1195
      %v1197 = vpop.f32.mrb[0].mxu0
      %v1198 = vadd.f32 %v693, %v1197
      %v1199 = vpop.f32.mrb[0].mxu0
      %v1200 = vadd.f32 %v693, %v1199
      %1201 = vdwg.mxu0
      %1202 = vmatprep.subr.bf16.mxu0 0
      %1203 = vmatpush1.bf16.xpose.msra.mxu0 %v809
      %1204 = vmatprep.subr.bf16.mxu0 0
      %1205 = vmatpush1.bf16.xpose.msra.mxu0 %v812
      %1206 = vmatprep.subr.bf16.mxu0 0
      %1207 = vmatpush1.bf16.xpose.msra.mxu0 %v815
      %1208 = vmatprep.subr.bf16.mxu0 0
      %1209 = vmatpush1.bf16.xpose.msra.mxu0 %v818
      %1210 = vmatprep.subr.bf16.mxu0 0
      %1211 = vmatpush1.bf16.xpose.msra.mxu0 %v821
      %1212 = vmatprep.subr.bf16.mxu0 0
      %1213 = vmatpush1.bf16.xpose.msra.mxu0 %v824
      %1214 = vmatprep.subr.bf16.mxu0 0
      %1215 = vmatpush1.bf16.xpose.msra.mxu0 %v827
      %1216 = vmatprep.subr.bf16.mxu0 0
      %1217 = vmatpush1.bf16.xpose.msra.mxu0 %v830
      %1218 = vmatprep.subr.bf16.mxu0 0
      %1219 = vmatpush1.bf16.xpose.msra.mxu0 %v833
      %1220 = vmatprep.subr.bf16.mxu0 0
      %1221 = vmatpush1.bf16.xpose.msra.mxu0 %v836
      %1222 = vmatprep.subr.bf16.mxu0 0
      %1223 = vmatpush1.bf16.xpose.msra.mxu0 %v839
      %1224 = vmatprep.subr.bf16.mxu0 0
      %1225 = vmatpush1.bf16.xpose.msra.mxu0 %v842
      %1226 = vmatprep.subr.bf16.mxu0 0
      %1227 = vmatpush1.bf16.xpose.msra.mxu0 %v845
      %1228 = vmatprep.subr.bf16.mxu0 0
      %1229 = vmatpush1.bf16.xpose.msra.mxu0 %v848
      %1230 = vmatprep.subr.bf16.mxu0 0
      %1231 = vmatpush1.bf16.xpose.msra.mxu0 %v851
      %1232 = vmatprep.subr.bf16.mxu0 0
      %1233 = vmatpush1.bf16.xpose.msra.mxu0 %v854
      %1234 = vmatprep.mubr.bf16.mxu0 0
      %1235 = vmatmul.mubr.bf16.gmra.mrb[0].mxu0 %v707
      %v1236 = vpop.f32.mrb[0].mxu0
      %v1237 = vadd.f32 %v678, %v1236
      %v1238 = vpop.f32.mrb[0].mxu0
      %v1239 = vadd.f32 %v678, %v1238
      %v1240 = vpop.f32.mrb[0].mxu0
      %v1241 = vadd.f32 %v683, %v1240
      %v1242 = vpop.f32.mrb[0].mxu0
      %v1243 = vadd.f32 %v683, %v1242
      %1244 = vmatprep.mubr.bf16.mxu0 0
      %1245 = vmatmul.mubr.bf16.gmra.mrb[0].mxu0 %v710
      %v1246 = vpop.f32.mrb[0].mxu0
      %v1247 = vadd.f32 %v688, %v1246
      %v1248 = vpop.f32.mrb[0].mxu0
      %v1249 = vadd.f32 %v688, %v1248
      %v1250 = vpop.f32.mrb[0].mxu0
      %v1251 = vadd.f32 %v693, %v1250
      %v1252 = vpop.f32.mrb[0].mxu0
      %v1253 = vadd.f32 %v693, %v1252
      %1254 = vdwg.mxu0
      %1255 = vmatprep.subr.bf16.mxu0 0
      %1256 = vmatpush1.bf16.xpose.msra.mxu0 %v857
      %1257 = vmatprep.subr.bf16.mxu0 0
      %1258 = vmatpush1.bf16.xpose.msra.mxu0 %v860
      %1259 = vmatprep.subr.bf16.mxu0 0
      %1260 = vmatpush1.bf16.xpose.msra.mxu0 %v863
      %1261 = vmatprep.subr.bf16.mxu0 0
      %1262 = vmatpush1.bf16.xpose.msra.mxu0 %v866
      %1263 = vmatprep.subr.bf16.mxu0 0
      %1264 = vmatpush1.bf16.xpose.msra.mxu0 %v869
      %1265 = vmatprep.subr.bf16.mxu0 0
      %1266 = vmatpush1.bf16.xpose.msra.mxu0 %v872
      %1267 = vmatprep.subr.bf16.mxu0 0
      %1268 = vmatpush1.bf16.xpose.msra.mxu0 %v875
      %1269 = vmatprep.subr.bf16.mxu0 0
      %1270 = vmatpush1.bf16.xpose.msra.mxu0 %v878
      %1271 = vmatprep.subr.bf16.mxu0 0
      %1272 = vmatpush1.bf16.xpose.msra.mxu0 %v881
      %1273 = vmatprep.subr.bf16.mxu0 0
      %1274 = vmatpush1.bf16.xpose.msra.mxu0 %v884
      %1275 = vmatprep.subr.bf16.mxu0 0
      %1276 = vmatpush1.bf16.xpose.msra.mxu0 %v887
      %1277 = vmatprep.subr.bf16.mxu0 0
      %1278 = vmatpush1.bf16.xpose.msra.mxu0 %v890
      %1279 = vmatprep.subr.bf16.mxu0 0
      %1280 = vmatpush1.bf16.xpose.msra.mxu0 %v893
      %1281 = vmatprep.subr.bf16.mxu0 0
      %1282 = vmatpush1.bf16.xpose.msra.mxu0 %v896
      %1283 = vmatprep.subr.bf16.mxu0 0
      %1284 = vmatpush1.bf16.xpose.msra.mxu0 %v899
      %1285 = vmatprep.subr.bf16.mxu0 0
      %1286 = vmatpush1.bf16.xpose.msra.mxu0 %v902
      %1287 = vmatprep.mubr.bf16.mxu0 0
      %1288 = vmatmul.mubr.bf16.gmra.mrb[0].mxu0 %v707
      %v1289 = vpop.f32.mrb[0].mxu0
      %v1290 = vadd.f32 %v678, %v1289
      %v1291 = vpop.f32.mrb[0].mxu0
      %v1292 = vadd.f32 %v678, %v1291
      %v1293 = vpop.f32.mrb[0].mxu0
      %v1294 = vadd.f32 %v683, %v1293
      %v1295 = vpop.f32.mrb[0].mxu0
      %v1296 = vadd.f32 %v683, %v1295
      %1297 = vmatprep.mubr.bf16.mxu0 0
      %1298 = vmatmul.mubr.bf16.gmra.mrb[0].mxu0 %v710
      %v1299 = vpop.f32.mrb[0].mxu0
      %v1300 = vadd.f32 %v688, %v1299
      %v1301 = vpop.f32.mrb[0].mxu0
      %v1302 = vadd.f32 %v688, %v1301
      %v1303 = vpop.f32.mrb[0].mxu0
      %v1304 = vadd.f32 %v693, %v1303
      %v1305 = vpop.f32.mrb[0].mxu0
      %v1306 = vadd.f32 %v693, %v1305
      %1307 = vdwg.mxu0
      %1308 = vmatprep.subr.bf16.mxu0 0
      %1309 = vmatpush1.bf16.xpose.msra.mxu0 %v905
      %1310 = vmatprep.subr.bf16.mxu0 0
      %1311 = vmatpush1.bf16.xpose.msra.mxu0 %v908
      %1312 = vmatprep.subr.bf16.mxu0 0
      %1313 = vmatpush1.bf16.xpose.msra.mxu0 %v911
      %1314 = vmatprep.subr.bf16.mxu0 0
      %1315 = vmatpush1.bf16.xpose.msra.mxu0 %v914
      %1316 = vmatprep.subr.bf16.mxu0 0
      %1317 = vmatpush1.bf16.xpose.msra.mxu0 %v917
      %1318 = vmatprep.subr.bf16.mxu0 0
      %1319 = vmatpush1.bf16.xpose.msra.mxu0 %v920
      %1320 = vmatprep.subr.bf16.mxu0 0
      %1321 = vmatpush1.bf16.xpose.msra.mxu0 %v923
      %1322 = vmatprep.subr.bf16.mxu0 0
      %1323 = vmatpush1.bf16.xpose.msra.mxu0 %v926
      %1324 = vmatprep.subr.bf16.mxu0 0
      %1325 = vmatpush1.bf16.xpose.msra.mxu0 %v929
      %1326 = vmatprep.subr.bf16.mxu0 0
      %1327 = vmatpush1.bf16.xpose.msra.mxu0 %v932
      %1328 = vmatprep.subr.bf16.mxu0 0
      %1329 = vmatpush1.bf16.xpose.msra.mxu0 %v935
      %1330 = vmatprep.subr.bf16.mxu0 0
      %1331 = vmatpush1.bf16.xpose.msra.mxu0 %v938
      %1332 = vmatprep.subr.bf16.mxu0 0
      %1333 = vmatpush1.bf16.xpose.msra.mxu0 %v941
      %1334 = vmatprep.subr.bf16.mxu0 0
      %1335 = vmatpush1.bf16.xpose.msra.mxu0 %v944
      %1336 = vmatprep.subr.bf16.mxu0 0
      %1337 = vmatpush1.bf16.xpose.msra.mxu0 %v947
      %1338 = vmatprep.subr.bf16.mxu0 0
      %1339 = vmatpush1.bf16.xpose.msra.mxu0 %v950
      %1340 = vmatprep.mubr.bf16.mxu0 0
      %1341 = vmatmul.mubr.bf16.gmra.mrb[0].mxu0 %v707
      %v1342 = vpop.f32.mrb[0].mxu0
      %v1343 = vadd.f32 %v678, %v1342
      %v1344 = vpop.f32.mrb[0].mxu0
      %v1345 = vadd.f32 %v678, %v1344
      %v1346 = vpop.f32.mrb[0].mxu0
      %v1347 = vadd.f32 %v683, %v1346
      %v1348 = vpop.f32.mrb[0].mxu0
      %v1349 = vadd.f32 %v683, %v1348
      %1350 = vmatprep.mubr.bf16.mxu0 0
      %1351 = vmatmul.mubr.bf16.gmra.mrb[0].mxu0 %v710
      %v1352 = vpop.f32.mrb[0].mxu0
      %v1353 = vadd.f32 %v688, %v1352
      %v1354 = vpop.f32.mrb[0].mxu0
      %v1355 = vadd.f32 %v688, %v1354
      %v1356 = vpop.f32.mrb[0].mxu0
      %v1357 = vadd.f32 %v693, %v1356
      %v1358 = vpop.f32.mrb[0].mxu0
      %v1359 = vadd.f32 %v693, %v1358
      %1360 = vdwg.mxu0
      %1361 = vmatprep.subr.bf16.mxu0 0
      %1362 = vmatpush1.bf16.xpose.msra.mxu0 %v953
      %1363 = vmatprep.subr.bf16.mxu0 0
      %1364 = vmatpush1.bf16.xpose.msra.mxu0 %v956
      %1365 = vmatprep.subr.bf16.mxu0 0
      %1366 = vmatpush1.bf16.xpose.msra.mxu0 %v959
      %1367 = vmatprep.subr.bf16.mxu0 0
      %1368 = vmatpush1.bf16.xpose.msra.mxu0 %v962
      %1369 = vmatprep.subr.bf16.mxu0 0
      %1370 = vmatpush1.bf16.xpose.msra.mxu0 %v965
      %1371 = vmatprep.subr.bf16.mxu0 0
      %1372 = vmatpush1.bf16.xpose.msra.mxu0 %v968
      %1373 = vmatprep.subr.bf16.mxu0 0
      %1374 = vmatpush1.bf16.xpose.msra.mxu0 %v971
      %1375 = vmatprep.subr.bf16.mxu0 0
      %1376 = vmatpush1.bf16.xpose.msra.mxu0 %v974
      %1377 = vmatprep.subr.bf16.mxu0 0
      %1378 = vmatpush1.bf16.xpose.msra.mxu0 %v977
      %1379 = vmatprep.subr.bf16.mxu0 0
      %1380 = vmatpush1.bf16.xpose.msra.mxu0 %v980
      %1381 = vmatprep.subr.bf16.mxu0 0
      %1382 = vmatpush1.bf16.xpose.msra.mxu0 %v983
      %1383 = vmatprep.subr.bf16.mxu0 0
      %1384 = vmatpush1.bf16.xpose.msra.mxu0 %v986
      %1385 = vmatprep.subr.bf16.mxu0 0
      %1386 = vmatpush1.bf16.xpose.msra.mxu0 %v989
      %1387 = vmatprep.subr.bf16.mxu0 0
      %1388 = vmatpush1.bf16.xpose.msra.mxu0 %v992
      %1389 = vmatprep.subr.bf16.mxu0 0
      %1390 = vmatpush1.bf16.xpose.msra.mxu0 %v995
      %1391 = vmatprep.subr.bf16.mxu0 0
      %1392 = vmatpush1.bf16.xpose.msra.mxu0 %v998
      %1393 = vmatprep.mubr.bf16.mxu0 0
      %1394 = vmatmul.mubr.bf16.gmra.mrb[0].mxu0 %v707
      %v1395 = vpop.f32.mrb[0].mxu0
      %v1396 = vadd.f32 %v678, %v1395
      %v1397 = vpop.f32.mrb[0].mxu0
      %v1398 = vadd.f32 %v678, %v1397
      %v1399 = vpop.f32.mrb[0].mxu0
      %v1400 = vadd.f32 %v683, %v1399
      %v1401 = vpop.f32.mrb[0].mxu0
      %v1402 = vadd.f32 %v683, %v1401
      %1403 = vmatprep.mubr.bf16.mxu0 0
      %1404 = vmatmul.mubr.bf16.gmra.mrb[0].mxu0 %v710
      %v1405 = vpop.f32.mrb[0].mxu0
      %v1406 = vadd.f32 %v688, %v1405
      %v1407 = vpop.f32.mrb[0].mxu0
      %v1408 = vadd.f32 %v688, %v1407
      %v1409 = vpop.f32.mrb[0].mxu0
      %v1410 = vadd.f32 %v693, %v1409
      %v1411 = vpop.f32.mrb[0].mxu0
      %v1412 = vadd.f32 %v693, %v1411
      %1413 = vdwg.mxu0
      %1414 = vmatprep.subr.bf16.mxu0 0
      %1415 = vmatpush1.bf16.xpose.msra.mxu0 %v1001
      %1416 = vmatprep.subr.bf16.mxu0 0
      %1417 = vmatpush1.bf16.xpose.msra.mxu0 %v1004
      %1418 = vmatprep.subr.bf16.mxu0 0
      %1419 = vmatpush1.bf16.xpose.msra.mxu0 %v1007
      %1420 = vmatprep.subr.bf16.mxu0 0
      %1421 = vmatpush1.bf16.xpose.msra.mxu0 %v1010
      %1422 = vmatprep.subr.bf16.mxu0 0
      %1423 = vmatpush1.bf16.xpose.msra.mxu0 %v1013
      %1424 = vmatprep.subr.bf16.mxu0 0
      %1425 = vmatpush1.bf16.xpose.msra.mxu0 %v1016
      %1426 = vmatprep.subr.bf16.mxu0 0
      %1427 = vmatpush1.bf16.xpose.msra.mxu0 %v1019
      %1428 = vmatprep.subr.bf16.mxu0 0
      %1429 = vmatpush1.bf16.xpose.msra.mxu0 %v1022
      %1430 = vmatprep.subr.bf16.mxu0 0
      %1431 = vmatpush1.bf16.xpose.msra.mxu0 %v1025
      %1432 = vmatprep.subr.bf16.mxu0 0
      %1433 = vmatpush1.bf16.xpose.msra.mxu0 %v1028
      %1434 = vmatprep.subr.bf16.mxu0 0
      %1435 = vmatpush1.bf16.xpose.msra.mxu0 %v1031
      %1436 = vmatprep.subr.bf16.mxu0 0
      %1437 = vmatpush1.bf16.xpose.msra.mxu0 %v1034
      %1438 = vmatprep.subr.bf16.mxu0 0
      %1439 = vmatpush1.bf16.xpose.msra.mxu0 %v1037
      %1440 = vmatprep.subr.bf16.mxu0 0
      %1441 = vmatpush1.bf16.xpose.msra.mxu0 %v1040
      %1442 = vmatprep.subr.bf16.mxu0 0
      %1443 = vmatpush1.bf16.xpose.msra.mxu0 %v1043
      %1444 = vmatprep.subr.bf16.mxu0 0
      %1445 = vmatpush1.bf16.xpose.msra.mxu0 %v1046
      %1446 = vmatprep.mubr.bf16.mxu0 0
      %1447 = vmatmul.mubr.bf16.gmra.mrb[0].mxu0 %v707
      %v1448 = vpop.f32.mrb[0].mxu0
      %v1449 = vadd.f32 %v678, %v1448
      %v1450 = vpop.f32.mrb[0].mxu0
      %v1451 = vadd.f32 %v678, %v1450
      %v1452 = vpop.f32.mrb[0].mxu0
      %v1453 = vadd.f32 %v683, %v1452
      %v1454 = vpop.f32.mrb[0].mxu0
      %v1455 = vadd.f32 %v683, %v1454
      %1456 = vmatprep.mubr.bf16.mxu0 0
      %1457 = vmatmul.mubr.bf16.gmra.mrb[0].mxu0 %v710
      %v1458 = vpop.f32.mrb[0].mxu0
      %v1459 = vadd.f32 %v688, %v1458
      %v1460 = vpop.f32.mrb[0].mxu0
      %v1461 = vadd.f32 %v688, %v1460
      %v1462 = vpop.f32.mrb[0].mxu0
      %v1463 = vadd.f32 %v693, %v1462
      %v1464 = vpop.f32.mrb[0].mxu0
      %v1465 = vadd.f32 %v693, %v1464
      %1466 = vdwg.mxu0
      %1467 = vmatprep.subr.bf16.mxu0 0
      %1468 = vmatpush1.bf16.xpose.msra.mxu0 %v1049
      %1469 = vmatprep.subr.bf16.mxu0 0
      %1470 = vmatpush1.bf16.xpose.msra.mxu0 %v1052
      %1471 = vmatprep.subr.bf16.mxu0 0
      %1472 = vmatpush1.bf16.xpose.msra.mxu0 %v1055
      %1473 = vmatprep.subr.bf16.mxu0 0
      %1474 = vmatpush1.bf16.xpose.msra.mxu0 %v1058
      %1475 = vmatprep.subr.bf16.mxu0 0
      %1476 = vmatpush1.bf16.xpose.msra.mxu0 %v1061
      %1477 = vmatprep.subr.bf16.mxu0 0
      %1478 = vmatpush1.bf16.xpose.msra.mxu0 %v1064
      %1479 = vmatprep.subr.bf16.mxu0 0
      %1480 = vmatpush1.bf16.xpose.msra.mxu0 %v1067
      %1481 = vmatprep.subr.bf16.mxu0 0
      %1482 = vmatpush1.bf16.xpose.msra.mxu0 %v1070
      %1483 = vmatprep.subr.bf16.mxu0 0
      %1484 = vmatpush1.bf16.xpose.msra.mxu0 %v1073
      %1485 = vmatprep.subr.bf16.mxu0 0
      %1486 = vmatpush1.bf16.xpose.msra.mxu0 %v1076
      %1487 = vmatprep.subr.bf16.mxu0 0
      %1488 = vmatpush1.bf16.xpose.msra.mxu0 %v1079
      %1489 = vmatprep.subr.bf16.mxu0 0
      %1490 = vmatpush1.bf16.xpose.msra.mxu0 %v1082
      %1491 = vmatprep.subr.bf16.mxu0 0
      %1492 = vmatpush1.bf16.xpose.msra.mxu0 %v1085
      %1493 = vmatprep.subr.bf16.mxu0 0
      %1494 = vmatpush1.bf16.xpose.msra.mxu0 %v1088
      %1495 = vmatprep.subr.bf16.mxu0 0
      %1496 = vmatpush1.bf16.xpose.msra.mxu0 %v1091
      %1497 = vmatprep.subr.bf16.mxu0 0
      %1498 = vmatpush1.bf16.xpose.msra.mxu0 %v1094
      %1499 = vmatprep.mubr.bf16.mxu0 0
      %1500 = vmatmul.mubr.bf16.gmra.mrb[0].mxu0 %v707
      %v1501 = vpop.f32.mrb[0].mxu0
      %v1502 = vadd.f32 %v678, %v1501
      %v1503 = vpop.f32.mrb[0].mxu0
      %v1504 = vadd.f32 %v678, %v1503
      %v1505 = vpop.f32.mrb[0].mxu0
      %v1506 = vadd.f32 %v683, %v1505
      %v1507 = vpop.f32.mrb[0].mxu0
      %v1508 = vadd.f32 %v683, %v1507
      %1509 = vmatprep.mubr.bf16.mxu0 0
      %1510 = vmatmul.mubr.bf16.gmra.mrb[0].mxu0 %v710
      %v1511 = vpop.f32.mrb[0].mxu0
      %v1512 = vadd.f32 %v688, %v1511
      %v1513 = vpop.f32.mrb[0].mxu0
      %v1514 = vadd.f32 %v688, %v1513
      %v1515 = vpop.f32.mrb[0].mxu0
      %v1516 = vadd.f32 %v693, %v1515
      %v1517 = vpop.f32.mrb[0].mxu0
      %v1518 = vadd.f32 %v693, %v1517
      %1519 = vdwg.mxu0
      %v1520 = vtanh.pop %v1131
      %v1521 = vtanh.pop %v1133
      %v1522 = vtanh.pop %v1184
      %v1523 = vtanh.pop %v1186
      %v1524 = vtanh.pop %v1237
      %v1525 = vtanh.pop %v1239
      %v1526 = vtanh.pop %v1290
      %v1527 = vtanh.pop %v1292
      %v1528 = vtanh.pop %v1343
      %v1529 = vtanh.pop %v1345
      %v1530 = vtanh.pop %v1396
      %v1531 = vtanh.pop %v1398
      %v1532 = vtanh.pop %v1449
      %v1533 = vtanh.pop %v1451
      %v1534 = vtanh.pop %v1502
      %v1535 = vtanh.pop %v1504
      %v1536 = vtanh.pop %v1135
      %v1537 = vtanh.pop %v1137
      %v1538 = vtanh.pop %v1188
      %v1539 = vtanh.pop %v1190
      %v1540 = vtanh.pop %v1241
      %v1541 = vtanh.pop %v1243
      %v1542 = vtanh.pop %v1294
      %v1543 = vtanh.pop %v1296
      %v1544 = vtanh.pop %v1347
      %v1545 = vtanh.pop %v1349
      %v1546 = vtanh.pop %v1400
      %v1547 = vtanh.pop %v1402
      %v1548 = vtanh.pop %v1453
      %v1549 = vtanh.pop %v1455
      %v1550 = vtanh.pop %v1506
      %v1551 = vtanh.pop %v1508
      %v1552 = vtanh.pop %v1141
      %v1553 = vtanh.pop %v1143
      %v1554 = vtanh.pop %v1194
      %v1555 = vtanh.pop %v1196
      %v1556 = vtanh.pop %v1247
      %v1557 = vtanh.pop %v1249
      %v1558 = vtanh.pop %v1300
      %v1559 = vtanh.pop %v1302
      %v1560 = vtanh.pop %v1353
      %v1561 = vtanh.pop %v1355
      %v1562 = vtanh.pop %v1406
      %v1563 = vtanh.pop %v1408
      %v1564 = vtanh.pop %v1459
      %v1565 = vtanh.pop %v1461
      %v1566 = vtanh.pop %v1512
      %v1567 = vtanh.pop %v1514
      %v1568 = vtanh.pop %v1145
      %v1569 = vtanh.pop %v1147
      %v1570 = vtanh.pop %v1198
      %v1571 = vtanh.pop %v1200
      %v1572 = vtanh.pop %v1251
      %v1573 = vtanh.pop %v1253
      %v1574 = vtanh.pop %v1304
      %v1575 = vtanh.pop %v1306
      %v1576 = vtanh.pop %v1357
      %v1577 = vtanh.pop %v1359
      %v1578 = vtanh.pop %v1410
      %v1579 = vtanh.pop %v1412
      %v1580 = vtanh.pop %v1463
      %v1581 = vtanh.pop %v1465
      %v1582 = vtanh.pop %v1516
      %v1583 = vtanh.pop %v1518
      %v1584 = vld [vmem:[%s3] sm:$0xf]
      %v1585 = vld [vmem:[%s3 + $0x4] sm:$0xf]
      %v1586 = vld [vmem:[%s3 + $0x8] sm:$0xf]
      %v1587 = vld [vmem:[%s3 + $0xc] sm:$0xf]
      %v1588 = vpack.c.bf16 %v1536, %v1520
      %v1589 = vpack.c.bf16 %v1537, %v1521
      %v1590 = vpack.c.bf16 %v1538, %v1522
      %v1591 = vpack.c.bf16 %v1539, %v1523
      %v1592 = vpack.c.bf16 %v1540, %v1524
      %v1593 = vpack.c.bf16 %v1541, %v1525
      %v1594 = vpack.c.bf16 %v1542, %v1526
      %v1595 = vpack.c.bf16 %v1543, %v1527
      %v1596 = vpack.c.bf16 %v1544, %v1528
      %v1597 = vpack.c.bf16 %v1545, %v1529
      %v1598 = vpack.c.bf16 %v1546, %v1530
      %v1599 = vpack.c.bf16 %v1547, %v1531
      %v1600 = vpack.c.bf16 %v1548, %v1532
      %v1601 = vpack.c.bf16 %v1549, %v1533
      %v1602 = vpack.c.bf16 %v1550, %v1534
      %v1603 = vpack.c.bf16 %v1551, %v1535
      %v1604 = vpack.c.bf16 %v1568, %v1552
      %v1605 = vpack.c.bf16 %v1569, %v1553
      %v1606 = vpack.c.bf16 %v1570, %v1554
      %v1607 = vpack.c.bf16 %v1571, %v1555
      %v1608 = vpack.c.bf16 %v1572, %v1556
      %v1609 = vpack.c.bf16 %v1573, %v1557
      %v1610 = vpack.c.bf16 %v1574, %v1558
      %v1611 = vpack.c.bf16 %v1575, %v1559
      %v1612 = vpack.c.bf16 %v1576, %v1560
      %v1613 = vpack.c.bf16 %v1577, %v1561
      %v1614 = vpack.c.bf16 %v1578, %v1562
      %v1615 = vpack.c.bf16 %v1579, %v1563
      %v1616 = vpack.c.bf16 %v1580, %v1564
      %v1617 = vpack.c.bf16 %v1581, %v1565
      %v1618 = vpack.c.bf16 %v1582, %v1566
      %v1619 = vpack.c.bf16 %v1583, %v1567
      %v1620 = vld [vmem:[%s4] sm:$0xff]
      %v1621 = vld [vmem:[%s4 + $0x8] sm:$0xff]
      %v1622 = vld [vmem:[%s4 + $0x10] sm:$0xff]
      %v1623 = vld [vmem:[%s4 + $0x18] sm:$0xff]
      %1625 = vset.pattern.permute.xlu0 0
      %1626 = vperm.xlu0 %1625, %v1620
      %v1627 = vpop.permute.xlu0 %1626
      %1630 = vset.pattern.permute.xlu0 0
      %1631 = vperm.xlu0 %1630, %v1621
      %v1632 = vpop.permute.xlu0 %1631
      %1635 = vset.pattern.permute.xlu0 0
      %1636 = vperm.xlu0 %1635, %v1622
      %v1637 = vpop.permute.xlu0 %1636
      %1640 = vset.pattern.permute.xlu0 0
      %1641 = vperm.xlu0 %1640, %v1623
      %v1642 = vpop.permute.xlu0 %1641
      %v1648 = vunpack.c.l.b16 %v1584
      %v1649 = vunpack.c.l.b16 %v1585
      %v1650 = vunpack.c.l.b16 %v1586
      %v1651 = vunpack.c.l.b16 %v1587
      %v1652 = vpack.c.b16 %v1649, %v1648
      %v1653 = vpack.c.b16 %v1651, %v1650
      %vm1654 = vcmask 261120
      %v1656 = vsel %vm1654, %v1652, 0
      %v1659 = vsel %vm1654, %v1653, 0
      %1661 = vmatprep.subr.bf16.mxu0 %v1589
      %1662 = vmatpush1.bf16.msra.mxu0 %v1588
      %1663 = vmatprep.subr.bf16.mxu0 %v1605
      %1664 = vmatpush1.bf16.msra.mxu0 %v1604
      %1665 = vmatprep.subr.bf16.mxu0 0
      %1666 = vmatpush1.bf16.msra.mxu0 0
      %1667 = vmatprep.subr.bf16.mxu0 0
      %1668 = vmatpush1.bf16.msra.mxu0 0
      %1669 = vmatprep.subr.bf16.mxu0 0
      %1670 = vmatpush1.bf16.msra.mxu0 0
      %1671 = vmatprep.subr.bf16.mxu0 0
      %1672 = vmatpush1.bf16.msra.mxu0 0
      %1673 = vmatprep.subr.bf16.mxu0 0
      %1674 = vmatpush1.bf16.msra.mxu0 0
      %1675 = vmatprep.subr.bf16.mxu0 0
      %1676 = vmatpush1.bf16.msra.mxu0 0
      %1677 = vmatprep.subr.bf16.mxu0 0
      %1678 = vmatpush1.bf16.msra.mxu0 0
      %1679 = vmatprep.subr.bf16.mxu0 0
      %1680 = vmatpush1.bf16.msra.mxu0 0
      %1681 = vmatprep.subr.bf16.mxu0 0
      %1682 = vmatpush1.bf16.msra.mxu0 0
      %1683 = vmatprep.subr.bf16.mxu0 0
      %1684 = vmatpush1.bf16.msra.mxu0 0
      %1685 = vmatprep.subr.bf16.mxu0 0
      %1686 = vmatpush1.bf16.msra.mxu0 0
      %1687 = vmatprep.subr.bf16.mxu0 0
      %1688 = vmatpush1.bf16.msra.mxu0 0
      %1689 = vmatprep.subr.bf16.mxu0 0
      %1690 = vmatpush1.bf16.msra.mxu0 0
      %1691 = vmatprep.subr.bf16.mxu0 0
      %1692 = vmatpush1.bf16.msra.mxu0 0
      %1693 = vmatprep.mubr.bf16.mxu0 0
      %1694 = vmatmul.mubr.bf16.gmra.mrb[0].mxu0 %v1656
      %v1695 = vpop.f32.mrb[0].mxu0
      %v1696 = vadd.f32 %v1627, %v1695
      %v1697 = vpop.f32.mrb[0].mxu0
      %v1698 = vadd.f32 %v1627, %v1697
      %v1699 = vpop.f32.mrb[0].mxu0
      %v1700 = vadd.f32 %v1632, %v1699
      %v1701 = vpop.f32.mrb[0].mxu0
      %v1702 = vadd.f32 %v1632, %v1701
      %1703 = vmatprep.mubr.bf16.mxu0 0
      %1704 = vmatmul.mubr.bf16.gmra.mrb[0].mxu0 %v1659
      %v1705 = vpop.f32.mrb[0].mxu0
      %v1706 = vadd.f32 %v1637, %v1705
      %v1707 = vpop.f32.mrb[0].mxu0
      %v1708 = vadd.f32 %v1637, %v1707
      %v1709 = vpop.f32.mrb[0].mxu0
      %v1710 = vadd.f32 %v1642, %v1709
      %v1711 = vpop.f32.mrb[0].mxu0
      %v1712 = vadd.f32 %v1642, %v1711
      %1713 = vdwg.mxu0
      %1714 = vmatprep.subr.bf16.mxu0 %v1591
      %1715 = vmatpush1.bf16.msra.mxu0 %v1590
      %1716 = vmatprep.subr.bf16.mxu0 %v1607
      %1717 = vmatpush1.bf16.msra.mxu0 %v1606
      %1718 = vmatprep.subr.bf16.mxu0 0
      %1719 = vmatpush1.bf16.msra.mxu0 0
      %1720 = vmatprep.subr.bf16.mxu0 0
      %1721 = vmatpush1.bf16.msra.mxu0 0
      %1722 = vmatprep.subr.bf16.mxu0 0
      %1723 = vmatpush1.bf16.msra.mxu0 0
      %1724 = vmatprep.subr.bf16.mxu0 0
      %1725 = vmatpush1.bf16.msra.mxu0 0
      %1726 = vmatprep.subr.bf16.mxu0 0
      %1727 = vmatpush1.bf16.msra.mxu0 0
      %1728 = vmatprep.subr.bf16.mxu0 0
      %1729 = vmatpush1.bf16.msra.mxu0 0
      %1730 = vmatprep.subr.bf16.mxu0 0
      %1731 = vmatpush1.bf16.msra.mxu0 0
      %1732 = vmatprep.subr.bf16.mxu0 0
      %1733 = vmatpush1.bf16.msra.mxu0 0
      %1734 = vmatprep.subr.bf16.mxu0 0
      %1735 = vmatpush1.bf16.msra.mxu0 0
      %1736 = vmatprep.subr.bf16.mxu0 0
      %1737 = vmatpush1.bf16.msra.mxu0 0
      %1738 = vmatprep.subr.bf16.mxu0 0
      %1739 = vmatpush1.bf16.msra.mxu0 0
      %1740 = vmatprep.subr.bf16.mxu0 0
      %1741 = vmatpush1.bf16.msra.mxu0 0
      %1742 = vmatprep.subr.bf16.mxu0 0
      %1743 = vmatpush1.bf16.msra.mxu0 0
      %1744 = vmatprep.subr.bf16.mxu0 0
      %1745 = vmatpush1.bf16.msra.mxu0 0
      %1746 = vmatprep.mubr.bf16.mxu0 0
      %1747 = vmatmul.mubr.bf16.gmra.mrb[0].mxu0 %v1656
      %v1748 = vpop.f32.mrb[0].mxu0
      %v1749 = vadd.f32 %v1627, %v1748
      %v1750 = vpop.f32.mrb[0].mxu0
      %v1751 = vadd.f32 %v1627, %v1750
      %v1752 = vpop.f32.mrb[0].mxu0
      %v1753 = vadd.f32 %v1632, %v1752
      %v1754 = vpop.f32.mrb[0].mxu0
      %v1755 = vadd.f32 %v1632, %v1754
      %1756 = vmatprep.mubr.bf16.mxu0 0
      %1757 = vmatmul.mubr.bf16.gmra.mrb[0].mxu0 %v1659
      %v1758 = vpop.f32.mrb[0].mxu0
      %v1759 = vadd.f32 %v1637, %v1758
      %v1760 = vpop.f32.mrb[0].mxu0
      %v1761 = vadd.f32 %v1637, %v1760
      %v1762 = vpop.f32.mrb[0].mxu0
      %v1763 = vadd.f32 %v1642, %v1762
      %v1764 = vpop.f32.mrb[0].mxu0
      %v1765 = vadd.f32 %v1642, %v1764
      %1766 = vdwg.mxu0
      %1767 = vmatprep.subr.bf16.mxu0 %v1593
      %1768 = vmatpush1.bf16.msra.mxu0 %v1592
      %1769 = vmatprep.subr.bf16.mxu0 %v1609
      %1770 = vmatpush1.bf16.msra.mxu0 %v1608
      %1771 = vmatprep.subr.bf16.mxu0 0
      %1772 = vmatpush1.bf16.msra.mxu0 0
      %1773 = vmatprep.subr.bf16.mxu0 0
      %1774 = vmatpush1.bf16.msra.mxu0 0
      %1775 = vmatprep.subr.bf16.mxu0 0
      %1776 = vmatpush1.bf16.msra.mxu0 0
      %1777 = vmatprep.subr.bf16.mxu0 0
      %1778 = vmatpush1.bf16.msra.mxu0 0
      %1779 = vmatprep.subr.bf16.mxu0 0
      %1780 = vmatpush1.bf16.msra.mxu0 0
      %1781 = vmatprep.subr.bf16.mxu0 0
      %1782 = vmatpush1.bf16.msra.mxu0 0
      %1783 = vmatprep.subr.bf16.mxu0 0
      %1784 = vmatpush1.bf16.msra.mxu0 0
      %1785 = vmatprep.subr.bf16.mxu0 0
      %1786 = vmatpush1.bf16.msra.mxu0 0
      %1787 = vmatprep.subr.bf16.mxu0 0
      %1788 = vmatpush1.bf16.msra.mxu0 0
      %1789 = vmatprep.subr.bf16.mxu0 0
      %1790 = vmatpush1.bf16.msra.mxu0 0
      %1791 = vmatprep.subr.bf16.mxu0 0
      %1792 = vmatpush1.bf16.msra.mxu0 0
      %1793 = vmatprep.subr.bf16.mxu0 0
      %1794 = vmatpush1.bf16.msra.mxu0 0
      %1795 = vmatprep.subr.bf16.mxu0 0
      %1796 = vmatpush1.bf16.msra.mxu0 0
      %1797 = vmatprep.subr.bf16.mxu0 0
      %1798 = vmatpush1.bf16.msra.mxu0 0
      %1799 = vmatprep.mubr.bf16.mxu0 0
      %1800 = vmatmul.mubr.bf16.gmra.mrb[0].mxu0 %v1656
      %v1801 = vpop.f32.mrb[0].mxu0
      %v1802 = vadd.f32 %v1627, %v1801
      %v1803 = vpop.f32.mrb[0].mxu0
      %v1804 = vadd.f32 %v1627, %v1803
      %v1805 = vpop.f32.mrb[0].mxu0
      %v1806 = vadd.f32 %v1632, %v1805
      %v1807 = vpop.f32.mrb[0].mxu0
      %v1808 = vadd.f32 %v1632, %v1807
      %1809 = vmatprep.mubr.bf16.mxu0 0
      %1810 = vmatmul.mubr.bf16.gmra.mrb[0].mxu0 %v1659
      %v1811 = vpop.f32.mrb[0].mxu0
      %v1812 = vadd.f32 %v1637, %v1811
      %v1813 = vpop.f32.mrb[0].mxu0
      %v1814 = vadd.f32 %v1637, %v1813
      %v1815 = vpop.f32.mrb[0].mxu0
      %v1816 = vadd.f32 %v1642, %v1815
      %v1817 = vpop.f32.mrb[0].mxu0
      %v1818 = vadd.f32 %v1642, %v1817
      %1819 = vdwg.mxu0
      %1820 = vmatprep.subr.bf16.mxu0 %v1595
      %1821 = vmatpush1.bf16.msra.mxu0 %v1594
      %1822 = vmatprep.subr.bf16.mxu0 %v1611
      %1823 = vmatpush1.bf16.msra.mxu0 %v1610
      %1824 = vmatprep.subr.bf16.mxu0 0
      %1825 = vmatpush1.bf16.msra.mxu0 0
      %1826 = vmatprep.subr.bf16.mxu0 0
      %1827 = vmatpush1.bf16.msra.mxu0 0
      %1828 = vmatprep.subr.bf16.mxu0 0
      %1829 = vmatpush1.bf16.msra.mxu0 0
      %1830 = vmatprep.subr.bf16.mxu0 0
      %1831 = vmatpush1.bf16.msra.mxu0 0
      %1832 = vmatprep.subr.bf16.mxu0 0
      %1833 = vmatpush1.bf16.msra.mxu0 0
      %1834 = vmatprep.subr.bf16.mxu0 0
      %1835 = vmatpush1.bf16.msra.mxu0 0
      %1836 = vmatprep.subr.bf16.mxu0 0
      %1837 = vmatpush1.bf16.msra.mxu0 0
      %1838 = vmatprep.subr.bf16.mxu0 0
      %1839 = vmatpush1.bf16.msra.mxu0 0
      %1840 = vmatprep.subr.bf16.mxu0 0
      %1841 = vmatpush1.bf16.msra.mxu0 0
      %1842 = vmatprep.subr.bf16.mxu0 0
      %1843 = vmatpush1.bf16.msra.mxu0 0
      %1844 = vmatprep.subr.bf16.mxu0 0
      %1845 = vmatpush1.bf16.msra.mxu0 0
      %1846 = vmatprep.subr.bf16.mxu0 0
      %1847 = vmatpush1.bf16.msra.mxu0 0
      %1848 = vmatprep.subr.bf16.mxu0 0
      %1849 = vmatpush1.bf16.msra.mxu0 0
      %1850 = vmatprep.subr.bf16.mxu0 0
      %1851 = vmatpush1.bf16.msra.mxu0 0
      %1852 = vmatprep.mubr.bf16.mxu0 0
      %1853 = vmatmul.mubr.bf16.gmra.mrb[0].mxu0 %v1656
      %v1854 = vpop.f32.mrb[0].mxu0
      %v1855 = vadd.f32 %v1627, %v1854
      %v1856 = vpop.f32.mrb[0].mxu0
      %v1857 = vadd.f32 %v1627, %v1856
      %v1858 = vpop.f32.mrb[0].mxu0
      %v1859 = vadd.f32 %v1632, %v1858
      %v1860 = vpop.f32.mrb[0].mxu0
      %v1861 = vadd.f32 %v1632, %v1860
      %1862 = vmatprep.mubr.bf16.mxu0 0
      %1863 = vmatmul.mubr.bf16.gmra.mrb[0].mxu0 %v1659
      %v1864 = vpop.f32.mrb[0].mxu0
      %v1865 = vadd.f32 %v1637, %v1864
      %v1866 = vpop.f32.mrb[0].mxu0
      %v1867 = vadd.f32 %v1637, %v1866
      %v1868 = vpop.f32.mrb[0].mxu0
      %v1869 = vadd.f32 %v1642, %v1868
      %v1870 = vpop.f32.mrb[0].mxu0
      %v1871 = vadd.f32 %v1642, %v1870
      %1872 = vdwg.mxu0
      %1873 = vmatprep.subr.bf16.mxu0 %v1597
      %1874 = vmatpush1.bf16.msra.mxu0 %v1596
      %1875 = vmatprep.subr.bf16.mxu0 %v1613
      %1876 = vmatpush1.bf16.msra.mxu0 %v1612
      %1877 = vmatprep.subr.bf16.mxu0 0
      %1878 = vmatpush1.bf16.msra.mxu0 0
      %1879 = vmatprep.subr.bf16.mxu0 0
      %1880 = vmatpush1.bf16.msra.mxu0 0
      %1881 = vmatprep.subr.bf16.mxu0 0
      %1882 = vmatpush1.bf16.msra.mxu0 0
      %1883 = vmatprep.subr.bf16.mxu0 0
      %1884 = vmatpush1.bf16.msra.mxu0 0
      %1885 = vmatprep.subr.bf16.mxu0 0
      %1886 = vmatpush1.bf16.msra.mxu0 0
      %1887 = vmatprep.subr.bf16.mxu0 0
      %1888 = vmatpush1.bf16.msra.mxu0 0
      %1889 = vmatprep.subr.bf16.mxu0 0
      %1890 = vmatpush1.bf16.msra.mxu0 0
      %1891 = vmatprep.subr.bf16.mxu0 0
      %1892 = vmatpush1.bf16.msra.mxu0 0
      %1893 = vmatprep.subr.bf16.mxu0 0
      %1894 = vmatpush1.bf16.msra.mxu0 0
      %1895 = vmatprep.subr.bf16.mxu0 0
      %1896 = vmatpush1.bf16.msra.mxu0 0
      %1897 = vmatprep.subr.bf16.mxu0 0
      %1898 = vmatpush1.bf16.msra.mxu0 0
      %1899 = vmatprep.subr.bf16.mxu0 0
      %1900 = vmatpush1.bf16.msra.mxu0 0
      %1901 = vmatprep.subr.bf16.mxu0 0
      %1902 = vmatpush1.bf16.msra.mxu0 0
      %1903 = vmatprep.subr.bf16.mxu0 0
      %1904 = vmatpush1.bf16.msra.mxu0 0
      %1905 = vmatprep.mubr.bf16.mxu0 0
      %1906 = vmatmul.mubr.bf16.gmra.mrb[0].mxu0 %v1656
      %v1907 = vpop.f32.mrb[0].mxu0
      %v1908 = vadd.f32 %v1627, %v1907
      %v1909 = vpop.f32.mrb[0].mxu0
      %v1910 = vadd.f32 %v1627, %v1909
      %v1911 = vpop.f32.mrb[0].mxu0
      %v1912 = vadd.f32 %v1632, %v1911
      %v1913 = vpop.f32.mrb[0].mxu0
      %v1914 = vadd.f32 %v1632, %v1913
      %1915 = vmatprep.mubr.bf16.mxu0 0
      %1916 = vmatmul.mubr.bf16.gmra.mrb[0].mxu0 %v1659
      %v1917 = vpop.f32.mrb[0].mxu0
      %v1918 = vadd.f32 %v1637, %v1917
      %v1919 = vpop.f32.mrb[0].mxu0
      %v1920 = vadd.f32 %v1637, %v1919
      %v1921 = vpop.f32.mrb[0].mxu0
      %v1922 = vadd.f32 %v1642, %v1921
      %v1923 = vpop.f32.mrb[0].mxu0
      %v1924 = vadd.f32 %v1642, %v1923
      %1925 = vdwg.mxu0
      %1926 = vmatprep.subr.bf16.mxu0 %v1599
      %1927 = vmatpush1.bf16.msra.mxu0 %v1598
      %1928 = vmatprep.subr.bf16.mxu0 %v1615
      %1929 = vmatpush1.bf16.msra.mxu0 %v1614
      %1930 = vmatprep.subr.bf16.mxu0 0
      %1931 = vmatpush1.bf16.msra.mxu0 0
      %1932 = vmatprep.subr.bf16.mxu0 0
      %1933 = vmatpush1.bf16.msra.mxu0 0
      %1934 = vmatprep.subr.bf16.mxu0 0
      %1935 = vmatpush1.bf16.msra.mxu0 0
      %1936 = vmatprep.subr.bf16.mxu0 0
      %1937 = vmatpush1.bf16.msra.mxu0 0
      %1938 = vmatprep.subr.bf16.mxu0 0
      %1939 = vmatpush1.bf16.msra.mxu0 0
      %1940 = vmatprep.subr.bf16.mxu0 0
      %1941 = vmatpush1.bf16.msra.mxu0 0
      %1942 = vmatprep.subr.bf16.mxu0 0
      %1943 = vmatpush1.bf16.msra.mxu0 0
      %1944 = vmatprep.subr.bf16.mxu0 0
      %1945 = vmatpush1.bf16.msra.mxu0 0
      %1946 = vmatprep.subr.bf16.mxu0 0
      %1947 = vmatpush1.bf16.msra.mxu0 0
      %1948 = vmatprep.subr.bf16.mxu0 0
      %1949 = vmatpush1.bf16.msra.mxu0 0
      %1950 = vmatprep.subr.bf16.mxu0 0
      %1951 = vmatpush1.bf16.msra.mxu0 0
      %1952 = vmatprep.subr.bf16.mxu0 0
      %1953 = vmatpush1.bf16.msra.mxu0 0
      %1954 = vmatprep.subr.bf16.mxu0 0
      %1955 = vmatpush1.bf16.msra.mxu0 0
      %1956 = vmatprep.subr.bf16.mxu0 0
      %1957 = vmatpush1.bf16.msra.mxu0 0
      %1958 = vmatprep.mubr.bf16.mxu0 0
      %1959 = vmatmul.mubr.bf16.gmra.mrb[0].mxu0 %v1656
      %v1960 = vpop.f32.mrb[0].mxu0
      %v1961 = vadd.f32 %v1627, %v1960
      %v1962 = vpop.f32.mrb[0].mxu0
      %v1963 = vadd.f32 %v1627, %v1962
      %v1964 = vpop.f32.mrb[0].mxu0
      %v1965 = vadd.f32 %v1632, %v1964
      %v1966 = vpop.f32.mrb[0].mxu0
      %v1967 = vadd.f32 %v1632, %v1966
      %1968 = vmatprep.mubr.bf16.mxu0 0
      %1969 = vmatmul.mubr.bf16.gmra.mrb[0].mxu0 %v1659
      %v1970 = vpop.f32.mrb[0].mxu0
      %v1971 = vadd.f32 %v1637, %v1970
      %v1972 = vpop.f32.mrb[0].mxu0
      %v1973 = vadd.f32 %v1637, %v1972
      %v1974 = vpop.f32.mrb[0].mxu0
      %v1975 = vadd.f32 %v1642, %v1974
      %v1976 = vpop.f32.mrb[0].mxu0
      %v1977 = vadd.f32 %v1642, %v1976
      %1978 = vdwg.mxu0
      %1979 = vmatprep.subr.bf16.mxu0 %v1601
      %1980 = vmatpush1.bf16.msra.mxu0 %v1600
      %1981 = vmatprep.subr.bf16.mxu0 %v1617
      %1982 = vmatpush1.bf16.msra.mxu0 %v1616
      %1983 = vmatprep.subr.bf16.mxu0 0
      %1984 = vmatpush1.bf16.msra.mxu0 0
      %1985 = vmatprep.subr.bf16.mxu0 0
      %1986 = vmatpush1.bf16.msra.mxu0 0
      %1987 = vmatprep.subr.bf16.mxu0 0
      %1988 = vmatpush1.bf16.msra.mxu0 0
      %1989 = vmatprep.subr.bf16.mxu0 0
      %1990 = vmatpush1.bf16.msra.mxu0 0
      %1991 = vmatprep.subr.bf16.mxu0 0
      %1992 = vmatpush1.bf16.msra.mxu0 0
      %1993 = vmatprep.subr.bf16.mxu0 0
      %1994 = vmatpush1.bf16.msra.mxu0 0
      %1995 = vmatprep.subr.bf16.mxu0 0
      %1996 = vmatpush1.bf16.msra.mxu0 0
      %1997 = vmatprep.subr.bf16.mxu0 0
      %1998 = vmatpush1.bf16.msra.mxu0 0
      %1999 = vmatprep.subr.bf16.mxu0 0
      %2000 = vmatpush1.bf16.msra.mxu0 0
      %2001 = vmatprep.subr.bf16.mxu0 0
      %2002 = vmatpush1.bf16.msra.mxu0 0
      %2003 = vmatprep.subr.bf16.mxu0 0
      %2004 = vmatpush1.bf16.msra.mxu0 0
      %2005 = vmatprep.subr.bf16.mxu0 0
      %2006 = vmatpush1.bf16.msra.mxu0 0
      %2007 = vmatprep.subr.bf16.mxu0 0
      %2008 = vmatpush1.bf16.msra.mxu0 0
      %2009 = vmatprep.subr.bf16.mxu0 0
      %2010 = vmatpush1.bf16.msra.mxu0 0
      %2011 = vmatprep.mubr.bf16.mxu0 0
      %2012 = vmatmul.mubr.bf16.gmra.mrb[0].mxu0 %v1656
      %v2013 = vpop.f32.mrb[0].mxu0
      %v2014 = vadd.f32 %v1627, %v2013
      %v2015 = vpop.f32.mrb[0].mxu0
      %v2016 = vadd.f32 %v1627, %v2015
      %v2017 = vpop.f32.mrb[0].mxu0
      %v2018 = vadd.f32 %v1632, %v2017
      %v2019 = vpop.f32.mrb[0].mxu0
      %v2020 = vadd.f32 %v1632, %v2019
      %2021 = vmatprep.mubr.bf16.mxu0 0
      %2022 = vmatmul.mubr.bf16.gmra.mrb[0].mxu0 %v1659
      %v2023 = vpop.f32.mrb[0].mxu0
      %v2024 = vadd.f32 %v1637, %v2023
      %v2025 = vpop.f32.mrb[0].mxu0
      %v2026 = vadd.f32 %v1637, %v2025
      %v2027 = vpop.f32.mrb[0].mxu0
      %v2028 = vadd.f32 %v1642, %v2027
      %v2029 = vpop.f32.mrb[0].mxu0
      %v2030 = vadd.f32 %v1642, %v2029
      %2031 = vdwg.mxu0
      %2032 = vmatprep.subr.bf16.mxu0 %v1603
      %2033 = vmatpush1.bf16.msra.mxu0 %v1602
      %2034 = vmatprep.subr.bf16.mxu0 %v1619
      %2035 = vmatpush1.bf16.msra.mxu0 %v1618
      %2036 = vmatprep.subr.bf16.mxu0 0
      %2037 = vmatpush1.bf16.msra.mxu0 0
      %2038 = vmatprep.subr.bf16.mxu0 0
      %2039 = vmatpush1.bf16.msra.mxu0 0
      %2040 = vmatprep.subr.bf16.mxu0 0
      %2041 = vmatpush1.bf16.msra.mxu0 0
      %2042 = vmatprep.subr.bf16.mxu0 0
      %2043 = vmatpush1.bf16.msra.mxu0 0
      %2044 = vmatprep.subr.bf16.mxu0 0
      %2045 = vmatpush1.bf16.msra.mxu0 0
      %2046 = vmatprep.subr.bf16.mxu0 0
      %2047 = vmatpush1.bf16.msra.mxu0 0
      %2048 = vmatprep.subr.bf16.mxu0 0
      %2049 = vmatpush1.bf16.msra.mxu0 0
      %2050 = vmatprep.subr.bf16.mxu0 0
      %2051 = vmatpush1.bf16.msra.mxu0 0
      %2052 = vmatprep.subr.bf16.mxu0 0
      %2053 = vmatpush1.bf16.msra.mxu0 0
      %2054 = vmatprep.subr.bf16.mxu0 0
      %2055 = vmatpush1.bf16.msra.mxu0 0
      %2056 = vmatprep.subr.bf16.mxu0 0
      %2057 = vmatpush1.bf16.msra.mxu0 0
      %2058 = vmatprep.subr.bf16.mxu0 0
      %2059 = vmatpush1.bf16.msra.mxu0 0
      %2060 = vmatprep.subr.bf16.mxu0 0
      %2061 = vmatpush1.bf16.msra.mxu0 0
      %2062 = vmatprep.subr.bf16.mxu0 0
      %2063 = vmatpush1.bf16.msra.mxu0 0
      %2064 = vmatprep.mubr.bf16.mxu0 0
      %2065 = vmatmul.mubr.bf16.gmra.mrb[0].mxu0 %v1656
      %v2066 = vpop.f32.mrb[0].mxu0
      %v2067 = vadd.f32 %v1627, %v2066
      %v2068 = vpop.f32.mrb[0].mxu0
      %v2069 = vadd.f32 %v1627, %v2068
      %v2070 = vpop.f32.mrb[0].mxu0
      %v2071 = vadd.f32 %v1632, %v2070
      %v2072 = vpop.f32.mrb[0].mxu0
      %v2073 = vadd.f32 %v1632, %v2072
      %2074 = vmatprep.mubr.bf16.mxu0 0
      %2075 = vmatmul.mubr.bf16.gmra.mrb[0].mxu0 %v1659
      %v2076 = vpop.f32.mrb[0].mxu0
      %v2077 = vadd.f32 %v1637, %v2076
      %v2078 = vpop.f32.mrb[0].mxu0
      %v2079 = vadd.f32 %v1637, %v2078
      %v2080 = vpop.f32.mrb[0].mxu0
      %v2081 = vadd.f32 %v1642, %v2080
      %v2082 = vpop.f32.mrb[0].mxu0
      %v2083 = vadd.f32 %v1642, %v2082
      %2084 = vdwg.mxu0
      %v2085 = vtanh.pop %v1696
      %v2086 = vtanh.pop %v1698
      %v2087 = vtanh.pop %v1749
      %v2088 = vtanh.pop %v1751
      %v2089 = vtanh.pop %v1802
      %v2090 = vtanh.pop %v1804
      %v2091 = vtanh.pop %v1855
      %v2092 = vtanh.pop %v1857
      %v2093 = vtanh.pop %v1908
      %v2094 = vtanh.pop %v1910
      %v2095 = vtanh.pop %v1961
      %v2096 = vtanh.pop %v1963
      %v2097 = vtanh.pop %v2014
      %v2098 = vtanh.pop %v2016
      %v2099 = vtanh.pop %v2067
      %v2100 = vtanh.pop %v2069
      %v2101 = vtanh.pop %v1700
      %v2102 = vtanh.pop %v1702
      %v2103 = vtanh.pop %v1753
      %v2104 = vtanh.pop %v1755
      %v2105 = vtanh.pop %v1806
      %v2106 = vtanh.pop %v1808
      %v2107 = vtanh.pop %v1859
      %v2108 = vtanh.pop %v1861
      %v2109 = vtanh.pop %v1912
      %v2110 = vtanh.pop %v1914
      %v2111 = vtanh.pop %v1965
      %v2112 = vtanh.pop %v1967
      %v2113 = vtanh.pop %v2018
      %v2114 = vtanh.pop %v2020
      %v2115 = vtanh.pop %v2071
      %v2116 = vtanh.pop %v2073
      %v2117 = vtanh.pop %v1706
      %v2118 = vtanh.pop %v1708
      %v2119 = vtanh.pop %v1759
      %v2120 = vtanh.pop %v1761
      %v2121 = vtanh.pop %v1812
      %v2122 = vtanh.pop %v1814
      %v2123 = vtanh.pop %v1865
      %v2124 = vtanh.pop %v1867
      %v2125 = vtanh.pop %v1918
      %v2126 = vtanh.pop %v1920
      %v2127 = vtanh.pop %v1971
      %v2128 = vtanh.pop %v1973
      %v2129 = vtanh.pop %v2024
      %v2130 = vtanh.pop %v2026
      %v2131 = vtanh.pop %v2077
      %v2132 = vtanh.pop %v2079
      %v2133 = vtanh.pop %v1710
      %v2134 = vtanh.pop %v1712
      %v2135 = vtanh.pop %v1763
      %v2136 = vtanh.pop %v1765
      %v2137 = vtanh.pop %v1816
      %v2138 = vtanh.pop %v1818
      %v2139 = vtanh.pop %v1869
      %v2140 = vtanh.pop %v1871
      %v2141 = vtanh.pop %v1922
      %v2142 = vtanh.pop %v1924
      %v2143 = vtanh.pop %v1975
      %v2144 = vtanh.pop %v1977
      %v2145 = vtanh.pop %v2028
      %v2146 = vtanh.pop %v2030
      %v2147 = vtanh.pop %v2081
      %v2148 = vtanh.pop %v2083
      %v2149 = vpack.c.bf16 %v2101, %v2085
      %v2150 = vpack.c.bf16 %v2102, %v2086
      %v2151 = vpack.c.bf16 %v2103, %v2087
      %v2152 = vpack.c.bf16 %v2104, %v2088
      %v2153 = vpack.c.bf16 %v2105, %v2089
      %v2154 = vpack.c.bf16 %v2106, %v2090
      %v2155 = vpack.c.bf16 %v2107, %v2091
      %v2156 = vpack.c.bf16 %v2108, %v2092
      %v2157 = vpack.c.bf16 %v2109, %v2093
      %v2158 = vpack.c.bf16 %v2110, %v2094
      %v2159 = vpack.c.bf16 %v2111, %v2095
      %v2160 = vpack.c.bf16 %v2112, %v2096
      %v2161 = vpack.c.bf16 %v2113, %v2097
      %v2162 = vpack.c.bf16 %v2114, %v2098
      %v2163 = vpack.c.bf16 %v2115, %v2099
      %v2164 = vpack.c.bf16 %v2116, %v2100
      %v2165 = vpack.c.bf16 %v2133, %v2117
      %v2166 = vpack.c.bf16 %v2134, %v2118
      %v2167 = vpack.c.bf16 %v2135, %v2119
      %v2168 = vpack.c.bf16 %v2136, %v2120
      %v2169 = vpack.c.bf16 %v2137, %v2121
      %v2170 = vpack.c.bf16 %v2138, %v2122
      %v2171 = vpack.c.bf16 %v2139, %v2123
      %v2172 = vpack.c.bf16 %v2140, %v2124
      %v2173 = vpack.c.bf16 %v2141, %v2125
      %v2174 = vpack.c.bf16 %v2142, %v2126
      %v2175 = vpack.c.bf16 %v2143, %v2127
      %v2176 = vpack.c.bf16 %v2144, %v2128
      %v2177 = vpack.c.bf16 %v2145, %v2129
      %v2178 = vpack.c.bf16 %v2146, %v2130
      %v2179 = vpack.c.bf16 %v2147, %v2131
      %v2180 = vpack.c.bf16 %v2148, %v2132
      %v2181 = vld [vmem:[%s5] sm:$0x3]
      %v2182 = vld [vmem:[%s6] sm:$0x1]
      %v2184 = vlaneseq
      %v2185 = vshrl.u32 %v2184, 7
      %v2186 = vsub.s32 0, %v2185
      %v2187 = vrot.slane %v2182, %v2186
      %2189 = vxpose.xlu0.c.b16.start [1/8] %v2149, 128
      %2190 = vxpose.xlu0.c.b16.cont [2/8] %v2165, 128
      %2191 = vxpose.xlu0.c.b16.cont [3/8] 0, 128
      %2192 = vxpose.xlu0.c.b16.cont [4/8] 0, 128
      %2193 = vxpose.xlu0.c.b16.cont [5/8] 0, 128
      %2194 = vxpose.xlu0.c.b16.cont [6/8] 0, 128
      %2195 = vxpose.xlu0.c.b16.cont [7/8] 0, 128
      %2196 = vxpose.xlu0.c.b16.end [8/8] 0, 128
      %v2197 = vpop.trf.xlu0
      %v2198 = vpop.trf.xlu0
      %v2199 = vpop.trf.xlu0
      %v2200 = vpop.trf.xlu0
      %v2201 = vpop.trf.xlu0
      %v2202 = vpop.trf.xlu0
      %v2203 = vpop.trf.xlu0
      %v2204 = vpop.trf.xlu0
      %2205 = vxpose.xlu0.c.b16.start [1/8] %v2150, 128
      %2206 = vxpose.xlu0.c.b16.cont [2/8] %v2166, 128
      %2207 = vxpose.xlu0.c.b16.cont [3/8] 0, 128
      %2208 = vxpose.xlu0.c.b16.cont [4/8] 0, 128
      %2209 = vxpose.xlu0.c.b16.cont [5/8] 0, 128
      %2210 = vxpose.xlu0.c.b16.cont [6/8] 0, 128
      %2211 = vxpose.xlu0.c.b16.cont [7/8] 0, 128
      %2212 = vxpose.xlu0.c.b16.end [8/8] 0, 128
      %v2213 = vpop.trf.xlu0
      %v2214 = vpop.trf.xlu0
      %v2215 = vpop.trf.xlu0
      %v2216 = vpop.trf.xlu0
      %v2217 = vpop.trf.xlu0
      %v2218 = vpop.trf.xlu0
      %v2219 = vpop.trf.xlu0
      %v2220 = vpop.trf.xlu0
      %2221 = vxpose.xlu0.c.b16.start [1/8] %v2151, 128
      %2222 = vxpose.xlu0.c.b16.cont [2/8] %v2167, 128
      %2223 = vxpose.xlu0.c.b16.cont [3/8] 0, 128
      %2224 = vxpose.xlu0.c.b16.cont [4/8] 0, 128
      %2225 = vxpose.xlu0.c.b16.cont [5/8] 0, 128
      %2226 = vxpose.xlu0.c.b16.cont [6/8] 0, 128
      %2227 = vxpose.xlu0.c.b16.cont [7/8] 0, 128
      %2228 = vxpose.xlu0.c.b16.end [8/8] 0, 128
      %v2229 = vpop.trf.xlu0
      %v2230 = vpop.trf.xlu0
      %v2231 = vpop.trf.xlu0
      %v2232 = vpop.trf.xlu0
      %v2233 = vpop.trf.xlu0
      %v2234 = vpop.trf.xlu0
      %v2235 = vpop.trf.xlu0
      %v2236 = vpop.trf.xlu0
      %2237 = vxpose.xlu0.c.b16.start [1/8] %v2152, 128
      %2238 = vxpose.xlu0.c.b16.cont [2/8] %v2168, 128
      %2239 = vxpose.xlu0.c.b16.cont [3/8] 0, 128
      %2240 = vxpose.xlu0.c.b16.cont [4/8] 0, 128
      %2241 = vxpose.xlu0.c.b16.cont [5/8] 0, 128
      %2242 = vxpose.xlu0.c.b16.cont [6/8] 0, 128
      %2243 = vxpose.xlu0.c.b16.cont [7/8] 0, 128
      %2244 = vxpose.xlu0.c.b16.end [8/8] 0, 128
      %v2245 = vpop.trf.xlu0
      %v2246 = vpop.trf.xlu0
      %v2247 = vpop.trf.xlu0
      %v2248 = vpop.trf.xlu0
      %v2249 = vpop.trf.xlu0
      %v2250 = vpop.trf.xlu0
      %v2251 = vpop.trf.xlu0
      %v2252 = vpop.trf.xlu0
      %2253 = vxpose.xlu0.c.b16.start [1/8] %v2153, 128
      %2254 = vxpose.xlu0.c.b16.cont [2/8] %v2169, 128
      %2255 = vxpose.xlu0.c.b16.cont [3/8] 0, 128
      %2256 = vxpose.xlu0.c.b16.cont [4/8] 0, 128
      %2257 = vxpose.xlu0.c.b16.cont [5/8] 0, 128
      %2258 = vxpose.xlu0.c.b16.cont [6/8] 0, 128
      %2259 = vxpose.xlu0.c.b16.cont [7/8] 0, 128
      %2260 = vxpose.xlu0.c.b16.end [8/8] 0, 128
      %v2261 = vpop.trf.xlu0
      %v2262 = vpop.trf.xlu0
      %v2263 = vpop.trf.xlu0
      %v2264 = vpop.trf.xlu0
      %v2265 = vpop.trf.xlu0
      %v2266 = vpop.trf.xlu0
      %v2267 = vpop.trf.xlu0
      %v2268 = vpop.trf.xlu0
      %2269 = vxpose.xlu0.c.b16.start [1/8] %v2154, 128
      %2270 = vxpose.xlu0.c.b16.cont [2/8] %v2170, 128
      %2271 = vxpose.xlu0.c.b16.cont [3/8] 0, 128
      %2272 = vxpose.xlu0.c.b16.cont [4/8] 0, 128
      %2273 = vxpose.xlu0.c.b16.cont [5/8] 0, 128
      %2274 = vxpose.xlu0.c.b16.cont [6/8] 0, 128
      %2275 = vxpose.xlu0.c.b16.cont [7/8] 0, 128
      %2276 = vxpose.xlu0.c.b16.end [8/8] 0, 128
      %v2277 = vpop.trf.xlu0
      %v2278 = vpop.trf.xlu0
      %v2279 = vpop.trf.xlu0
      %v2280 = vpop.trf.xlu0
      %v2281 = vpop.trf.xlu0
      %v2282 = vpop.trf.xlu0
      %v2283 = vpop.trf.xlu0
      %v2284 = vpop.trf.xlu0
      %2285 = vxpose.xlu0.c.b16.start [1/8] %v2155, 128
      %2286 = vxpose.xlu0.c.b16.cont [2/8] %v2171, 128
      %2287 = vxpose.xlu0.c.b16.cont [3/8] 0, 128
      %2288 = vxpose.xlu0.c.b16.cont [4/8] 0, 128
      %2289 = vxpose.xlu0.c.b16.cont [5/8] 0, 128
      %2290 = vxpose.xlu0.c.b16.cont [6/8] 0, 128
      %2291 = vxpose.xlu0.c.b16.cont [7/8] 0, 128
      %2292 = vxpose.xlu0.c.b16.end [8/8] 0, 128
      %v2293 = vpop.trf.xlu0
      %v2294 = vpop.trf.xlu0
      %v2295 = vpop.trf.xlu0
      %v2296 = vpop.trf.xlu0
      %v2297 = vpop.trf.xlu0
      %v2298 = vpop.trf.xlu0
      %v2299 = vpop.trf.xlu0
      %v2300 = vpop.trf.xlu0
      %2301 = vxpose.xlu0.c.b16.start [1/8] %v2156, 128
      %2302 = vxpose.xlu0.c.b16.cont [2/8] %v2172, 128
      %2303 = vxpose.xlu0.c.b16.cont [3/8] 0, 128
      %2304 = vxpose.xlu0.c.b16.cont [4/8] 0, 128
      %2305 = vxpose.xlu0.c.b16.cont [5/8] 0, 128
      %2306 = vxpose.xlu0.c.b16.cont [6/8] 0, 128
      %2307 = vxpose.xlu0.c.b16.cont [7/8] 0, 128
      %2308 = vxpose.xlu0.c.b16.end [8/8] 0, 128
      %v2309 = vpop.trf.xlu0
      %v2310 = vpop.trf.xlu0
      %v2311 = vpop.trf.xlu0
      %v2312 = vpop.trf.xlu0
      %v2313 = vpop.trf.xlu0
      %v2314 = vpop.trf.xlu0
      %v2315 = vpop.trf.xlu0
      %v2316 = vpop.trf.xlu0
      %2317 = vxpose.xlu0.c.b16.start [1/8] %v2157, 128
      %2318 = vxpose.xlu0.c.b16.cont [2/8] %v2173, 128
      %2319 = vxpose.xlu0.c.b16.cont [3/8] 0, 128
      %2320 = vxpose.xlu0.c.b16.cont [4/8] 0, 128
      %2321 = vxpose.xlu0.c.b16.cont [5/8] 0, 128
      %2322 = vxpose.xlu0.c.b16.cont [6/8] 0, 128
      %2323 = vxpose.xlu0.c.b16.cont [7/8] 0, 128
      %2324 = vxpose.xlu0.c.b16.end [8/8] 0, 128
      %v2325 = vpop.trf.xlu0
      %v2326 = vpop.trf.xlu0
      %v2327 = vpop.trf.xlu0
      %v2328 = vpop.trf.xlu0
      %v2329 = vpop.trf.xlu0
      %v2330 = vpop.trf.xlu0
      %v2331 = vpop.trf.xlu0
      %v2332 = vpop.trf.xlu0
      %2333 = vxpose.xlu0.c.b16.start [1/8] %v2158, 128
      %2334 = vxpose.xlu0.c.b16.cont [2/8] %v2174, 128
      %2335 = vxpose.xlu0.c.b16.cont [3/8] 0, 128
      %2336 = vxpose.xlu0.c.b16.cont [4/8] 0, 128
      %2337 = vxpose.xlu0.c.b16.cont [5/8] 0, 128
      %2338 = vxpose.xlu0.c.b16.cont [6/8] 0, 128
      %2339 = vxpose.xlu0.c.b16.cont [7/8] 0, 128
      %2340 = vxpose.xlu0.c.b16.end [8/8] 0, 128
      %v2341 = vpop.trf.xlu0
      %v2342 = vpop.trf.xlu0
      %v2343 = vpop.trf.xlu0
      %v2344 = vpop.trf.xlu0
      %v2345 = vpop.trf.xlu0
      %v2346 = vpop.trf.xlu0
      %v2347 = vpop.trf.xlu0
      %v2348 = vpop.trf.xlu0
      %2349 = vxpose.xlu0.c.b16.start [1/8] %v2159, 128
      %2350 = vxpose.xlu0.c.b16.cont [2/8] %v2175, 128
      %2351 = vxpose.xlu0.c.b16.cont [3/8] 0, 128
      %2352 = vxpose.xlu0.c.b16.cont [4/8] 0, 128
      %2353 = vxpose.xlu0.c.b16.cont [5/8] 0, 128
      %2354 = vxpose.xlu0.c.b16.cont [6/8] 0, 128
      %2355 = vxpose.xlu0.c.b16.cont [7/8] 0, 128
      %2356 = vxpose.xlu0.c.b16.end [8/8] 0, 128
      %v2357 = vpop.trf.xlu0
      %v2358 = vpop.trf.xlu0
      %v2359 = vpop.trf.xlu0
      %v2360 = vpop.trf.xlu0
      %v2361 = vpop.trf.xlu0
      %v2362 = vpop.trf.xlu0
      %v2363 = vpop.trf.xlu0
      %v2364 = vpop.trf.xlu0
      %2365 = vxpose.xlu0.c.b16.start [1/8] %v2160, 128
      %2366 = vxpose.xlu0.c.b16.cont [2/8] %v2176, 128
      %2367 = vxpose.xlu0.c.b16.cont [3/8] 0, 128
      %2368 = vxpose.xlu0.c.b16.cont [4/8] 0, 128
      %2369 = vxpose.xlu0.c.b16.cont [5/8] 0, 128
      %2370 = vxpose.xlu0.c.b16.cont [6/8] 0, 128
      %2371 = vxpose.xlu0.c.b16.cont [7/8] 0, 128
      %2372 = vxpose.xlu0.c.b16.end [8/8] 0, 128
      %v2373 = vpop.trf.xlu0
      %v2374 = vpop.trf.xlu0
      %v2375 = vpop.trf.xlu0
      %v2376 = vpop.trf.xlu0
      %v2377 = vpop.trf.xlu0
      %v2378 = vpop.trf.xlu0
      %v2379 = vpop.trf.xlu0
      %v2380 = vpop.trf.xlu0
      %2381 = vxpose.xlu0.c.b16.start [1/8] %v2161, 128
      %2382 = vxpose.xlu0.c.b16.cont [2/8] %v2177, 128
      %2383 = vxpose.xlu0.c.b16.cont [3/8] 0, 128
      %2384 = vxpose.xlu0.c.b16.cont [4/8] 0, 128
      %2385 = vxpose.xlu0.c.b16.cont [5/8] 0, 128
      %2386 = vxpose.xlu0.c.b16.cont [6/8] 0, 128
      %2387 = vxpose.xlu0.c.b16.cont [7/8] 0, 128
      %2388 = vxpose.xlu0.c.b16.end [8/8] 0, 128
      %v2389 = vpop.trf.xlu0
      %v2390 = vpop.trf.xlu0
      %v2391 = vpop.trf.xlu0
      %v2392 = vpop.trf.xlu0
      %v2393 = vpop.trf.xlu0
      %v2394 = vpop.trf.xlu0
      %v2395 = vpop.trf.xlu0
      %v2396 = vpop.trf.xlu0
      %2397 = vxpose.xlu0.c.b16.start [1/8] %v2162, 128
      %2398 = vxpose.xlu0.c.b16.cont [2/8] %v2178, 128
      %2399 = vxpose.xlu0.c.b16.cont [3/8] 0, 128
      %2400 = vxpose.xlu0.c.b16.cont [4/8] 0, 128
      %2401 = vxpose.xlu0.c.b16.cont [5/8] 0, 128
      %2402 = vxpose.xlu0.c.b16.cont [6/8] 0, 128
      %2403 = vxpose.xlu0.c.b16.cont [7/8] 0, 128
      %2404 = vxpose.xlu0.c.b16.end [8/8] 0, 128
      %v2405 = vpop.trf.xlu0
      %v2406 = vpop.trf.xlu0
      %v2407 = vpop.trf.xlu0
      %v2408 = vpop.trf.xlu0
      %v2409 = vpop.trf.xlu0
      %v2410 = vpop.trf.xlu0
      %v2411 = vpop.trf.xlu0
      %v2412 = vpop.trf.xlu0
      %2413 = vxpose.xlu0.c.b16.start [1/8] %v2163, 128
      %2414 = vxpose.xlu0.c.b16.cont [2/8] %v2179, 128
      %2415 = vxpose.xlu0.c.b16.cont [3/8] 0, 128
      %2416 = vxpose.xlu0.c.b16.cont [4/8] 0, 128
      %2417 = vxpose.xlu0.c.b16.cont [5/8] 0, 128
      %2418 = vxpose.xlu0.c.b16.cont [6/8] 0, 128
      %2419 = vxpose.xlu0.c.b16.cont [7/8] 0, 128
      %2420 = vxpose.xlu0.c.b16.end [8/8] 0, 128
      %v2421 = vpop.trf.xlu0
      %v2422 = vpop.trf.xlu0
      %v2423 = vpop.trf.xlu0
      %v2424 = vpop.trf.xlu0
      %v2425 = vpop.trf.xlu0
      %v2426 = vpop.trf.xlu0
      %v2427 = vpop.trf.xlu0
      %v2428 = vpop.trf.xlu0
      %2429 = vxpose.xlu0.c.b16.start [1/8] %v2164, 128
      %2430 = vxpose.xlu0.c.b16.cont [2/8] %v2180, 128
      %2431 = vxpose.xlu0.c.b16.cont [3/8] 0, 128
      %2432 = vxpose.xlu0.c.b16.cont [4/8] 0, 128
      %2433 = vxpose.xlu0.c.b16.cont [5/8] 0, 128
      %2434 = vxpose.xlu0.c.b16.cont [6/8] 0, 128
      %2435 = vxpose.xlu0.c.b16.cont [7/8] 0, 128
      %2436 = vxpose.xlu0.c.b16.end [8/8] 0, 128
      %v2437 = vpop.trf.xlu0
      %v2438 = vpop.trf.xlu0
      %v2439 = vpop.trf.xlu0
      %v2440 = vpop.trf.xlu0
      %v2441 = vpop.trf.xlu0
      %v2442 = vpop.trf.xlu0
      %v2443 = vpop.trf.xlu0
      %v2444 = vpop.trf.xlu0
      %v2446 = vsel %vm1654, %v2197, 0
      %v2449 = vsel %vm1654, %v2198, 0
      %v2452 = vsel %vm1654, %v2199, 0
      %v2455 = vsel %vm1654, %v2200, 0
      %v2458 = vsel %vm1654, %v2201, 0
      %v2461 = vsel %vm1654, %v2202, 0
      %v2464 = vsel %vm1654, %v2203, 0
      %v2467 = vsel %vm1654, %v2204, 0
      %v2470 = vsel %vm1654, %v2213, 0
      %v2473 = vsel %vm1654, %v2214, 0
      %v2476 = vsel %vm1654, %v2215, 0
      %v2479 = vsel %vm1654, %v2216, 0
      %v2482 = vsel %vm1654, %v2217, 0
      %v2485 = vsel %vm1654, %v2218, 0
      %v2488 = vsel %vm1654, %v2219, 0
      %v2491 = vsel %vm1654, %v2220, 0
      %v2494 = vsel %vm1654, %v2229, 0
      %v2497 = vsel %vm1654, %v2230, 0
      %v2500 = vsel %vm1654, %v2231, 0
      %v2503 = vsel %vm1654, %v2232, 0
      %v2506 = vsel %vm1654, %v2233, 0
      %v2509 = vsel %vm1654, %v2234, 0
      %v2512 = vsel %vm1654, %v2235, 0
      %v2515 = vsel %vm1654, %v2236, 0
      %v2518 = vsel %vm1654, %v2245, 0
      %v2521 = vsel %vm1654, %v2246, 0
      %v2524 = vsel %vm1654, %v2247, 0
      %v2527 = vsel %vm1654, %v2248, 0
      %v2530 = vsel %vm1654, %v2249, 0
      %v2533 = vsel %vm1654, %v2250, 0
      %v2536 = vsel %vm1654, %v2251, 0
      %v2539 = vsel %vm1654, %v2252, 0
      %v2542 = vsel %vm1654, %v2261, 0
      %v2545 = vsel %vm1654, %v2262, 0
      %v2548 = vsel %vm1654, %v2263, 0
      %v2551 = vsel %vm1654, %v2264, 0
      %v2554 = vsel %vm1654, %v2265, 0
      %v2557 = vsel %vm1654, %v2266, 0
      %v2560 = vsel %vm1654, %v2267, 0
      %v2563 = vsel %vm1654, %v2268, 0
      %v2566 = vsel %vm1654, %v2277, 0
      %v2569 = vsel %vm1654, %v2278, 0
      %v2572 = vsel %vm1654, %v2279, 0
      %v2575 = vsel %vm1654, %v2280, 0
      %v2578 = vsel %vm1654, %v2281, 0
      %v2581 = vsel %vm1654, %v2282, 0
      %v2584 = vsel %vm1654, %v2283, 0
      %v2587 = vsel %vm1654, %v2284, 0
      %v2590 = vsel %vm1654, %v2293, 0
      %v2593 = vsel %vm1654, %v2294, 0
      %v2596 = vsel %vm1654, %v2295, 0
      %v2599 = vsel %vm1654, %v2296, 0
      %v2602 = vsel %vm1654, %v2297, 0
      %v2605 = vsel %vm1654, %v2298, 0
      %v2608 = vsel %vm1654, %v2299, 0
      %v2611 = vsel %vm1654, %v2300, 0
      %v2614 = vsel %vm1654, %v2309, 0
      %v2617 = vsel %vm1654, %v2310, 0
      %v2620 = vsel %vm1654, %v2311, 0
      %v2623 = vsel %vm1654, %v2312, 0
      %v2626 = vsel %vm1654, %v2313, 0
      %v2629 = vsel %vm1654, %v2314, 0
      %v2632 = vsel %vm1654, %v2315, 0
      %v2635 = vsel %vm1654, %v2316, 0
      %v2638 = vsel %vm1654, %v2325, 0
      %v2641 = vsel %vm1654, %v2326, 0
      %v2644 = vsel %vm1654, %v2327, 0
      %v2647 = vsel %vm1654, %v2328, 0
      %v2650 = vsel %vm1654, %v2329, 0
      %v2653 = vsel %vm1654, %v2330, 0
      %v2656 = vsel %vm1654, %v2331, 0
      %v2659 = vsel %vm1654, %v2332, 0
      %v2662 = vsel %vm1654, %v2341, 0
      %v2665 = vsel %vm1654, %v2342, 0
      %v2668 = vsel %vm1654, %v2343, 0
      %v2671 = vsel %vm1654, %v2344, 0
      %v2674 = vsel %vm1654, %v2345, 0
      %v2677 = vsel %vm1654, %v2346, 0
      %v2680 = vsel %vm1654, %v2347, 0
      %v2683 = vsel %vm1654, %v2348, 0
      %v2686 = vsel %vm1654, %v2357, 0
      %v2689 = vsel %vm1654, %v2358, 0
      %v2692 = vsel %vm1654, %v2359, 0
      %v2695 = vsel %vm1654, %v2360, 0
      %v2698 = vsel %vm1654, %v2361, 0
      %v2701 = vsel %vm1654, %v2362, 0
      %v2704 = vsel %vm1654, %v2363, 0
      %v2707 = vsel %vm1654, %v2364, 0
      %v2710 = vsel %vm1654, %v2373, 0
      %v2713 = vsel %vm1654, %v2374, 0
      %v2716 = vsel %vm1654, %v2375, 0
      %v2719 = vsel %vm1654, %v2376, 0
      %v2722 = vsel %vm1654, %v2377, 0
      %v2725 = vsel %vm1654, %v2378, 0
      %v2728 = vsel %vm1654, %v2379, 0
      %v2731 = vsel %vm1654, %v2380, 0
      %v2734 = vsel %vm1654, %v2389, 0
      %v2737 = vsel %vm1654, %v2390, 0
      %v2740 = vsel %vm1654, %v2391, 0
      %v2743 = vsel %vm1654, %v2392, 0
      %v2746 = vsel %vm1654, %v2393, 0
      %v2749 = vsel %vm1654, %v2394, 0
      %v2752 = vsel %vm1654, %v2395, 0
      %v2755 = vsel %vm1654, %v2396, 0
      %v2758 = vsel %vm1654, %v2405, 0
      %v2761 = vsel %vm1654, %v2406, 0
      %v2764 = vsel %vm1654, %v2407, 0
      %v2767 = vsel %vm1654, %v2408, 0
      %v2770 = vsel %vm1654, %v2409, 0
      %v2773 = vsel %vm1654, %v2410, 0
      %v2776 = vsel %vm1654, %v2411, 0
      %v2779 = vsel %vm1654, %v2412, 0
      %v2782 = vsel %vm1654, %v2421, 0
      %v2785 = vsel %vm1654, %v2422, 0
      %v2788 = vsel %vm1654, %v2423, 0
      %v2791 = vsel %vm1654, %v2424, 0
      %v2794 = vsel %vm1654, %v2425, 0
      %v2797 = vsel %vm1654, %v2426, 0
      %v2800 = vsel %vm1654, %v2427, 0
      %v2803 = vsel %vm1654, %v2428, 0
      %v2806 = vsel %vm1654, %v2437, 0
      %v2809 = vsel %vm1654, %v2438, 0
      %v2812 = vsel %vm1654, %v2439, 0
      %v2815 = vsel %vm1654, %v2440, 0
      %v2818 = vsel %vm1654, %v2441, 0
      %v2821 = vsel %vm1654, %v2442, 0
      %v2824 = vsel %vm1654, %v2443, 0
      %v2827 = vsel %vm1654, %v2444, 0
      %v2830 = vsel %vm1654, %v2181, 0
      %2832 = vmatprep.subr.bf16.mxu0 0
      %2833 = vmatpush1.bf16.xpose.msra.mxu0 %v2830
      %2834 = vmatprep.subr.bf16.mxu0 0
      %2835 = vmatpush1.bf16.xpose.msra.mxu0 0
      %2836 = vmatprep.subr.bf16.mxu0 0
      %2837 = vmatpush1.bf16.xpose.msra.mxu0 0
      %2838 = vmatprep.subr.bf16.mxu0 0
      %2839 = vmatpush1.bf16.xpose.msra.mxu0 0
      %2840 = vmatprep.subr.bf16.mxu0 0
      %2841 = vmatpush1.bf16.xpose.msra.mxu0 0
      %2842 = vmatprep.subr.bf16.mxu0 0
      %2843 = vmatpush1.bf16.xpose.msra.mxu0 0
      %2844 = vmatprep.subr.bf16.mxu0 0
      %2845 = vmatpush1.bf16.xpose.msra.mxu0 0
      %2846 = vmatprep.subr.bf16.mxu0 0
      %2847 = vmatpush1.bf16.xpose.msra.mxu0 0
      %2848 = vmatprep.subr.bf16.mxu0 0
      %2849 = vmatpush1.bf16.xpose.msra.mxu0 0
      %2850 = vmatprep.subr.bf16.mxu0 0
      %2851 = vmatpush1.bf16.xpose.msra.mxu0 0
      %2852 = vmatprep.subr.bf16.mxu0 0
      %2853 = vmatpush1.bf16.xpose.msra.mxu0 0
      %2854 = vmatprep.subr.bf16.mxu0 0
      %2855 = vmatpush1.bf16.xpose.msra.mxu0 0
      %2856 = vmatprep.subr.bf16.mxu0 0
      %2857 = vmatpush1.bf16.xpose.msra.mxu0 0
      %2858 = vmatprep.subr.bf16.mxu0 0
      %2859 = vmatpush1.bf16.xpose.msra.mxu0 0
      %2860 = vmatprep.subr.bf16.mxu0 0
      %2861 = vmatpush1.bf16.xpose.msra.mxu0 0
      %2862 = vmatprep.subr.bf16.mxu0 0
      %2863 = vmatpush1.bf16.xpose.msra.mxu0 0
      %2864 = vmatprep.mubr.bf16.mxu0 0
      %2865 = vmatmul.mubr.bf16.gmra.mrb[0].mxu0 %v2446
      %v2866 = vpop.f32.mrb[0].mxu0
      %v2867 = vadd.f32 %v2187, %v2866
      %v2868 = vpop.f32.mrb[0].mxu0
      %v2869 = vpop.f32.mrb[0].mxu0
      %v2870 = vadd.f32 %v2187, %v2869
      %v2871 = vpop.f32.mrb[0].mxu0
      %2872 = vmatprep.mubr.bf16.mxu0 0
      %2873 = vmatmul.mubr.bf16.gmra.mrb[0].mxu0 %v2449
      %v2874 = vpop.f32.mrb[0].mxu0
      %v2875 = vadd.f32 %v2187, %v2874
      %v2876 = vpop.f32.mrb[0].mxu0
      %v2877 = vpop.f32.mrb[0].mxu0
      %v2878 = vadd.f32 %v2187, %v2877
      %v2879 = vpop.f32.mrb[0].mxu0
      %2880 = vmatprep.mubr.bf16.mxu0 0
      %2881 = vmatmul.mubr.bf16.gmra.mrb[0].mxu0 %v2452
      %v2882 = vpop.f32.mrb[0].mxu0
      %v2883 = vadd.f32 %v2187, %v2882
      %v2884 = vpop.f32.mrb[0].mxu0
      %v2885 = vpop.f32.mrb[0].mxu0
      %v2886 = vadd.f32 %v2187, %v2885
      %v2887 = vpop.f32.mrb[0].mxu0
      %2888 = vmatprep.mubr.bf16.mxu0 0
      %2889 = vmatmul.mubr.bf16.gmra.mrb[0].mxu0 %v2455
      %v2890 = vpop.f32.mrb[0].mxu0
      %v2891 = vadd.f32 %v2187, %v2890
      %v2892 = vpop.f32.mrb[0].mxu0
      %v2893 = vpop.f32.mrb[0].mxu0
      %v2894 = vadd.f32 %v2187, %v2893
      %v2895 = vpop.f32.mrb[0].mxu0
      %2896 = vmatprep.mubr.bf16.mxu0 0
      %2897 = vmatmul.mubr.bf16.gmra.mrb[0].mxu0 %v2458
      %v2898 = vpop.f32.mrb[0].mxu0
      %v2899 = vadd.f32 %v2187, %v2898
      %v2900 = vpop.f32.mrb[0].mxu0
      %v2901 = vpop.f32.mrb[0].mxu0
      %v2902 = vadd.f32 %v2187, %v2901
      %v2903 = vpop.f32.mrb[0].mxu0
      %2904 = vmatprep.mubr.bf16.mxu0 0
      %2905 = vmatmul.mubr.bf16.gmra.mrb[0].mxu0 %v2461
      %v2906 = vpop.f32.mrb[0].mxu0
      %v2907 = vadd.f32 %v2187, %v2906
      %v2908 = vpop.f32.mrb[0].mxu0
      %v2909 = vpop.f32.mrb[0].mxu0
      %v2910 = vadd.f32 %v2187, %v2909
      %v2911 = vpop.f32.mrb[0].mxu0
      %2912 = vmatprep.mubr.bf16.mxu0 0
      %2913 = vmatmul.mubr.bf16.gmra.mrb[0].mxu0 %v2464
      %v2914 = vpop.f32.mrb[0].mxu0
      %v2915 = vadd.f32 %v2187, %v2914
      %v2916 = vpop.f32.mrb[0].mxu0
      %v2917 = vpop.f32.mrb[0].mxu0
      %v2918 = vadd.f32 %v2187, %v2917
      %v2919 = vpop.f32.mrb[0].mxu0
      %2920 = vmatprep.mubr.bf16.mxu0 0
      %2921 = vmatmul.mubr.bf16.gmra.mrb[0].mxu0 %v2467
      %v2922 = vpop.f32.mrb[0].mxu0
      %v2923 = vadd.f32 %v2187, %v2922
      %v2924 = vpop.f32.mrb[0].mxu0
      %v2925 = vpop.f32.mrb[0].mxu0
      %v2926 = vadd.f32 %v2187, %v2925
      %v2927 = vpop.f32.mrb[0].mxu0
      %2928 = vmatprep.mubr.bf16.mxu0 0
      %2929 = vmatmul.mubr.bf16.gmra.mrb[0].mxu0 %v2470
      %v2930 = vpop.f32.mrb[0].mxu0
      %v2931 = vadd.f32 %v2187, %v2930
      %v2932 = vpop.f32.mrb[0].mxu0
      %v2933 = vpop.f32.mrb[0].mxu0
      %v2934 = vadd.f32 %v2187, %v2933
      %v2935 = vpop.f32.mrb[0].mxu0
      %2936 = vmatprep.mubr.bf16.mxu0 0
      %2937 = vmatmul.mubr.bf16.gmra.mrb[0].mxu0 %v2473
      %v2938 = vpop.f32.mrb[0].mxu0
      %v2939 = vadd.f32 %v2187, %v2938
      %v2940 = vpop.f32.mrb[0].mxu0
      %v2941 = vpop.f32.mrb[0].mxu0
      %v2942 = vadd.f32 %v2187, %v2941
      %v2943 = vpop.f32.mrb[0].mxu0
      %2944 = vmatprep.mubr.bf16.mxu0 0
      %2945 = vmatmul.mubr.bf16.gmra.mrb[0].mxu0 %v2476
      %v2946 = vpop.f32.mrb[0].mxu0
      %v2947 = vadd.f32 %v2187, %v2946
      %v2948 = vpop.f32.mrb[0].mxu0
      %v2949 = vpop.f32.mrb[0].mxu0
      %v2950 = vadd.f32 %v2187, %v2949
      %v2951 = vpop.f32.mrb[0].mxu0
      %2952 = vmatprep.mubr.bf16.mxu0 0
      %2953 = vmatmul.mubr.bf16.gmra.mrb[0].mxu0 %v2479
      %v2954 = vpop.f32.mrb[0].mxu0
      %v2955 = vadd.f32 %v2187, %v2954
      %v2956 = vpop.f32.mrb[0].mxu0
      %v2957 = vpop.f32.mrb[0].mxu0
      %v2958 = vadd.f32 %v2187, %v2957
      %v2959 = vpop.f32.mrb[0].mxu0
      %2960 = vmatprep.mubr.bf16.mxu0 0
      %2961 = vmatmul.mubr.bf16.gmra.mrb[0].mxu0 %v2482
      %v2962 = vpop.f32.mrb[0].mxu0
      %v2963 = vadd.f32 %v2187, %v2962
      %v2964 = vpop.f32.mrb[0].mxu0
      %v2965 = vpop.f32.mrb[0].mxu0
      %v2966 = vadd.f32 %v2187, %v2965
      %v2967 = vpop.f32.mrb[0].mxu0
      %2968 = vmatprep.mubr.bf16.mxu0 0
      %2969 = vmatmul.mubr.bf16.gmra.mrb[0].mxu0 %v2485
      %v2970 = vpop.f32.mrb[0].mxu0
      %v2971 = vadd.f32 %v2187, %v2970
      %v2972 = vpop.f32.mrb[0].mxu0
      %v2973 = vpop.f32.mrb[0].mxu0
      %v2974 = vadd.f32 %v2187, %v2973
      %v2975 = vpop.f32.mrb[0].mxu0
      %2976 = vmatprep.mubr.bf16.mxu0 0
      %2977 = vmatmul.mubr.bf16.gmra.mrb[0].mxu0 %v2488
      %v2978 = vpop.f32.mrb[0].mxu0
      %v2979 = vadd.f32 %v2187, %v2978
      %v2980 = vpop.f32.mrb[0].mxu0
      %v2981 = vpop.f32.mrb[0].mxu0
      %v2982 = vadd.f32 %v2187, %v2981
      %v2983 = vpop.f32.mrb[0].mxu0
      %2984 = vmatprep.mubr.bf16.mxu0 0
      %2985 = vmatmul.mubr.bf16.gmra.mrb[0].mxu0 %v2491
      %v2986 = vpop.f32.mrb[0].mxu0
      %v2987 = vadd.f32 %v2187, %v2986
      %v2988 = vpop.f32.mrb[0].mxu0
      %v2989 = vpop.f32.mrb[0].mxu0
      %v2990 = vadd.f32 %v2187, %v2989
      %v2991 = vpop.f32.mrb[0].mxu0
      %2992 = vmatprep.mubr.bf16.mxu0 0
      %2993 = vmatmul.mubr.bf16.gmra.mrb[0].mxu0 %v2494
      %v2994 = vpop.f32.mrb[0].mxu0
      %v2995 = vadd.f32 %v2187, %v2994
      %v2996 = vpop.f32.mrb[0].mxu0
      %v2997 = vpop.f32.mrb[0].mxu0
      %v2998 = vadd.f32 %v2187, %v2997
      %v2999 = vpop.f32.mrb[0].mxu0
      %3000 = vmatprep.mubr.bf16.mxu0 0
      %3001 = vmatmul.mubr.bf16.gmra.mrb[0].mxu0 %v2497
      %v3002 = vpop.f32.mrb[0].mxu0
      %v3003 = vadd.f32 %v2187, %v3002
      %v3004 = vpop.f32.mrb[0].mxu0
      %v3005 = vpop.f32.mrb[0].mxu0
      %v3006 = vadd.f32 %v2187, %v3005
      %v3007 = vpop.f32.mrb[0].mxu0
      %3008 = vmatprep.mubr.bf16.mxu0 0
      %3009 = vmatmul.mubr.bf16.gmra.mrb[0].mxu0 %v2500
      %v3010 = vpop.f32.mrb[0].mxu0
      %v3011 = vadd.f32 %v2187, %v3010
      %v3012 = vpop.f32.mrb[0].mxu0
      %v3013 = vpop.f32.mrb[0].mxu0
      %v3014 = vadd.f32 %v2187, %v3013
      %v3015 = vpop.f32.mrb[0].mxu0
      %3016 = vmatprep.mubr.bf16.mxu0 0
      %3017 = vmatmul.mubr.bf16.gmra.mrb[0].mxu0 %v2503
      %v3018 = vpop.f32.mrb[0].mxu0
      %v3019 = vadd.f32 %v2187, %v3018
      %v3020 = vpop.f32.mrb[0].mxu0
      %v3021 = vpop.f32.mrb[0].mxu0
      %v3022 = vadd.f32 %v2187, %v3021
      %v3023 = vpop.f32.mrb[0].mxu0
      %3024 = vmatprep.mubr.bf16.mxu0 0
      %3025 = vmatmul.mubr.bf16.gmra.mrb[0].mxu0 %v2506
      %v3026 = vpop.f32.mrb[0].mxu0
      %v3027 = vadd.f32 %v2187, %v3026
      %v3028 = vpop.f32.mrb[0].mxu0
      %v3029 = vpop.f32.mrb[0].mxu0
      %v3030 = vadd.f32 %v2187, %v3029
      %v3031 = vpop.f32.mrb[0].mxu0
      %3032 = vmatprep.mubr.bf16.mxu0 0
      %3033 = vmatmul.mubr.bf16.gmra.mrb[0].mxu0 %v2509
      %v3034 = vpop.f32.mrb[0].mxu0
      %v3035 = vadd.f32 %v2187, %v3034
      %v3036 = vpop.f32.mrb[0].mxu0
      %v3037 = vpop.f32.mrb[0].mxu0
      %v3038 = vadd.f32 %v2187, %v3037
      %v3039 = vpop.f32.mrb[0].mxu0
      %3040 = vmatprep.mubr.bf16.mxu0 0
      %3041 = vmatmul.mubr.bf16.gmra.mrb[0].mxu0 %v2512
      %v3042 = vpop.f32.mrb[0].mxu0
      %v3043 = vadd.f32 %v2187, %v3042
      %v3044 = vpop.f32.mrb[0].mxu0
      %v3045 = vpop.f32.mrb[0].mxu0
      %v3046 = vadd.f32 %v2187, %v3045
      %v3047 = vpop.f32.mrb[0].mxu0
      %3048 = vmatprep.mubr.bf16.mxu0 0
      %3049 = vmatmul.mubr.bf16.gmra.mrb[0].mxu0 %v2515
      %v3050 = vpop.f32.mrb[0].mxu0
      %v3051 = vadd.f32 %v2187, %v3050
      %v3052 = vpop.f32.mrb[0].mxu0
      %v3053 = vpop.f32.mrb[0].mxu0
      %v3054 = vadd.f32 %v2187, %v3053
      %v3055 = vpop.f32.mrb[0].mxu0
      %3056 = vmatprep.mubr.bf16.mxu0 0
      %3057 = vmatmul.mubr.bf16.gmra.mrb[0].mxu0 %v2518
      %v3058 = vpop.f32.mrb[0].mxu0
      %v3059 = vadd.f32 %v2187, %v3058
      %v3060 = vpop.f32.mrb[0].mxu0
      %v3061 = vpop.f32.mrb[0].mxu0
      %v3062 = vadd.f32 %v2187, %v3061
      %v3063 = vpop.f32.mrb[0].mxu0
      %3064 = vmatprep.mubr.bf16.mxu0 0
      %3065 = vmatmul.mubr.bf16.gmra.mrb[0].mxu0 %v2521
      %v3066 = vpop.f32.mrb[0].mxu0
      %v3067 = vadd.f32 %v2187, %v3066
      %v3068 = vpop.f32.mrb[0].mxu0
      %v3069 = vpop.f32.mrb[0].mxu0
      %v3070 = vadd.f32 %v2187, %v3069
      %v3071 = vpop.f32.mrb[0].mxu0
      %3072 = vmatprep.mubr.bf16.mxu0 0
      %3073 = vmatmul.mubr.bf16.gmra.mrb[0].mxu0 %v2524
      %v3074 = vpop.f32.mrb[0].mxu0
      %v3075 = vadd.f32 %v2187, %v3074
      %v3076 = vpop.f32.mrb[0].mxu0
      %v3077 = vpop.f32.mrb[0].mxu0
      %v3078 = vadd.f32 %v2187, %v3077
      %v3079 = vpop.f32.mrb[0].mxu0
      %3080 = vmatprep.mubr.bf16.mxu0 0
      %3081 = vmatmul.mubr.bf16.gmra.mrb[0].mxu0 %v2527
      %v3082 = vpop.f32.mrb[0].mxu0
      %v3083 = vadd.f32 %v2187, %v3082
      %v3084 = vpop.f32.mrb[0].mxu0
      %v3085 = vpop.f32.mrb[0].mxu0
      %v3086 = vadd.f32 %v2187, %v3085
      %v3087 = vpop.f32.mrb[0].mxu0
      %3088 = vmatprep.mubr.bf16.mxu0 0
      %3089 = vmatmul.mubr.bf16.gmra.mrb[0].mxu0 %v2530
      %v3090 = vpop.f32.mrb[0].mxu0
      %v3091 = vadd.f32 %v2187, %v3090
      %v3092 = vpop.f32.mrb[0].mxu0
      %v3093 = vpop.f32.mrb[0].mxu0
      %v3094 = vadd.f32 %v2187, %v3093
      %v3095 = vpop.f32.mrb[0].mxu0
      %3096 = vmatprep.mubr.bf16.mxu0 0
      %3097 = vmatmul.mubr.bf16.gmra.mrb[0].mxu0 %v2533
      %v3098 = vpop.f32.mrb[0].mxu0
      %v3099 = vadd.f32 %v2187, %v3098
      %v3100 = vpop.f32.mrb[0].mxu0
      %v3101 = vpop.f32.mrb[0].mxu0
      %v3102 = vadd.f32 %v2187, %v3101
      %v3103 = vpop.f32.mrb[0].mxu0
      %3104 = vmatprep.mubr.bf16.mxu0 0
      %3105 = vmatmul.mubr.bf16.gmra.mrb[0].mxu0 %v2536
      %v3106 = vpop.f32.mrb[0].mxu0
      %v3107 = vadd.f32 %v2187, %v3106
      %v3108 = vpop.f32.mrb[0].mxu0
      %v3109 = vpop.f32.mrb[0].mxu0
      %v3110 = vadd.f32 %v2187, %v3109
      %v3111 = vpop.f32.mrb[0].mxu0
      %3112 = vmatprep.mubr.bf16.mxu0 0
      %3113 = vmatmul.mubr.bf16.gmra.mrb[0].mxu0 %v2539
      %v3114 = vpop.f32.mrb[0].mxu0
      %v3115 = vadd.f32 %v2187, %v3114
      %v3116 = vpop.f32.mrb[0].mxu0
      %v3117 = vpop.f32.mrb[0].mxu0
      %v3118 = vadd.f32 %v2187, %v3117
      %v3119 = vpop.f32.mrb[0].mxu0
      %3120 = vmatprep.mubr.bf16.mxu0 0
      %3121 = vmatmul.mubr.bf16.gmra.mrb[0].mxu0 %v2542
      %v3122 = vpop.f32.mrb[0].mxu0
      %v3123 = vadd.f32 %v2187, %v3122
      %v3124 = vpop.f32.mrb[0].mxu0
      %v3125 = vpop.f32.mrb[0].mxu0
      %v3126 = vadd.f32 %v2187, %v3125
      %v3127 = vpop.f32.mrb[0].mxu0
      %3128 = vmatprep.mubr.bf16.mxu0 0
      %3129 = vmatmul.mubr.bf16.gmra.mrb[0].mxu0 %v2545
      %v3130 = vpop.f32.mrb[0].mxu0
      %v3131 = vadd.f32 %v2187, %v3130
      %v3132 = vpop.f32.mrb[0].mxu0
      %v3133 = vpop.f32.mrb[0].mxu0
      %v3134 = vadd.f32 %v2187, %v3133
      %v3135 = vpop.f32.mrb[0].mxu0
      %3136 = vmatprep.mubr.bf16.mxu0 0
      %3137 = vmatmul.mubr.bf16.gmra.mrb[0].mxu0 %v2548
      %v3138 = vpop.f32.mrb[0].mxu0
      %v3139 = vadd.f32 %v2187, %v3138
      %v3140 = vpop.f32.mrb[0].mxu0
      %v3141 = vpop.f32.mrb[0].mxu0
      %v3142 = vadd.f32 %v2187, %v3141
      %v3143 = vpop.f32.mrb[0].mxu0
      %3144 = vmatprep.mubr.bf16.mxu0 0
      %3145 = vmatmul.mubr.bf16.gmra.mrb[0].mxu0 %v2551
      %v3146 = vpop.f32.mrb[0].mxu0
      %v3147 = vadd.f32 %v2187, %v3146
      %v3148 = vpop.f32.mrb[0].mxu0
      %v3149 = vpop.f32.mrb[0].mxu0
      %v3150 = vadd.f32 %v2187, %v3149
      %v3151 = vpop.f32.mrb[0].mxu0
      %3152 = vmatprep.mubr.bf16.mxu0 0
      %3153 = vmatmul.mubr.bf16.gmra.mrb[0].mxu0 %v2554
      %v3154 = vpop.f32.mrb[0].mxu0
      %v3155 = vadd.f32 %v2187, %v3154
      %v3156 = vpop.f32.mrb[0].mxu0
      %v3157 = vpop.f32.mrb[0].mxu0
      %v3158 = vadd.f32 %v2187, %v3157
      %v3159 = vpop.f32.mrb[0].mxu0
      %3160 = vmatprep.mubr.bf16.mxu0 0
      %3161 = vmatmul.mubr.bf16.gmra.mrb[0].mxu0 %v2557
      %v3162 = vpop.f32.mrb[0].mxu0
      %v3163 = vadd.f32 %v2187, %v3162
      %v3164 = vpop.f32.mrb[0].mxu0
      %v3165 = vpop.f32.mrb[0].mxu0
      %v3166 = vadd.f32 %v2187, %v3165
      %v3167 = vpop.f32.mrb[0].mxu0
      %3168 = vmatprep.mubr.bf16.mxu0 0
      %3169 = vmatmul.mubr.bf16.gmra.mrb[0].mxu0 %v2560
      %v3170 = vpop.f32.mrb[0].mxu0
      %v3171 = vadd.f32 %v2187, %v3170
      %v3172 = vpop.f32.mrb[0].mxu0
      %v3173 = vpop.f32.mrb[0].mxu0
      %v3174 = vadd.f32 %v2187, %v3173
      %v3175 = vpop.f32.mrb[0].mxu0
      %3176 = vmatprep.mubr.bf16.mxu0 0
      %3177 = vmatmul.mubr.bf16.gmra.mrb[0].mxu0 %v2563
      %v3178 = vpop.f32.mrb[0].mxu0
      %v3179 = vadd.f32 %v2187, %v3178
      %v3180 = vpop.f32.mrb[0].mxu0
      %v3181 = vpop.f32.mrb[0].mxu0
      %v3182 = vadd.f32 %v2187, %v3181
      %v3183 = vpop.f32.mrb[0].mxu0
      %3184 = vmatprep.mubr.bf16.mxu0 0
      %3185 = vmatmul.mubr.bf16.gmra.mrb[0].mxu0 %v2566
      %v3186 = vpop.f32.mrb[0].mxu0
      %v3187 = vadd.f32 %v2187, %v3186
      %v3188 = vpop.f32.mrb[0].mxu0
      %v3189 = vpop.f32.mrb[0].mxu0
      %v3190 = vadd.f32 %v2187, %v3189
      %v3191 = vpop.f32.mrb[0].mxu0
      %3192 = vmatprep.mubr.bf16.mxu0 0
      %3193 = vmatmul.mubr.bf16.gmra.mrb[0].mxu0 %v2569
      %v3194 = vpop.f32.mrb[0].mxu0
      %v3195 = vadd.f32 %v2187, %v3194
      %v3196 = vpop.f32.mrb[0].mxu0
      %v3197 = vpop.f32.mrb[0].mxu0
      %v3198 = vadd.f32 %v2187, %v3197
      %v3199 = vpop.f32.mrb[0].mxu0
      %3200 = vmatprep.mubr.bf16.mxu0 0
      %3201 = vmatmul.mubr.bf16.gmra.mrb[0].mxu0 %v2572
      %v3202 = vpop.f32.mrb[0].mxu0
      %v3203 = vadd.f32 %v2187, %v3202
      %v3204 = vpop.f32.mrb[0].mxu0
      %v3205 = vpop.f32.mrb[0].mxu0
      %v3206 = vadd.f32 %v2187, %v3205
      %v3207 = vpop.f32.mrb[0].mxu0
      %3208 = vmatprep.mubr.bf16.mxu0 0
      %3209 = vmatmul.mubr.bf16.gmra.mrb[0].mxu0 %v2575
      %v3210 = vpop.f32.mrb[0].mxu0
      %v3211 = vadd.f32 %v2187, %v3210
      %v3212 = vpop.f32.mrb[0].mxu0
      %v3213 = vpop.f32.mrb[0].mxu0
      %v3214 = vadd.f32 %v2187, %v3213
      %v3215 = vpop.f32.mrb[0].mxu0
      %3216 = vmatprep.mubr.bf16.mxu0 0
      %3217 = vmatmul.mubr.bf16.gmra.mrb[0].mxu0 %v2578
      %v3218 = vpop.f32.mrb[0].mxu0
      %v3219 = vadd.f32 %v2187, %v3218
      %v3220 = vpop.f32.mrb[0].mxu0
      %v3221 = vpop.f32.mrb[0].mxu0
      %v3222 = vadd.f32 %v2187, %v3221
      %v3223 = vpop.f32.mrb[0].mxu0
      %3224 = vmatprep.mubr.bf16.mxu0 0
      %3225 = vmatmul.mubr.bf16.gmra.mrb[0].mxu0 %v2581
      %v3226 = vpop.f32.mrb[0].mxu0
      %v3227 = vadd.f32 %v2187, %v3226
      %v3228 = vpop.f32.mrb[0].mxu0
      %v3229 = vpop.f32.mrb[0].mxu0
      %v3230 = vadd.f32 %v2187, %v3229
      %v3231 = vpop.f32.mrb[0].mxu0
      %3232 = vmatprep.mubr.bf16.mxu0 0
      %3233 = vmatmul.mubr.bf16.gmra.mrb[0].mxu0 %v2584
      %v3234 = vpop.f32.mrb[0].mxu0
      %v3235 = vadd.f32 %v2187, %v3234
      %v3236 = vpop.f32.mrb[0].mxu0
      %v3237 = vpop.f32.mrb[0].mxu0
      %v3238 = vadd.f32 %v2187, %v3237
      %v3239 = vpop.f32.mrb[0].mxu0
      %3240 = vmatprep.mubr.bf16.mxu0 0
      %3241 = vmatmul.mubr.bf16.gmra.mrb[0].mxu0 %v2587
      %v3242 = vpop.f32.mrb[0].mxu0
      %v3243 = vadd.f32 %v2187, %v3242
      %v3244 = vpop.f32.mrb[0].mxu0
      %v3245 = vpop.f32.mrb[0].mxu0
      %v3246 = vadd.f32 %v2187, %v3245
      %v3247 = vpop.f32.mrb[0].mxu0
      %3248 = vmatprep.mubr.bf16.mxu0 0
      %3249 = vmatmul.mubr.bf16.gmra.mrb[0].mxu0 %v2590
      %v3250 = vpop.f32.mrb[0].mxu0
      %v3251 = vadd.f32 %v2187, %v3250
      %v3252 = vpop.f32.mrb[0].mxu0
      %v3253 = vpop.f32.mrb[0].mxu0
      %v3254 = vadd.f32 %v2187, %v3253
      %v3255 = vpop.f32.mrb[0].mxu0
      %3256 = vmatprep.mubr.bf16.mxu0 0
      %3257 = vmatmul.mubr.bf16.gmra.mrb[0].mxu0 %v2593
      %v3258 = vpop.f32.mrb[0].mxu0
      %v3259 = vadd.f32 %v2187, %v3258
      %v3260 = vpop.f32.mrb[0].mxu0
      %v3261 = vpop.f32.mrb[0].mxu0
      %v3262 = vadd.f32 %v2187, %v3261
      %v3263 = vpop.f32.mrb[0].mxu0
      %3264 = vmatprep.mubr.bf16.mxu0 0
      %3265 = vmatmul.mubr.bf16.gmra.mrb[0].mxu0 %v2596
      %v3266 = vpop.f32.mrb[0].mxu0
      %v3267 = vadd.f32 %v2187, %v3266
      %v3268 = vpop.f32.mrb[0].mxu0
      %v3269 = vpop.f32.mrb[0].mxu0
      %v3270 = vadd.f32 %v2187, %v3269
      %v3271 = vpop.f32.mrb[0].mxu0
      %3272 = vmatprep.mubr.bf16.mxu0 0
      %3273 = vmatmul.mubr.bf16.gmra.mrb[0].mxu0 %v2599
      %v3274 = vpop.f32.mrb[0].mxu0
      %v3275 = vadd.f32 %v2187, %v3274
      %v3276 = vpop.f32.mrb[0].mxu0
      %v3277 = vpop.f32.mrb[0].mxu0
      %v3278 = vadd.f32 %v2187, %v3277
      %v3279 = vpop.f32.mrb[0].mxu0
      %3280 = vmatprep.mubr.bf16.mxu0 0
      %3281 = vmatmul.mubr.bf16.gmra.mrb[0].mxu0 %v2602
      %v3282 = vpop.f32.mrb[0].mxu0
      %v3283 = vadd.f32 %v2187, %v3282
      %v3284 = vpop.f32.mrb[0].mxu0
      %v3285 = vpop.f32.mrb[0].mxu0
      %v3286 = vadd.f32 %v2187, %v3285
      %v3287 = vpop.f32.mrb[0].mxu0
      %3288 = vmatprep.mubr.bf16.mxu0 0
      %3289 = vmatmul.mubr.bf16.gmra.mrb[0].mxu0 %v2605
      %v3290 = vpop.f32.mrb[0].mxu0
      %v3291 = vadd.f32 %v2187, %v3290
      %v3292 = vpop.f32.mrb[0].mxu0
      %v3293 = vpop.f32.mrb[0].mxu0
      %v3294 = vadd.f32 %v2187, %v3293
      %v3295 = vpop.f32.mrb[0].mxu0
      %3296 = vmatprep.mubr.bf16.mxu0 0
      %3297 = vmatmul.mubr.bf16.gmra.mrb[0].mxu0 %v2608
      %v3298 = vpop.f32.mrb[0].mxu0
      %v3299 = vadd.f32 %v2187, %v3298
      %v3300 = vpop.f32.mrb[0].mxu0
      %v3301 = vpop.f32.mrb[0].mxu0
      %v3302 = vadd.f32 %v2187, %v3301
      %v3303 = vpop.f32.mrb[0].mxu0
      %3304 = vmatprep.mubr.bf16.mxu0 0
      %3305 = vmatmul.mubr.bf16.gmra.mrb[0].mxu0 %v2611
      %v3306 = vpop.f32.mrb[0].mxu0
      %v3307 = vadd.f32 %v2187, %v3306
      %v3308 = vpop.f32.mrb[0].mxu0
      %v3309 = vpop.f32.mrb[0].mxu0
      %v3310 = vadd.f32 %v2187, %v3309
      %v3311 = vpop.f32.mrb[0].mxu0
      %3312 = vmatprep.mubr.bf16.mxu0 0
      %3313 = vmatmul.mubr.bf16.gmra.mrb[0].mxu0 %v2614
      %v3314 = vpop.f32.mrb[0].mxu0
      %v3315 = vadd.f32 %v2187, %v3314
      %v3316 = vpop.f32.mrb[0].mxu0
      %v3317 = vpop.f32.mrb[0].mxu0
      %v3318 = vadd.f32 %v2187, %v3317
      %v3319 = vpop.f32.mrb[0].mxu0
      %3320 = vmatprep.mubr.bf16.mxu0 0
      %3321 = vmatmul.mubr.bf16.gmra.mrb[0].mxu0 %v2617
      %v3322 = vpop.f32.mrb[0].mxu0
      %v3323 = vadd.f32 %v2187, %v3322
      %v3324 = vpop.f32.mrb[0].mxu0
      %v3325 = vpop.f32.mrb[0].mxu0
      %v3326 = vadd.f32 %v2187, %v3325
      %v3327 = vpop.f32.mrb[0].mxu0
      %3328 = vmatprep.mubr.bf16.mxu0 0
      %3329 = vmatmul.mubr.bf16.gmra.mrb[0].mxu0 %v2620
      %v3330 = vpop.f32.mrb[0].mxu0
      %v3331 = vadd.f32 %v2187, %v3330
      %v3332 = vpop.f32.mrb[0].mxu0
      %v3333 = vpop.f32.mrb[0].mxu0
      %v3334 = vadd.f32 %v2187, %v3333
      %v3335 = vpop.f32.mrb[0].mxu0
      %3336 = vmatprep.mubr.bf16.mxu0 0
      %3337 = vmatmul.mubr.bf16.gmra.mrb[0].mxu0 %v2623
      %v3338 = vpop.f32.mrb[0].mxu0
      %v3339 = vadd.f32 %v2187, %v3338
      %v3340 = vpop.f32.mrb[0].mxu0
      %v3341 = vpop.f32.mrb[0].mxu0
      %v3342 = vadd.f32 %v2187, %v3341
      %v3343 = vpop.f32.mrb[0].mxu0
      %3344 = vmatprep.mubr.bf16.mxu0 0
      %3345 = vmatmul.mubr.bf16.gmra.mrb[0].mxu0 %v2626
      %v3346 = vpop.f32.mrb[0].mxu0
      %v3347 = vadd.f32 %v2187, %v3346
      %v3348 = vpop.f32.mrb[0].mxu0
      %v3349 = vpop.f32.mrb[0].mxu0
      %v3350 = vadd.f32 %v2187, %v3349
      %v3351 = vpop.f32.mrb[0].mxu0
      %3352 = vmatprep.mubr.bf16.mxu0 0
      %3353 = vmatmul.mubr.bf16.gmra.mrb[0].mxu0 %v2629
      %v3354 = vpop.f32.mrb[0].mxu0
      %v3355 = vadd.f32 %v2187, %v3354
      %v3356 = vpop.f32.mrb[0].mxu0
      %v3357 = vpop.f32.mrb[0].mxu0
      %v3358 = vadd.f32 %v2187, %v3357
      %v3359 = vpop.f32.mrb[0].mxu0
      %3360 = vmatprep.mubr.bf16.mxu0 0
      %3361 = vmatmul.mubr.bf16.gmra.mrb[0].mxu0 %v2632
      %v3362 = vpop.f32.mrb[0].mxu0
      %v3363 = vadd.f32 %v2187, %v3362
      %v3364 = vpop.f32.mrb[0].mxu0
      %v3365 = vpop.f32.mrb[0].mxu0
      %v3366 = vadd.f32 %v2187, %v3365
      %v3367 = vpop.f32.mrb[0].mxu0
      %3368 = vmatprep.mubr.bf16.mxu0 0
      %3369 = vmatmul.mubr.bf16.gmra.mrb[0].mxu0 %v2635
      %v3370 = vpop.f32.mrb[0].mxu0
      %v3371 = vadd.f32 %v2187, %v3370
      %v3372 = vpop.f32.mrb[0].mxu0
      %v3373 = vpop.f32.mrb[0].mxu0
      %v3374 = vadd.f32 %v2187, %v3373
      %v3375 = vpop.f32.mrb[0].mxu0
      %3376 = vmatprep.mubr.bf16.mxu0 0
      %3377 = vmatmul.mubr.bf16.gmra.mrb[0].mxu0 %v2638
      %v3378 = vpop.f32.mrb[0].mxu0
      %v3379 = vadd.f32 %v2187, %v3378
      %v3380 = vpop.f32.mrb[0].mxu0
      %v3381 = vpop.f32.mrb[0].mxu0
      %v3382 = vadd.f32 %v2187, %v3381
      %v3383 = vpop.f32.mrb[0].mxu0
      %3384 = vmatprep.mubr.bf16.mxu0 0
      %3385 = vmatmul.mubr.bf16.gmra.mrb[0].mxu0 %v2641
      %v3386 = vpop.f32.mrb[0].mxu0
      %v3387 = vadd.f32 %v2187, %v3386
      %v3388 = vpop.f32.mrb[0].mxu0
      %v3389 = vpop.f32.mrb[0].mxu0
      %v3390 = vadd.f32 %v2187, %v3389
      %v3391 = vpop.f32.mrb[0].mxu0
      %3392 = vmatprep.mubr.bf16.mxu0 0
      %3393 = vmatmul.mubr.bf16.gmra.mrb[0].mxu0 %v2644
      %v3394 = vpop.f32.mrb[0].mxu0
      %v3395 = vadd.f32 %v2187, %v3394
      %v3396 = vpop.f32.mrb[0].mxu0
      %v3397 = vpop.f32.mrb[0].mxu0
      %v3398 = vadd.f32 %v2187, %v3397
      %v3399 = vpop.f32.mrb[0].mxu0
      %3400 = vmatprep.mubr.bf16.mxu0 0
      %3401 = vmatmul.mubr.bf16.gmra.mrb[0].mxu0 %v2647
      %v3402 = vpop.f32.mrb[0].mxu0
      %v3403 = vadd.f32 %v2187, %v3402
      %v3404 = vpop.f32.mrb[0].mxu0
      %v3405 = vpop.f32.mrb[0].mxu0
      %v3406 = vadd.f32 %v2187, %v3405
      %v3407 = vpop.f32.mrb[0].mxu0
      %3408 = vmatprep.mubr.bf16.mxu0 0
      %3409 = vmatmul.mubr.bf16.gmra.mrb[0].mxu0 %v2650
      %v3410 = vpop.f32.mrb[0].mxu0
      %v3411 = vadd.f32 %v2187, %v3410
      %v3412 = vpop.f32.mrb[0].mxu0
      %v3413 = vpop.f32.mrb[0].mxu0
      %v3414 = vadd.f32 %v2187, %v3413
      %v3415 = vpop.f32.mrb[0].mxu0
      %3416 = vmatprep.mubr.bf16.mxu0 0
      %3417 = vmatmul.mubr.bf16.gmra.mrb[0].mxu0 %v2653
      %v3418 = vpop.f32.mrb[0].mxu0
      %v3419 = vadd.f32 %v2187, %v3418
      %v3420 = vpop.f32.mrb[0].mxu0
      %v3421 = vpop.f32.mrb[0].mxu0
      %v3422 = vadd.f32 %v2187, %v3421
      %v3423 = vpop.f32.mrb[0].mxu0
      %3424 = vmatprep.mubr.bf16.mxu0 0
      %3425 = vmatmul.mubr.bf16.gmra.mrb[0].mxu0 %v2656
      %v3426 = vpop.f32.mrb[0].mxu0
      %v3427 = vadd.f32 %v2187, %v3426
      %v3428 = vpop.f32.mrb[0].mxu0
      %v3429 = vpop.f32.mrb[0].mxu0
      %v3430 = vadd.f32 %v2187, %v3429
      %v3431 = vpop.f32.mrb[0].mxu0
      %3432 = vmatprep.mubr.bf16.mxu0 0
      %3433 = vmatmul.mubr.bf16.gmra.mrb[0].mxu0 %v2659
      %v3434 = vpop.f32.mrb[0].mxu0
      %v3435 = vadd.f32 %v2187, %v3434
      %v3436 = vpop.f32.mrb[0].mxu0
      %v3437 = vpop.f32.mrb[0].mxu0
      %v3438 = vadd.f32 %v2187, %v3437
      %v3439 = vpop.f32.mrb[0].mxu0
      %3440 = vmatprep.mubr.bf16.mxu0 0
      %3441 = vmatmul.mubr.bf16.gmra.mrb[0].mxu0 %v2662
      %v3442 = vpop.f32.mrb[0].mxu0
      %v3443 = vadd.f32 %v2187, %v3442
      %v3444 = vpop.f32.mrb[0].mxu0
      %v3445 = vpop.f32.mrb[0].mxu0
      %v3446 = vadd.f32 %v2187, %v3445
      %v3447 = vpop.f32.mrb[0].mxu0
      %3448 = vmatprep.mubr.bf16.mxu0 0
      %3449 = vmatmul.mubr.bf16.gmra.mrb[0].mxu0 %v2665
      %v3450 = vpop.f32.mrb[0].mxu0
      %v3451 = vadd.f32 %v2187, %v3450
      %v3452 = vpop.f32.mrb[0].mxu0
      %v3453 = vpop.f32.mrb[0].mxu0
      %v3454 = vadd.f32 %v2187, %v3453
      %v3455 = vpop.f32.mrb[0].mxu0
      %3456 = vmatprep.mubr.bf16.mxu0 0
      %3457 = vmatmul.mubr.bf16.gmra.mrb[0].mxu0 %v2668
      %v3458 = vpop.f32.mrb[0].mxu0
      %v3459 = vadd.f32 %v2187, %v3458
      %v3460 = vpop.f32.mrb[0].mxu0
      %v3461 = vpop.f32.mrb[0].mxu0
      %v3462 = vadd.f32 %v2187, %v3461
      %v3463 = vpop.f32.mrb[0].mxu0
      %3464 = vmatprep.mubr.bf16.mxu0 0
      %3465 = vmatmul.mubr.bf16.gmra.mrb[0].mxu0 %v2671
      %v3466 = vpop.f32.mrb[0].mxu0
      %v3467 = vadd.f32 %v2187, %v3466
      %v3468 = vpop.f32.mrb[0].mxu0
      %v3469 = vpop.f32.mrb[0].mxu0
      %v3470 = vadd.f32 %v2187, %v3469
      %v3471 = vpop.f32.mrb[0].mxu0
      %3472 = vmatprep.mubr.bf16.mxu0 0
      %3473 = vmatmul.mubr.bf16.gmra.mrb[0].mxu0 %v2674
      %v3474 = vpop.f32.mrb[0].mxu0
      %v3475 = vadd.f32 %v2187, %v3474
      %v3476 = vpop.f32.mrb[0].mxu0
      %v3477 = vpop.f32.mrb[0].mxu0
      %v3478 = vadd.f32 %v2187, %v3477
      %v3479 = vpop.f32.mrb[0].mxu0
      %3480 = vmatprep.mubr.bf16.mxu0 0
      %3481 = vmatmul.mubr.bf16.gmra.mrb[0].mxu0 %v2677
      %v3482 = vpop.f32.mrb[0].mxu0
      %v3483 = vadd.f32 %v2187, %v3482
      %v3484 = vpop.f32.mrb[0].mxu0
      %v3485 = vpop.f32.mrb[0].mxu0
      %v3486 = vadd.f32 %v2187, %v3485
      %v3487 = vpop.f32.mrb[0].mxu0
      %3488 = vmatprep.mubr.bf16.mxu0 0
      %3489 = vmatmul.mubr.bf16.gmra.mrb[0].mxu0 %v2680
      %v3490 = vpop.f32.mrb[0].mxu0
      %v3491 = vadd.f32 %v2187, %v3490
      %v3492 = vpop.f32.mrb[0].mxu0
      %v3493 = vpop.f32.mrb[0].mxu0
      %v3494 = vadd.f32 %v2187, %v3493
      %v3495 = vpop.f32.mrb[0].mxu0
      %3496 = vmatprep.mubr.bf16.mxu0 0
      %3497 = vmatmul.mubr.bf16.gmra.mrb[0].mxu0 %v2683
      %v3498 = vpop.f32.mrb[0].mxu0
      %v3499 = vadd.f32 %v2187, %v3498
      %v3500 = vpop.f32.mrb[0].mxu0
      %v3501 = vpop.f32.mrb[0].mxu0
      %v3502 = vadd.f32 %v2187, %v3501
      %v3503 = vpop.f32.mrb[0].mxu0
      %3504 = vmatprep.mubr.bf16.mxu0 0
      %3505 = vmatmul.mubr.bf16.gmra.mrb[0].mxu0 %v2686
      %v3506 = vpop.f32.mrb[0].mxu0
      %v3507 = vadd.f32 %v2187, %v3506
      %v3508 = vpop.f32.mrb[0].mxu0
      %v3509 = vpop.f32.mrb[0].mxu0
      %v3510 = vadd.f32 %v2187, %v3509
      %v3511 = vpop.f32.mrb[0].mxu0
      %3512 = vmatprep.mubr.bf16.mxu0 0
      %3513 = vmatmul.mubr.bf16.gmra.mrb[0].mxu0 %v2689
      %v3514 = vpop.f32.mrb[0].mxu0
      %v3515 = vadd.f32 %v2187, %v3514
      %v3516 = vpop.f32.mrb[0].mxu0
      %v3517 = vpop.f32.mrb[0].mxu0
      %v3518 = vadd.f32 %v2187, %v3517
      %v3519 = vpop.f32.mrb[0].mxu0
      %3520 = vmatprep.mubr.bf16.mxu0 0
      %3521 = vmatmul.mubr.bf16.gmra.mrb[0].mxu0 %v2692
      %v3522 = vpop.f32.mrb[0].mxu0
      %v3523 = vadd.f32 %v2187, %v3522
      %v3524 = vpop.f32.mrb[0].mxu0
      %v3525 = vpop.f32.mrb[0].mxu0
      %v3526 = vadd.f32 %v2187, %v3525
      %v3527 = vpop.f32.mrb[0].mxu0
      %3528 = vmatprep.mubr.bf16.mxu0 0
      %3529 = vmatmul.mubr.bf16.gmra.mrb[0].mxu0 %v2695
      %v3530 = vpop.f32.mrb[0].mxu0
      %v3531 = vadd.f32 %v2187, %v3530
      %v3532 = vpop.f32.mrb[0].mxu0
      %v3533 = vpop.f32.mrb[0].mxu0
      %v3534 = vadd.f32 %v2187, %v3533
      %v3535 = vpop.f32.mrb[0].mxu0
      %3536 = vmatprep.mubr.bf16.mxu0 0
      %3537 = vmatmul.mubr.bf16.gmra.mrb[0].mxu0 %v2698
      %v3538 = vpop.f32.mrb[0].mxu0
      %v3539 = vadd.f32 %v2187, %v3538
      %v3540 = vpop.f32.mrb[0].mxu0
      %v3541 = vpop.f32.mrb[0].mxu0
      %v3542 = vadd.f32 %v2187, %v3541
      %v3543 = vpop.f32.mrb[0].mxu0
      %3544 = vmatprep.mubr.bf16.mxu0 0
      %3545 = vmatmul.mubr.bf16.gmra.mrb[0].mxu0 %v2701
      %v3546 = vpop.f32.mrb[0].mxu0
      %v3547 = vadd.f32 %v2187, %v3546
      %v3548 = vpop.f32.mrb[0].mxu0
      %v3549 = vpop.f32.mrb[0].mxu0
      %v3550 = vadd.f32 %v2187, %v3549
      %v3551 = vpop.f32.mrb[0].mxu0
      %3552 = vmatprep.mubr.bf16.mxu0 0
      %3553 = vmatmul.mubr.bf16.gmra.mrb[0].mxu0 %v2704
      %v3554 = vpop.f32.mrb[0].mxu0
      %v3555 = vadd.f32 %v2187, %v3554
      %v3556 = vpop.f32.mrb[0].mxu0
      %v3557 = vpop.f32.mrb[0].mxu0
      %v3558 = vadd.f32 %v2187, %v3557
      %v3559 = vpop.f32.mrb[0].mxu0
      %3560 = vmatprep.mubr.bf16.mxu0 0
      %3561 = vmatmul.mubr.bf16.gmra.mrb[0].mxu0 %v2707
      %v3562 = vpop.f32.mrb[0].mxu0
      %v3563 = vadd.f32 %v2187, %v3562
      %v3564 = vpop.f32.mrb[0].mxu0
      %v3565 = vpop.f32.mrb[0].mxu0
      %v3566 = vadd.f32 %v2187, %v3565
      %v3567 = vpop.f32.mrb[0].mxu0
      %3568 = vmatprep.mubr.bf16.mxu0 0
      %3569 = vmatmul.mubr.bf16.gmra.mrb[0].mxu0 %v2710
      %v3570 = vpop.f32.mrb[0].mxu0
      %v3571 = vadd.f32 %v2187, %v3570
      %v3572 = vpop.f32.mrb[0].mxu0
      %v3573 = vpop.f32.mrb[0].mxu0
      %v3574 = vadd.f32 %v2187, %v3573
      %v3575 = vpop.f32.mrb[0].mxu0
      %3576 = vmatprep.mubr.bf16.mxu0 0
      %3577 = vmatmul.mubr.bf16.gmra.mrb[0].mxu0 %v2713
      %v3578 = vpop.f32.mrb[0].mxu0
      %v3579 = vadd.f32 %v2187, %v3578
      %v3580 = vpop.f32.mrb[0].mxu0
      %v3581 = vpop.f32.mrb[0].mxu0
      %v3582 = vadd.f32 %v2187, %v3581
      %v3583 = vpop.f32.mrb[0].mxu0
      %3584 = vmatprep.mubr.bf16.mxu0 0
      %3585 = vmatmul.mubr.bf16.gmra.mrb[0].mxu0 %v2716
      %v3586 = vpop.f32.mrb[0].mxu0
      %v3587 = vadd.f32 %v2187, %v3586
      %v3588 = vpop.f32.mrb[0].mxu0
      %v3589 = vpop.f32.mrb[0].mxu0
      %v3590 = vadd.f32 %v2187, %v3589
      %v3591 = vpop.f32.mrb[0].mxu0
      %3592 = vmatprep.mubr.bf16.mxu0 0
      %3593 = vmatmul.mubr.bf16.gmra.mrb[0].mxu0 %v2719
      %v3594 = vpop.f32.mrb[0].mxu0
      %v3595 = vadd.f32 %v2187, %v3594
      %v3596 = vpop.f32.mrb[0].mxu0
      %v3597 = vpop.f32.mrb[0].mxu0
      %v3598 = vadd.f32 %v2187, %v3597
      %v3599 = vpop.f32.mrb[0].mxu0
      %3600 = vmatprep.mubr.bf16.mxu0 0
      %3601 = vmatmul.mubr.bf16.gmra.mrb[0].mxu0 %v2722
      %v3602 = vpop.f32.mrb[0].mxu0
      %v3603 = vadd.f32 %v2187, %v3602
      %v3604 = vpop.f32.mrb[0].mxu0
      %v3605 = vpop.f32.mrb[0].mxu0
      %v3606 = vadd.f32 %v2187, %v3605
      %v3607 = vpop.f32.mrb[0].mxu0
      %3608 = vmatprep.mubr.bf16.mxu0 0
      %3609 = vmatmul.mubr.bf16.gmra.mrb[0].mxu0 %v2725
      %v3610 = vpop.f32.mrb[0].mxu0
      %v3611 = vadd.f32 %v2187, %v3610
      %v3612 = vpop.f32.mrb[0].mxu0
      %v3613 = vpop.f32.mrb[0].mxu0
      %v3614 = vadd.f32 %v2187, %v3613
      %v3615 = vpop.f32.mrb[0].mxu0
      %3616 = vmatprep.mubr.bf16.mxu0 0
      %3617 = vmatmul.mubr.bf16.gmra.mrb[0].mxu0 %v2728
      %v3618 = vpop.f32.mrb[0].mxu0
      %v3619 = vadd.f32 %v2187, %v3618
      %v3620 = vpop.f32.mrb[0].mxu0
      %v3621 = vpop.f32.mrb[0].mxu0
      %v3622 = vadd.f32 %v2187, %v3621
      %v3623 = vpop.f32.mrb[0].mxu0
      %3624 = vmatprep.mubr.bf16.mxu0 0
      %3625 = vmatmul.mubr.bf16.gmra.mrb[0].mxu0 %v2731
      %v3626 = vpop.f32.mrb[0].mxu0
      %v3627 = vadd.f32 %v2187, %v3626
      %v3628 = vpop.f32.mrb[0].mxu0
      %v3629 = vpop.f32.mrb[0].mxu0
      %v3630 = vadd.f32 %v2187, %v3629
      %v3631 = vpop.f32.mrb[0].mxu0
      %3632 = vmatprep.mubr.bf16.mxu0 0
      %3633 = vmatmul.mubr.bf16.gmra.mrb[0].mxu0 %v2734
      %v3634 = vpop.f32.mrb[0].mxu0
      %v3635 = vadd.f32 %v2187, %v3634
      %v3636 = vpop.f32.mrb[0].mxu0
      %v3637 = vpop.f32.mrb[0].mxu0
      %v3638 = vadd.f32 %v2187, %v3637
      %v3639 = vpop.f32.mrb[0].mxu0
      %3640 = vmatprep.mubr.bf16.mxu0 0
      %3641 = vmatmul.mubr.bf16.gmra.mrb[0].mxu0 %v2737
      %v3642 = vpop.f32.mrb[0].mxu0
      %v3643 = vadd.f32 %v2187, %v3642
      %v3644 = vpop.f32.mrb[0].mxu0
      %v3645 = vpop.f32.mrb[0].mxu0
      %v3646 = vadd.f32 %v2187, %v3645
      %v3647 = vpop.f32.mrb[0].mxu0
      %3648 = vmatprep.mubr.bf16.mxu0 0
      %3649 = vmatmul.mubr.bf16.gmra.mrb[0].mxu0 %v2740
      %v3650 = vpop.f32.mrb[0].mxu0
      %v3651 = vadd.f32 %v2187, %v3650
      %v3652 = vpop.f32.mrb[0].mxu0
      %v3653 = vpop.f32.mrb[0].mxu0
      %v3654 = vadd.f32 %v2187, %v3653
      %v3655 = vpop.f32.mrb[0].mxu0
      %3656 = vmatprep.mubr.bf16.mxu0 0
      %3657 = vmatmul.mubr.bf16.gmra.mrb[0].mxu0 %v2743
      %v3658 = vpop.f32.mrb[0].mxu0
      %v3659 = vadd.f32 %v2187, %v3658
      %v3660 = vpop.f32.mrb[0].mxu0
      %v3661 = vpop.f32.mrb[0].mxu0
      %v3662 = vadd.f32 %v2187, %v3661
      %v3663 = vpop.f32.mrb[0].mxu0
      %3664 = vmatprep.mubr.bf16.mxu0 0
      %3665 = vmatmul.mubr.bf16.gmra.mrb[0].mxu0 %v2746
      %v3666 = vpop.f32.mrb[0].mxu0
      %v3667 = vadd.f32 %v2187, %v3666
      %v3668 = vpop.f32.mrb[0].mxu0
      %v3669 = vpop.f32.mrb[0].mxu0
      %v3670 = vadd.f32 %v2187, %v3669
      %v3671 = vpop.f32.mrb[0].mxu0
      %3672 = vmatprep.mubr.bf16.mxu0 0
      %3673 = vmatmul.mubr.bf16.gmra.mrb[0].mxu0 %v2749
      %v3674 = vpop.f32.mrb[0].mxu0
      %v3675 = vadd.f32 %v2187, %v3674
      %v3676 = vpop.f32.mrb[0].mxu0
      %v3677 = vpop.f32.mrb[0].mxu0
      %v3678 = vadd.f32 %v2187, %v3677
      %v3679 = vpop.f32.mrb[0].mxu0
      %3680 = vmatprep.mubr.bf16.mxu0 0
      %3681 = vmatmul.mubr.bf16.gmra.mrb[0].mxu0 %v2752
      %v3682 = vpop.f32.mrb[0].mxu0
      %v3683 = vadd.f32 %v2187, %v3682
      %v3684 = vpop.f32.mrb[0].mxu0
      %v3685 = vpop.f32.mrb[0].mxu0
      %v3686 = vadd.f32 %v2187, %v3685
      %v3687 = vpop.f32.mrb[0].mxu0
      %3688 = vmatprep.mubr.bf16.mxu0 0
      %3689 = vmatmul.mubr.bf16.gmra.mrb[0].mxu0 %v2755
      %v3690 = vpop.f32.mrb[0].mxu0
      %v3691 = vadd.f32 %v2187, %v3690
      %v3692 = vpop.f32.mrb[0].mxu0
      %v3693 = vpop.f32.mrb[0].mxu0
      %v3694 = vadd.f32 %v2187, %v3693
      %v3695 = vpop.f32.mrb[0].mxu0
      %3696 = vmatprep.mubr.bf16.mxu0 0
      %3697 = vmatmul.mubr.bf16.gmra.mrb[0].mxu0 %v2758
      %v3698 = vpop.f32.mrb[0].mxu0
      %v3699 = vadd.f32 %v2187, %v3698
      %v3700 = vpop.f32.mrb[0].mxu0
      %v3701 = vpop.f32.mrb[0].mxu0
      %v3702 = vadd.f32 %v2187, %v3701
      %v3703 = vpop.f32.mrb[0].mxu0
      %3704 = vmatprep.mubr.bf16.mxu0 0
      %3705 = vmatmul.mubr.bf16.gmra.mrb[0].mxu0 %v2761
      %v3706 = vpop.f32.mrb[0].mxu0
      %v3707 = vadd.f32 %v2187, %v3706
      %v3708 = vpop.f32.mrb[0].mxu0
      %v3709 = vpop.f32.mrb[0].mxu0
      %v3710 = vadd.f32 %v2187, %v3709
      %v3711 = vpop.f32.mrb[0].mxu0
      %3712 = vmatprep.mubr.bf16.mxu0 0
      %3713 = vmatmul.mubr.bf16.gmra.mrb[0].mxu0 %v2764
      %v3714 = vpop.f32.mrb[0].mxu0
      %v3715 = vadd.f32 %v2187, %v3714
      %v3716 = vpop.f32.mrb[0].mxu0
      %v3717 = vpop.f32.mrb[0].mxu0
      %v3718 = vadd.f32 %v2187, %v3717
      %v3719 = vpop.f32.mrb[0].mxu0
      %3720 = vmatprep.mubr.bf16.mxu0 0
      %3721 = vmatmul.mubr.bf16.gmra.mrb[0].mxu0 %v2767
      %v3722 = vpop.f32.mrb[0].mxu0
      %v3723 = vadd.f32 %v2187, %v3722
      %v3724 = vpop.f32.mrb[0].mxu0
      %v3725 = vpop.f32.mrb[0].mxu0
      %v3726 = vadd.f32 %v2187, %v3725
      %v3727 = vpop.f32.mrb[0].mxu0
      %3728 = vmatprep.mubr.bf16.mxu0 0
      %3729 = vmatmul.mubr.bf16.gmra.mrb[0].mxu0 %v2770
      %v3730 = vpop.f32.mrb[0].mxu0
      %v3731 = vadd.f32 %v2187, %v3730
      %v3732 = vpop.f32.mrb[0].mxu0
      %v3733 = vpop.f32.mrb[0].mxu0
      %v3734 = vadd.f32 %v2187, %v3733
      %v3735 = vpop.f32.mrb[0].mxu0
      %3736 = vmatprep.mubr.bf16.mxu0 0
      %3737 = vmatmul.mubr.bf16.gmra.mrb[0].mxu0 %v2773
      %v3738 = vpop.f32.mrb[0].mxu0
      %v3739 = vadd.f32 %v2187, %v3738
      %v3740 = vpop.f32.mrb[0].mxu0
      %v3741 = vpop.f32.mrb[0].mxu0
      %v3742 = vadd.f32 %v2187, %v3741
      %v3743 = vpop.f32.mrb[0].mxu0
      %3744 = vmatprep.mubr.bf16.mxu0 0
      %3745 = vmatmul.mubr.bf16.gmra.mrb[0].mxu0 %v2776
      %v3746 = vpop.f32.mrb[0].mxu0
      %v3747 = vadd.f32 %v2187, %v3746
      %v3748 = vpop.f32.mrb[0].mxu0
      %v3749 = vpop.f32.mrb[0].mxu0
      %v3750 = vadd.f32 %v2187, %v3749
      %v3751 = vpop.f32.mrb[0].mxu0
      %3752 = vmatprep.mubr.bf16.mxu0 0
      %3753 = vmatmul.mubr.bf16.gmra.mrb[0].mxu0 %v2779
      %v3754 = vpop.f32.mrb[0].mxu0
      %v3755 = vadd.f32 %v2187, %v3754
      %v3756 = vpop.f32.mrb[0].mxu0
      %v3757 = vpop.f32.mrb[0].mxu0
      %v3758 = vadd.f32 %v2187, %v3757
      %v3759 = vpop.f32.mrb[0].mxu0
      %3760 = vmatprep.mubr.bf16.mxu0 0
      %3761 = vmatmul.mubr.bf16.gmra.mrb[0].mxu0 %v2782
      %v3762 = vpop.f32.mrb[0].mxu0
      %v3763 = vadd.f32 %v2187, %v3762
      %v3764 = vpop.f32.mrb[0].mxu0
      %v3765 = vpop.f32.mrb[0].mxu0
      %v3766 = vadd.f32 %v2187, %v3765
      %v3767 = vpop.f32.mrb[0].mxu0
      %3768 = vmatprep.mubr.bf16.mxu0 0
      %3769 = vmatmul.mubr.bf16.gmra.mrb[0].mxu0 %v2785
      %v3770 = vpop.f32.mrb[0].mxu0
      %v3771 = vadd.f32 %v2187, %v3770
      %v3772 = vpop.f32.mrb[0].mxu0
      %v3773 = vpop.f32.mrb[0].mxu0
      %v3774 = vadd.f32 %v2187, %v3773
      %v3775 = vpop.f32.mrb[0].mxu0
      %3776 = vmatprep.mubr.bf16.mxu0 0
      %3777 = vmatmul.mubr.bf16.gmra.mrb[0].mxu0 %v2788
      %v3778 = vpop.f32.mrb[0].mxu0
      %v3779 = vadd.f32 %v2187, %v3778
      %v3780 = vpop.f32.mrb[0].mxu0
      %v3781 = vpop.f32.mrb[0].mxu0
      %v3782 = vadd.f32 %v2187, %v3781
      %v3783 = vpop.f32.mrb[0].mxu0
      %3784 = vmatprep.mubr.bf16.mxu0 0
      %3785 = vmatmul.mubr.bf16.gmra.mrb[0].mxu0 %v2791
      %v3786 = vpop.f32.mrb[0].mxu0
      %v3787 = vadd.f32 %v2187, %v3786
      %v3788 = vpop.f32.mrb[0].mxu0
      %v3789 = vpop.f32.mrb[0].mxu0
      %v3790 = vadd.f32 %v2187, %v3789
      %v3791 = vpop.f32.mrb[0].mxu0
      %3792 = vmatprep.mubr.bf16.mxu0 0
      %3793 = vmatmul.mubr.bf16.gmra.mrb[0].mxu0 %v2794
      %v3794 = vpop.f32.mrb[0].mxu0
      %v3795 = vadd.f32 %v2187, %v3794
      %v3796 = vpop.f32.mrb[0].mxu0
      %v3797 = vpop.f32.mrb[0].mxu0
      %v3798 = vadd.f32 %v2187, %v3797
      %v3799 = vpop.f32.mrb[0].mxu0
      %3800 = vmatprep.mubr.bf16.mxu0 0
      %3801 = vmatmul.mubr.bf16.gmra.mrb[0].mxu0 %v2797
      %v3802 = vpop.f32.mrb[0].mxu0
      %v3803 = vadd.f32 %v2187, %v3802
      %v3804 = vpop.f32.mrb[0].mxu0
      %v3805 = vpop.f32.mrb[0].mxu0
      %v3806 = vadd.f32 %v2187, %v3805
      %v3807 = vpop.f32.mrb[0].mxu0
      %3808 = vmatprep.mubr.bf16.mxu0 0
      %3809 = vmatmul.mubr.bf16.gmra.mrb[0].mxu0 %v2800
      %v3810 = vpop.f32.mrb[0].mxu0
      %v3811 = vadd.f32 %v2187, %v3810
      %v3812 = vpop.f32.mrb[0].mxu0
      %v3813 = vpop.f32.mrb[0].mxu0
      %v3814 = vadd.f32 %v2187, %v3813
      %v3815 = vpop.f32.mrb[0].mxu0
      %3816 = vmatprep.mubr.bf16.mxu0 0
      %3817 = vmatmul.mubr.bf16.gmra.mrb[0].mxu0 %v2803
      %v3818 = vpop.f32.mrb[0].mxu0
      %v3819 = vadd.f32 %v2187, %v3818
      %v3820 = vpop.f32.mrb[0].mxu0
      %v3821 = vpop.f32.mrb[0].mxu0
      %v3822 = vadd.f32 %v2187, %v3821
      %v3823 = vpop.f32.mrb[0].mxu0
      %3824 = vmatprep.mubr.bf16.mxu0 0
      %3825 = vmatmul.mubr.bf16.gmra.mrb[0].mxu0 %v2806
      %v3826 = vpop.f32.mrb[0].mxu0
      %v3827 = vadd.f32 %v2187, %v3826
      %v3828 = vpop.f32.mrb[0].mxu0
      %v3829 = vpop.f32.mrb[0].mxu0
      %v3830 = vadd.f32 %v2187, %v3829
      %v3831 = vpop.f32.mrb[0].mxu0
      %3832 = vmatprep.mubr.bf16.mxu0 0
      %3833 = vmatmul.mubr.bf16.gmra.mrb[0].mxu0 %v2809
      %v3834 = vpop.f32.mrb[0].mxu0
      %v3835 = vadd.f32 %v2187, %v3834
      %v3836 = vpop.f32.mrb[0].mxu0
      %v3837 = vpop.f32.mrb[0].mxu0
      %v3838 = vadd.f32 %v2187, %v3837
      %v3839 = vpop.f32.mrb[0].mxu0
      %3840 = vmatprep.mubr.bf16.mxu0 0
      %3841 = vmatmul.mubr.bf16.gmra.mrb[0].mxu0 %v2812
      %v3842 = vpop.f32.mrb[0].mxu0
      %v3843 = vadd.f32 %v2187, %v3842
      %v3844 = vpop.f32.mrb[0].mxu0
      %v3845 = vpop.f32.mrb[0].mxu0
      %v3846 = vadd.f32 %v2187, %v3845
      %v3847 = vpop.f32.mrb[0].mxu0
      %3848 = vmatprep.mubr.bf16.mxu0 0
      %3849 = vmatmul.mubr.bf16.gmra.mrb[0].mxu0 %v2815
      %v3850 = vpop.f32.mrb[0].mxu0
      %v3851 = vadd.f32 %v2187, %v3850
      %v3852 = vpop.f32.mrb[0].mxu0
      %v3853 = vpop.f32.mrb[0].mxu0
      %v3854 = vadd.f32 %v2187, %v3853
      %v3855 = vpop.f32.mrb[0].mxu0
      %3856 = vmatprep.mubr.bf16.mxu0 0
      %3857 = vmatmul.mubr.bf16.gmra.mrb[0].mxu0 %v2818
      %v3858 = vpop.f32.mrb[0].mxu0
      %v3859 = vadd.f32 %v2187, %v3858
      %v3860 = vpop.f32.mrb[0].mxu0
      %v3861 = vpop.f32.mrb[0].mxu0
      %v3862 = vadd.f32 %v2187, %v3861
      %v3863 = vpop.f32.mrb[0].mxu0
      %3864 = vmatprep.mubr.bf16.mxu0 0
      %3865 = vmatmul.mubr.bf16.gmra.mrb[0].mxu0 %v2821
      %v3866 = vpop.f32.mrb[0].mxu0
      %v3867 = vadd.f32 %v2187, %v3866
      %v3868 = vpop.f32.mrb[0].mxu0
      %v3869 = vpop.f32.mrb[0].mxu0
      %v3870 = vadd.f32 %v2187, %v3869
      %v3871 = vpop.f32.mrb[0].mxu0
      %3872 = vmatprep.mubr.bf16.mxu0 0
      %3873 = vmatmul.mubr.bf16.gmra.mrb[0].mxu0 %v2824
      %v3874 = vpop.f32.mrb[0].mxu0
      %v3875 = vadd.f32 %v2187, %v3874
      %v3876 = vpop.f32.mrb[0].mxu0
      %v3877 = vpop.f32.mrb[0].mxu0
      %v3878 = vadd.f32 %v2187, %v3877
      %v3879 = vpop.f32.mrb[0].mxu0
      %3880 = vmatprep.mubr.bf16.mxu0 0
      %3881 = vmatmul.mubr.bf16.gmra.mrb[0].mxu0 %v2827
      %v3882 = vpop.f32.mrb[0].mxu0
      %v3883 = vadd.f32 %v2187, %v3882
      %v3884 = vpop.f32.mrb[0].mxu0
      %v3885 = vpop.f32.mrb[0].mxu0
      %v3886 = vadd.f32 %v2187, %v3885
      %v3887 = vpop.f32.mrb[0].mxu0
      %3888 = vdwg.mxu0
      %vm3889 = vcmask 31744
      %3890 = vst.msk [vmem:[%s280] sm:$0xff] %vm3889, %v2867
      %3891 = vst.msk [vmem:[%s280 + $0x8] sm:$0xff] %vm3889, %v2870
      %3892 = vst.msk [vmem:[%s280 + $0x10] sm:$0xff] %vm3889, %v2875
      %3893 = vst.msk [vmem:[%s280 + $0x18] sm:$0xff] %vm3889, %v2878
      %3894 = vst.msk [vmem:[%s280 + $0x20] sm:$0xff] %vm3889, %v2883
      %3895 = vst.msk [vmem:[%s280 + $0x28] sm:$0xff] %vm3889, %v2886
      %3896 = vst.msk [vmem:[%s280 + $0x30] sm:$0xff] %vm3889, %v2891
      %3897 = vst.msk [vmem:[%s280 + $0x38] sm:$0xff] %vm3889, %v2894
      %3898 = vst.msk [vmem:[%s280 + $0x40] sm:$0xff] %vm3889, %v2899
      %3899 = vst.msk [vmem:[%s280 + $0x48] sm:$0xff] %vm3889, %v2902
      %3900 = vst.msk [vmem:[%s280 + $0x50] sm:$0xff] %vm3889, %v2907
      %3901 = vst.msk [vmem:[%s280 + $0x58] sm:$0xff] %vm3889, %v2910
      %3902 = vst.msk [vmem:[%s280 + $0x60] sm:$0xff] %vm3889, %v2915
      %3903 = vst.msk [vmem:[%s280 + $0x68] sm:$0xff] %vm3889, %v2918
      %3904 = vst.msk [vmem:[%s280 + $0x70] sm:$0xff] %vm3889, %v2923
      %3905 = vst.msk [vmem:[%s280 + $0x78] sm:$0xff] %vm3889, %v2926
      %3906 = vst.msk [vmem:[%s280 + $0x80] sm:$0xff] %vm3889, %v2931
      %3907 = vst.msk [vmem:[%s280 + $0x88] sm:$0xff] %vm3889, %v2934
      %3908 = vst.msk [vmem:[%s280 + $0x90] sm:$0xff] %vm3889, %v2939
      %3909 = vst.msk [vmem:[%s280 + $0x98] sm:$0xff] %vm3889, %v2942
      %3910 = vst.msk [vmem:[%s280 + $0xa0] sm:$0xff] %vm3889, %v2947
      %3911 = vst.msk [vmem:[%s280 + $0xa8] sm:$0xff] %vm3889, %v2950
      %3912 = vst.msk [vmem:[%s280 + $0xb0] sm:$0xff] %vm3889, %v2955
      %3913 = vst.msk [vmem:[%s280 + $0xb8] sm:$0xff] %vm3889, %v2958
      %3914 = vst.msk [vmem:[%s280 + $0xc0] sm:$0xff] %vm3889, %v2963
      %3915 = vst.msk [vmem:[%s280 + $0xc8] sm:$0xff] %vm3889, %v2966
      %3916 = vst.msk [vmem:[%s280 + $0xd0] sm:$0xff] %vm3889, %v2971
      %3917 = vst.msk [vmem:[%s280 + $0xd8] sm:$0xff] %vm3889, %v2974
      %3918 = vst.msk [vmem:[%s280 + $0xe0] sm:$0xff] %vm3889, %v2979
      %3919 = vst.msk [vmem:[%s280 + $0xe8] sm:$0xff] %vm3889, %v2982
      %3920 = vst.msk [vmem:[%s280 + $0xf0] sm:$0xff] %vm3889, %v2987
      %3921 = vst.msk [vmem:[%s280 + $0xf8] sm:$0xff] %vm3889, %v2990
      %3922 = vst.msk [vmem:[%s280 + $0x100] sm:$0xff] %vm3889, %v2995
      %3923 = vst.msk [vmem:[%s280 + $0x108] sm:$0xff] %vm3889, %v2998
      %3924 = vst.msk [vmem:[%s280 + $0x110] sm:$0xff] %vm3889, %v3003
      %3925 = vst.msk [vmem:[%s280 + $0x118] sm:$0xff] %vm3889, %v3006
      %3926 = vst.msk [vmem:[%s280 + $0x120] sm:$0xff] %vm3889, %v3011
      %3927 = vst.msk [vmem:[%s280 + $0x128] sm:$0xff] %vm3889, %v3014
      %3928 = vst.msk [vmem:[%s280 + $0x130] sm:$0xff] %vm3889, %v3019
      %3929 = vst.msk [vmem:[%s280 + $0x138] sm:$0xff] %vm3889, %v3022
      %3930 = vst.msk [vmem:[%s280 + $0x140] sm:$0xff] %vm3889, %v3027
      %3931 = vst.msk [vmem:[%s280 + $0x148] sm:$0xff] %vm3889, %v3030
      %3932 = vst.msk [vmem:[%s280 + $0x150] sm:$0xff] %vm3889, %v3035
      %3933 = vst.msk [vmem:[%s280 + $0x158] sm:$0xff] %vm3889, %v3038
      %3934 = vst.msk [vmem:[%s280 + $0x160] sm:$0xff] %vm3889, %v3043
      %3935 = vst.msk [vmem:[%s280 + $0x168] sm:$0xff] %vm3889, %v3046
      %3936 = vst.msk [vmem:[%s280 + $0x170] sm:$0xff] %vm3889, %v3051
      %3937 = vst.msk [vmem:[%s280 + $0x178] sm:$0xff] %vm3889, %v3054
      %3938 = vst.msk [vmem:[%s280 + $0x180] sm:$0xff] %vm3889, %v3059
      %3939 = vst.msk [vmem:[%s280 + $0x188] sm:$0xff] %vm3889, %v3062
      %3940 = vst.msk [vmem:[%s280 + $0x190] sm:$0xff] %vm3889, %v3067
      %3941 = vst.msk [vmem:[%s280 + $0x198] sm:$0xff] %vm3889, %v3070
      %3942 = vst.msk [vmem:[%s280 + $0x1a0] sm:$0xff] %vm3889, %v3075
      %3943 = vst.msk [vmem:[%s280 + $0x1a8] sm:$0xff] %vm3889, %v3078
      %3944 = vst.msk [vmem:[%s280 + $0x1b0] sm:$0xff] %vm3889, %v3083
      %3945 = vst.msk [vmem:[%s280 + $0x1b8] sm:$0xff] %vm3889, %v3086
      %3946 = vst.msk [vmem:[%s280 + $0x1c0] sm:$0xff] %vm3889, %v3091
      %3947 = vst.msk [vmem:[%s280 + $0x1c8] sm:$0xff] %vm3889, %v3094
      %3948 = vst.msk [vmem:[%s280 + $0x1d0] sm:$0xff] %vm3889, %v3099
      %3949 = vst.msk [vmem:[%s280 + $0x1d8] sm:$0xff] %vm3889, %v3102
      %3950 = vst.msk [vmem:[%s280 + $0x1e0] sm:$0xff] %vm3889, %v3107
      %3951 = vst.msk [vmem:[%s280 + $0x1e8] sm:$0xff] %vm3889, %v3110
      %3952 = vst.msk [vmem:[%s280 + $0x1f0] sm:$0xff] %vm3889, %v3115
      %3953 = vst.msk [vmem:[%s280 + $0x1f8] sm:$0xff] %vm3889, %v3118
      %3954 = vst.msk [vmem:[%s280 + $0x200] sm:$0xff] %vm3889, %v3123
      %3955 = vst.msk [vmem:[%s280 + $0x208] sm:$0xff] %vm3889, %v3126
      %3956 = vst.msk [vmem:[%s280 + $0x210] sm:$0xff] %vm3889, %v3131
      %3957 = vst.msk [vmem:[%s280 + $0x218] sm:$0xff] %vm3889, %v3134
      %3958 = vst.msk [vmem:[%s280 + $0x220] sm:$0xff] %vm3889, %v3139
      %3959 = vst.msk [vmem:[%s280 + $0x228] sm:$0xff] %vm3889, %v3142
      %3960 = vst.msk [vmem:[%s280 + $0x230] sm:$0xff] %vm3889, %v3147
      %3961 = vst.msk [vmem:[%s280 + $0x238] sm:$0xff] %vm3889, %v3150
      %3962 = vst.msk [vmem:[%s280 + $0x240] sm:$0xff] %vm3889, %v3155
      %3963 = vst.msk [vmem:[%s280 + $0x248] sm:$0xff] %vm3889, %v3158
      %3964 = vst.msk [vmem:[%s280 + $0x250] sm:$0xff] %vm3889, %v3163
      %3965 = vst.msk [vmem:[%s280 + $0x258] sm:$0xff] %vm3889, %v3166
      %3966 = vst.msk [vmem:[%s280 + $0x260] sm:$0xff] %vm3889, %v3171
      %3967 = vst.msk [vmem:[%s280 + $0x268] sm:$0xff] %vm3889, %v3174
      %3968 = vst.msk [vmem:[%s280 + $0x270] sm:$0xff] %vm3889, %v3179
      %3969 = vst.msk [vmem:[%s280 + $0x278] sm:$0xff] %vm3889, %v3182
      %3970 = vst.msk [vmem:[%s280 + $0x280] sm:$0xff] %vm3889, %v3187
      %3971 = vst.msk [vmem:[%s280 + $0x288] sm:$0xff] %vm3889, %v3190
      %3972 = vst.msk [vmem:[%s280 + $0x290] sm:$0xff] %vm3889, %v3195
      %3973 = vst.msk [vmem:[%s280 + $0x298] sm:$0xff] %vm3889, %v3198
      %3974 = vst.msk [vmem:[%s280 + $0x2a0] sm:$0xff] %vm3889, %v3203
      %3975 = vst.msk [vmem:[%s280 + $0x2a8] sm:$0xff] %vm3889, %v3206
      %3976 = vst.msk [vmem:[%s280 + $0x2b0] sm:$0xff] %vm3889, %v3211
      %3977 = vst.msk [vmem:[%s280 + $0x2b8] sm:$0xff] %vm3889, %v3214
      %3978 = vst.msk [vmem:[%s280 + $0x2c0] sm:$0xff] %vm3889, %v3219
      %3979 = vst.msk [vmem:[%s280 + $0x2c8] sm:$0xff] %vm3889, %v3222
      %3980 = vst.msk [vmem:[%s280 + $0x2d0] sm:$0xff] %vm3889, %v3227
      %3981 = vst.msk [vmem:[%s280 + $0x2d8] sm:$0xff] %vm3889, %v3230
      %3982 = vst.msk [vmem:[%s280 + $0x2e0] sm:$0xff] %vm3889, %v3235
      %3983 = vst.msk [vmem:[%s280 + $0x2e8] sm:$0xff] %vm3889, %v3238
      %3984 = vst.msk [vmem:[%s280 + $0x2f0] sm:$0xff] %vm3889, %v3243
      %3985 = vst.msk [vmem:[%s280 + $0x2f8] sm:$0xff] %vm3889, %v3246
      %3986 = vst.msk [vmem:[%s280 + $0x300] sm:$0xff] %vm3889, %v3251
      %3987 = vst.msk [vmem:[%s280 + $0x308] sm:$0xff] %vm3889, %v3254
      %3988 = vst.msk [vmem:[%s280 + $0x310] sm:$0xff] %vm3889, %v3259
      %3989 = vst.msk [vmem:[%s280 + $0x318] sm:$0xff] %vm3889, %v3262
      %3990 = vst.msk [vmem:[%s280 + $0x320] sm:$0xff] %vm3889, %v3267
      %3991 = vst.msk [vmem:[%s280 + $0x328] sm:$0xff] %vm3889, %v3270
      %3992 = vst.msk [vmem:[%s280 + $0x330] sm:$0xff] %vm3889, %v3275
      %3993 = vst.msk [vmem:[%s280 + $0x338] sm:$0xff] %vm3889, %v3278
      %3994 = vst.msk [vmem:[%s280 + $0x340] sm:$0xff] %vm3889, %v3283
      %3995 = vst.msk [vmem:[%s280 + $0x348] sm:$0xff] %vm3889, %v3286
      %3996 = vst.msk [vmem:[%s280 + $0x350] sm:$0xff] %vm3889, %v3291
      %3997 = vst.msk [vmem:[%s280 + $0x358] sm:$0xff] %vm3889, %v3294
      %3998 = vst.msk [vmem:[%s280 + $0x360] sm:$0xff] %vm3889, %v3299
      %3999 = vst.msk [vmem:[%s280 + $0x368] sm:$0xff] %vm3889, %v3302
      %4000 = vst.msk [vmem:[%s280 + $0x370] sm:$0xff] %vm3889, %v3307
      %4001 = vst.msk [vmem:[%s280 + $0x378] sm:$0xff] %vm3889, %v3310
      %4002 = vst.msk [vmem:[%s280 + $0x380] sm:$0xff] %vm3889, %v3315
      %4003 = vst.msk [vmem:[%s280 + $0x388] sm:$0xff] %vm3889, %v3318
      %4004 = vst.msk [vmem:[%s280 + $0x390] sm:$0xff] %vm3889, %v3323
      %4005 = vst.msk [vmem:[%s280 + $0x398] sm:$0xff] %vm3889, %v3326
      %4006 = vst.msk [vmem:[%s280 + $0x3a0] sm:$0xff] %vm3889, %v3331
      %4007 = vst.msk [vmem:[%s280 + $0x3a8] sm:$0xff] %vm3889, %v3334
      %4008 = vst.msk [vmem:[%s280 + $0x3b0] sm:$0xff] %vm3889, %v3339
      %4009 = vst.msk [vmem:[%s280 + $0x3b8] sm:$0xff] %vm3889, %v3342
      %4010 = vst.msk [vmem:[%s280 + $0x3c0] sm:$0xff] %vm3889, %v3347
      %4011 = vst.msk [vmem:[%s280 + $0x3c8] sm:$0xff] %vm3889, %v3350
      %4012 = vst.msk [vmem:[%s280 + $0x3d0] sm:$0xff] %vm3889, %v3355
      %4013 = vst.msk [vmem:[%s280 + $0x3d8] sm:$0xff] %vm3889, %v3358
      %4014 = vst.msk [vmem:[%s280 + $0x3e0] sm:$0xff] %vm3889, %v3363
      %4015 = vst.msk [vmem:[%s280 + $0x3e8] sm:$0xff] %vm3889, %v3366
      %4016 = vst.msk [vmem:[%s280 + $0x3f0] sm:$0xff] %vm3889, %v3371
      %4017 = vst.msk [vmem:[%s280 + $0x3f8] sm:$0xff] %vm3889, %v3374
      %4018 = vst.msk [vmem:[%s280 + $0x400] sm:$0xff] %vm3889, %v3379
      %4019 = vst.msk [vmem:[%s280 + $0x408] sm:$0xff] %vm3889, %v3382
      %4020 = vst.msk [vmem:[%s280 + $0x410] sm:$0xff] %vm3889, %v3387
      %4021 = vst.msk [vmem:[%s280 + $0x418] sm:$0xff] %vm3889, %v3390
      %4022 = vst.msk [vmem:[%s280 + $0x420] sm:$0xff] %vm3889, %v3395
      %4023 = vst.msk [vmem:[%s280 + $0x428] sm:$0xff] %vm3889, %v3398
      %4024 = vst.msk [vmem:[%s280 + $0x430] sm:$0xff] %vm3889, %v3403
      %4025 = vst.msk [vmem:[%s280 + $0x438] sm:$0xff] %vm3889, %v3406
      %4026 = vst.msk [vmem:[%s280 + $0x440] sm:$0xff] %vm3889, %v3411
      %4027 = vst.msk [vmem:[%s280 + $0x448] sm:$0xff] %vm3889, %v3414
      %4028 = vst.msk [vmem:[%s280 + $0x450] sm:$0xff] %vm3889, %v3419
      %4029 = vst.msk [vmem:[%s280 + $0x458] sm:$0xff] %vm3889, %v3422
      %4030 = vst.msk [vmem:[%s280 + $0x460] sm:$0xff] %vm3889, %v3427
      %4031 = vst.msk [vmem:[%s280 + $0x468] sm:$0xff] %vm3889, %v3430
      %4032 = vst.msk [vmem:[%s280 + $0x470] sm:$0xff] %vm3889, %v3435
      %4033 = vst.msk [vmem:[%s280 + $0x478] sm:$0xff] %vm3889, %v3438
      %4034 = vst.msk [vmem:[%s280 + $0x480] sm:$0xff] %vm3889, %v3443
      %4035 = vst.msk [vmem:[%s280 + $0x488] sm:$0xff] %vm3889, %v3446
      %4036 = vst.msk [vmem:[%s280 + $0x490] sm:$0xff] %vm3889, %v3451
      %4037 = vst.msk [vmem:[%s280 + $0x498] sm:$0xff] %vm3889, %v3454
      %4038 = vst.msk [vmem:[%s280 + $0x4a0] sm:$0xff] %vm3889, %v3459
      %4039 = vst.msk [vmem:[%s280 + $0x4a8] sm:$0xff] %vm3889, %v3462
      %4040 = vst.msk [vmem:[%s280 + $0x4b0] sm:$0xff] %vm3889, %v3467
      %4041 = vst.msk [vmem:[%s280 + $0x4b8] sm:$0xff] %vm3889, %v3470
      %4042 = vst.msk [vmem:[%s280 + $0x4c0] sm:$0xff] %vm3889, %v3475
      %4043 = vst.msk [vmem:[%s280 + $0x4c8] sm:$0xff] %vm3889, %v3478
      %4044 = vst.msk [vmem:[%s280 + $0x4d0] sm:$0xff] %vm3889, %v3483
      %4045 = vst.msk [vmem:[%s280 + $0x4d8] sm:$0xff] %vm3889, %v3486
      %4046 = vst.msk [vmem:[%s280 + $0x4e0] sm:$0xff] %vm3889, %v3491
      %4047 = vst.msk [vmem:[%s280 + $0x4e8] sm:$0xff] %vm3889, %v3494
      %4048 = vst.msk [vmem:[%s280 + $0x4f0] sm:$0xff] %vm3889, %v3499
      %4049 = vst.msk [vmem:[%s280 + $0x4f8] sm:$0xff] %vm3889, %v3502
      %4050 = vst.msk [vmem:[%s280 + $0x500] sm:$0xff] %vm3889, %v3507
      %4051 = vst.msk [vmem:[%s280 + $0x508] sm:$0xff] %vm3889, %v3510
      %4052 = vst.msk [vmem:[%s280 + $0x510] sm:$0xff] %vm3889, %v3515
      %4053 = vst.msk [vmem:[%s280 + $0x518] sm:$0xff] %vm3889, %v3518
      %4054 = vst.msk [vmem:[%s280 + $0x520] sm:$0xff] %vm3889, %v3523
      %4055 = vst.msk [vmem:[%s280 + $0x528] sm:$0xff] %vm3889, %v3526
      %4056 = vst.msk [vmem:[%s280 + $0x530] sm:$0xff] %vm3889, %v3531
      %4057 = vst.msk [vmem:[%s280 + $0x538] sm:$0xff] %vm3889, %v3534
      %4058 = vst.msk [vmem:[%s280 + $0x540] sm:$0xff] %vm3889, %v3539
      %4059 = vst.msk [vmem:[%s280 + $0x548] sm:$0xff] %vm3889, %v3542
      %4060 = vst.msk [vmem:[%s280 + $0x550] sm:$0xff] %vm3889, %v3547
      %4061 = vst.msk [vmem:[%s280 + $0x558] sm:$0xff] %vm3889, %v3550
      %4062 = vst.msk [vmem:[%s280 + $0x560] sm:$0xff] %vm3889, %v3555
      %4063 = vst.msk [vmem:[%s280 + $0x568] sm:$0xff] %vm3889, %v3558
      %4064 = vst.msk [vmem:[%s280 + $0x570] sm:$0xff] %vm3889, %v3563
      %4065 = vst.msk [vmem:[%s280 + $0x578] sm:$0xff] %vm3889, %v3566
      %4066 = vst.msk [vmem:[%s280 + $0x580] sm:$0xff] %vm3889, %v3571
      %4067 = vst.msk [vmem:[%s280 + $0x588] sm:$0xff] %vm3889, %v3574
      %4068 = vst.msk [vmem:[%s280 + $0x590] sm:$0xff] %vm3889, %v3579
      %4069 = vst.msk [vmem:[%s280 + $0x598] sm:$0xff] %vm3889, %v3582
      %4070 = vst.msk [vmem:[%s280 + $0x5a0] sm:$0xff] %vm3889, %v3587
      %4071 = vst.msk [vmem:[%s280 + $0x5a8] sm:$0xff] %vm3889, %v3590
      %4072 = vst.msk [vmem:[%s280 + $0x5b0] sm:$0xff] %vm3889, %v3595
      %4073 = vst.msk [vmem:[%s280 + $0x5b8] sm:$0xff] %vm3889, %v3598
      %4074 = vst.msk [vmem:[%s280 + $0x5c0] sm:$0xff] %vm3889, %v3603
      %4075 = vst.msk [vmem:[%s280 + $0x5c8] sm:$0xff] %vm3889, %v3606
      %4076 = vst.msk [vmem:[%s280 + $0x5d0] sm:$0xff] %vm3889, %v3611
      %4077 = vst.msk [vmem:[%s280 + $0x5d8] sm:$0xff] %vm3889, %v3614
      %4078 = vst.msk [vmem:[%s280 + $0x5e0] sm:$0xff] %vm3889, %v3619
      %4079 = vst.msk [vmem:[%s280 + $0x5e8] sm:$0xff] %vm3889, %v3622
      %4080 = vst.msk [vmem:[%s280 + $0x5f0] sm:$0xff] %vm3889, %v3627
      %4081 = vst.msk [vmem:[%s280 + $0x5f8] sm:$0xff] %vm3889, %v3630
      %4082 = vst.msk [vmem:[%s280 + $0x600] sm:$0xff] %vm3889, %v3635
      %4083 = vst.msk [vmem:[%s280 + $0x608] sm:$0xff] %vm3889, %v3638
      %4084 = vst.msk [vmem:[%s280 + $0x610] sm:$0xff] %vm3889, %v3643
      %4085 = vst.msk [vmem:[%s280 + $0x618] sm:$0xff] %vm3889, %v3646
      %4086 = vst.msk [vmem:[%s280 + $0x620] sm:$0xff] %vm3889, %v3651
      %4087 = vst.msk [vmem:[%s280 + $0x628] sm:$0xff] %vm3889, %v3654
      %4088 = vst.msk [vmem:[%s280 + $0x630] sm:$0xff] %vm3889, %v3659
      %4089 = vst.msk [vmem:[%s280 + $0x638] sm:$0xff] %vm3889, %v3662
      %4090 = vst.msk [vmem:[%s280 + $0x640] sm:$0xff] %vm3889, %v3667
      %4091 = vst.msk [vmem:[%s280 + $0x648] sm:$0xff] %vm3889, %v3670
      %4092 = vst.msk [vmem:[%s280 + $0x650] sm:$0xff] %vm3889, %v3675
      %4093 = vst.msk [vmem:[%s280 + $0x658] sm:$0xff] %vm3889, %v3678
      %4094 = vst.msk [vmem:[%s280 + $0x660] sm:$0xff] %vm3889, %v3683
      %4095 = vst.msk [vmem:[%s280 + $0x668] sm:$0xff] %vm3889, %v3686
      %4096 = vst.msk [vmem:[%s280 + $0x670] sm:$0xff] %vm3889, %v3691
      %4097 = vst.msk [vmem:[%s280 + $0x678] sm:$0xff] %vm3889, %v3694
      %4098 = vst.msk [vmem:[%s280 + $0x680] sm:$0xff] %vm3889, %v3699
      %4099 = vst.msk [vmem:[%s280 + $0x688] sm:$0xff] %vm3889, %v3702
      %4100 = vst.msk [vmem:[%s280 + $0x690] sm:$0xff] %vm3889, %v3707
      %4101 = vst.msk [vmem:[%s280 + $0x698] sm:$0xff] %vm3889, %v3710
      %4102 = vst.msk [vmem:[%s280 + $0x6a0] sm:$0xff] %vm3889, %v3715
      %4103 = vst.msk [vmem:[%s280 + $0x6a8] sm:$0xff] %vm3889, %v3718
      %4104 = vst.msk [vmem:[%s280 + $0x6b0] sm:$0xff] %vm3889, %v3723
      %4105 = vst.msk [vmem:[%s280 + $0x6b8] sm:$0xff] %vm3889, %v3726
      %4106 = vst.msk [vmem:[%s280 + $0x6c0] sm:$0xff] %vm3889, %v3731
      %4107 = vst.msk [vmem:[%s280 + $0x6c8] sm:$0xff] %vm3889, %v3734
      %4108 = vst.msk [vmem:[%s280 + $0x6d0] sm:$0xff] %vm3889, %v3739
      %4109 = vst.msk [vmem:[%s280 + $0x6d8] sm:$0xff] %vm3889, %v3742
      %4110 = vst.msk [vmem:[%s280 + $0x6e0] sm:$0xff] %vm3889, %v3747
      %4111 = vst.msk [vmem:[%s280 + $0x6e8] sm:$0xff] %vm3889, %v3750
      %4112 = vst.msk [vmem:[%s280 + $0x6f0] sm:$0xff] %vm3889, %v3755
      %4113 = vst.msk [vmem:[%s280 + $0x6f8] sm:$0xff] %vm3889, %v3758
      %4114 = vst.msk [vmem:[%s280 + $0x700] sm:$0xff] %vm3889, %v3763
      %4115 = vst.msk [vmem:[%s280 + $0x708] sm:$0xff] %vm3889, %v3766
      %4116 = vst.msk [vmem:[%s280 + $0x710] sm:$0xff] %vm3889, %v3771
      %4117 = vst.msk [vmem:[%s280 + $0x718] sm:$0xff] %vm3889, %v3774
      %4118 = vst.msk [vmem:[%s280 + $0x720] sm:$0xff] %vm3889, %v3779
      %4119 = vst.msk [vmem:[%s280 + $0x728] sm:$0xff] %vm3889, %v3782
      %4120 = vst.msk [vmem:[%s280 + $0x730] sm:$0xff] %vm3889, %v3787
      %4121 = vst.msk [vmem:[%s280 + $0x738] sm:$0xff] %vm3889, %v3790
      %4122 = vst.msk [vmem:[%s280 + $0x740] sm:$0xff] %vm3889, %v3795
      %4123 = vst.msk [vmem:[%s280 + $0x748] sm:$0xff] %vm3889, %v3798
      %4124 = vst.msk [vmem:[%s280 + $0x750] sm:$0xff] %vm3889, %v3803
      %4125 = vst.msk [vmem:[%s280 + $0x758] sm:$0xff] %vm3889, %v3806
      %4126 = vst.msk [vmem:[%s280 + $0x760] sm:$0xff] %vm3889, %v3811
      %4127 = vst.msk [vmem:[%s280 + $0x768] sm:$0xff] %vm3889, %v3814
      %4128 = vst.msk [vmem:[%s280 + $0x770] sm:$0xff] %vm3889, %v3819
      %4129 = vst.msk [vmem:[%s280 + $0x778] sm:$0xff] %vm3889, %v3822
      %4130 = vst.msk [vmem:[%s280 + $0x780] sm:$0xff] %vm3889, %v3827
      %4131 = vst.msk [vmem:[%s280 + $0x788] sm:$0xff] %vm3889, %v3830
      %4132 = vst.msk [vmem:[%s280 + $0x790] sm:$0xff] %vm3889, %v3835
      %4133 = vst.msk [vmem:[%s280 + $0x798] sm:$0xff] %vm3889, %v3838
      %4134 = vst.msk [vmem:[%s280 + $0x7a0] sm:$0xff] %vm3889, %v3843
      %4135 = vst.msk [vmem:[%s280 + $0x7a8] sm:$0xff] %vm3889, %v3846
      %4136 = vst.msk [vmem:[%s280 + $0x7b0] sm:$0xff] %vm3889, %v3851
      %4137 = vst.msk [vmem:[%s280 + $0x7b8] sm:$0xff] %vm3889, %v3854
      %4138 = vst.msk [vmem:[%s280 + $0x7c0] sm:$0xff] %vm3889, %v3859
      %4139 = vst.msk [vmem:[%s280 + $0x7c8] sm:$0xff] %vm3889, %v3862
      %4140 = vst.msk [vmem:[%s280 + $0x7d0] sm:$0xff] %vm3889, %v3867
      %4141 = vst.msk [vmem:[%s280 + $0x7d8] sm:$0xff] %vm3889, %v3870
      %4142 = vst.msk [vmem:[%s280 + $0x7e0] sm:$0xff] %vm3889, %v3875
      %4143 = vst.msk [vmem:[%s280 + $0x7e8] sm:$0xff] %vm3889, %v3878
      %4144 = vst.msk [vmem:[%s280 + $0x7f0] sm:$0xff] %vm3889, %v3883
      %4145 = vst.msk [vmem:[%s280 + $0x7f8] sm:$0xff] %vm3889, %v3886
      %s4146 = smul.u32 256, %s18
      %p4147 = scmp.lt.s32.totalorder %s4146, 511
      %s4148 = scalar_select %p4147, %s4146, 511
      %s4149 = smul.addr %s4148, 8
      %s4150 = scalar_lea.vmem %s7, %s4149
      // Predicated region
      $region49: #{_nlcvnet_pallas.1} parent=47 // pred_check
        %p4151 = pneg %p188
      $region50: #{_nlcvnet_pallas.1} parent=47 // pred_check_branch
        %4153 = sbr.rel (%p4151) target = $region52
      $region51: #{_nlcvnet_pallas.1} parent=47 // pred_region
        %s4154 = smul.u32 256, %s18
      $region52: #{_nlcvnet_pallas.1} parent=47 // pred_fallthru
        _
    $region48: #{_nlcvnet_pallas.1} parent=5 // pred_fallthru
      _
    %p4155 = scmp.le.s32.totalorder 2, %s13
    // Predicated region
    $region53: #{_nlcvnet_pallas.1} parent=5 // pred_check
      %p4156 = pneg %p4155
    $region54: #{_nlcvnet_pallas.1} parent=5 // pred_check_branch
      %4158 = sbr.rel (%p4156) target = $region56
    $region55: #{_nlcvnet_pallas.1} parent=5 // pred_region
      %s4159 = ssub.s32 %s13, 2
      // Predicated region
      $region57: #{_nlcvnet_pallas.1} parent=55 // pred_check
        %p4160 = pneg %p194
      $region58: #{_nlcvnet_pallas.1} parent=55 // pred_check_branch
        %4162 = sbr.rel (%p4160) target = $region60
      $region59: #{_nlcvnet_pallas.1} parent=55 // pred_region
        %s4163 = smul.u32 256, %s19
        %p4164 = scmp.lt.s32.totalorder %s4163, 511
        %s4165 = scalar_select %p4164, %s4163, 511
        %s4166 = smul.addr %s4165, 8
        %s4167 = scalar_lea.vmem %s7, %s4166
      $region60: #{_nlcvnet_pallas.1} parent=55 // pred_fallthru
        _
    $region56: #{_nlcvnet_pallas.1} parent=5 // pred_fallthru
      _
  $region6: #{_nlcvnet_pallas.1} parent=0 // loop_footer
    %s17 = sadd.s32 1, %s13
  $region7: #{_nlcvnet_pallas.1} parent=0 // loop_footer_branch
    %12 = sbr.rel target = $region3
  $region8: #{_nlcvnet_pallas.1} parent=0 // loop_exit
    _

</llo_original>
